<compile_context>
chip_gen: v5e
topology: v5e:2x2
jax: 0.10.0
libtpu: 0.0.40
codegen_flags: <defaults>
</compile_context>

<pallas_src>
import functools

import jax
import jax.numpy as jnp
from jax.experimental import pallas as pl
from jax.experimental.pallas import tpu as pltpu


def _round_up(x: int, m: int) -> int:
    return ((x + m - 1) // m) * m


def _mlp_from_x(x, w1_ref, b1_ref, w2_ref, b2_ref, o_ref):
    """Shared MLP body: x (bf16) -> logits, f32 accumulation, bf16 store."""
    h = jnp.dot(x, w1_ref[...], preferred_element_type=jnp.float32)
    h = jnp.maximum(h + b1_ref[...], 0.0)          # (Tm, Hp) + (1, Hp), f32 epilogue
    # dropout(p=0.5): eval-mode identity.
    logits = jnp.dot(h.astype(w2_ref.dtype), w2_ref[...],
                     preferred_element_type=jnp.float32)
    o_ref[...] = (logits + b2_ref[...]).astype(o_ref.dtype)


def _fused_gather_mlp_kernel(w_ref, emb_ref, w1_ref, b1_ref, w2_ref, b2_ref,
                             o_ref, x_ref):
    """Fused embedding gather (one-hot MXU matmul) + 2-layer MLP."""
    tile_m, n_feat = w_ref.shape
    v_pad, e = emb_ref.shape
    emb = emb_ref[...]                                   # (V_pad, E) bf16
    idx = w_ref[...]                                     # (tile_m, F) int32
    iota_v = jax.lax.broadcasted_iota(jnp.int32, (tile_m, v_pad), 1)
    # Per-feature one-hot gather; the f32 dot reproduces the bf16 rows exactly,
    # so this is a true gather, not an approximation.  x lives only in VMEM.
    for f in range(n_feat):                              # static unroll, F is small
        onehot = (idx[:, f:f + 1] == iota_v).astype(emb.dtype)   # (tile_m, V_pad)
        rows = jnp.dot(onehot, emb, preferred_element_type=jnp.float32)
        x_ref[:, f * e:(f + 1) * e] = rows.astype(x_ref.dtype)
    _mlp_from_x(x_ref[...], w1_ref, b1_ref, w2_ref, b2_ref, o_ref)


def _mlp_kernel(x_ref, w1_ref, b1_ref, w2_ref, b2_ref, o_ref):
    """Fallback (large vocab): x was gathered by XLA in the wrapper."""
    _mlp_from_x(x_ref[...], w1_ref, b1_ref, w2_ref, b2_ref, o_ref)


@functools.partial(jax.jit, static_argnames=("tile_m", "fuse_gather"))
def parser_forward(w, embeddings, W1, b1, W2, b2, *, tile_m=None, fuse_gather=None):
    """Forward pass of ParserModel.

    w: (batch, n_features) int32 token indices
    returns logits: (batch, n_classes) f32
    """
    batch, n_features = w.shape
    vocab, embed_size = embeddings.shape
    hidden = W1.shape[1]
    n_classes = W2.shape[1]

    LANE = 128
    K = n_features * embed_size                   # contracting dim, NOT padded
    H_pad = _round_up(hidden, LANE)               # 200 -> 256
    C_pad = _round_up(n_classes, LANE)            # 3   -> 128 (lane-dense output)

    if fuse_gather is None:
        # One-hot MXU gather only pays for small vocabularies.
        # TODO(synk): in-kernel jnp.take / DMA row gather for large vocabs.
        fuse_gather = vocab <= 512

    # --- batch tiling: bf16-sublane aligned, >=2 grid steps when possible ----
    if tile_m is None:
        if batch <= 16:
            tile_m = 16
        else:
            tile_m = min(512, _round_up(pl.cdiv(batch, 2), 16))
    tile_m = max(16, _round_up(tile_m, 16))
    B_pad = _round_up(batch, tile_m)
    grid = (B_pad // tile_m,)

    # --- parameters: zero-pad to lane-dense widths, bf16 for the MXU ---------
    W1p = jnp.pad(W1.astype(jnp.bfloat16), ((0, 0), (0, H_pad - hidden)))
    b1p = jnp.pad(b1.astype(jnp.float32), (0, H_pad - hidden)).reshape(1, H_pad)
    W2p = jnp.pad(W2.astype(jnp.bfloat16),
                  ((0, H_pad - hidden), (0, C_pad - n_classes)))
    b2p = jnp.pad(b2.astype(jnp.float32), (0, C_pad - n_classes)).reshape(1, C_pad)

    # Pad only the cheap index tensor over batch (index 0; rows sliced away).
    w_idx = w.astype(jnp.int32)
    if B_pad != batch:
        w_idx = jnp.pad(w_idx, ((0, B_pad - batch), (0, 0)))

    # NOTE: constant-index_map weight inputs could use pipeline_mode=pl.Buffered(1)
    # to drop their second pipeline buffer; VMEM headroom is ample here so we keep
    # the default (guaranteed) pipelining.
    common = dict(
        out_shape=jax.ShapeDtypeStruct((B_pad, C_pad), jnp.bfloat16),
        grid=grid,
        out_specs=pl.BlockSpec((tile_m, C_pad), lambda i: (i, 0)),
        compiler_params=pltpu.CompilerParams(
            dimension_semantics=("parallel",),       # v7x: 2 TCs split batch tiles
        ),
    )

    if fuse_gather:
        V_pad = _round_up(vocab, 8)
        embp = jnp.pad(embeddings.astype(jnp.bfloat16),
                       ((0, V_pad - vocab), (0, 0)))
        flops = 2 * B_pad * (n_features * V_pad * embed_size
                             + K * H_pad + H_pad * C_pad)
        bytes_accessed = (B_pad * n_features * 4 + V_pad * embed_size * 2
                          + K * H_pad * 2 + H_pad * 4
                          + H_pad * C_pad * 2 + C_pad * 4
                          + B_pad * C_pad * 2)
        out = pl.pallas_call(
            _fused_gather_mlp_kernel,
            in_specs=[
                pl.BlockSpec((tile_m, n_features), lambda i: (i, 0)),  # indices
                pl.BlockSpec((V_pad, embed_size), lambda i: (0, 0)),   # emb table
                pl.BlockSpec((K, H_pad), lambda i: (0, 0)),            # W1
                pl.BlockSpec((1, H_pad), lambda i: (0, 0)),            # b1
                pl.BlockSpec((H_pad, C_pad), lambda i: (0, 0)),        # W2
                pl.BlockSpec((1, C_pad), lambda i: (0, 0)),            # b2
            ],
            scratch_shapes=[pltpu.VMEM((tile_m, K), jnp.bfloat16)],    # x (VMEM only)
            cost_estimate=pl.CostEstimate(flops=flops, transcendentals=0,
                                          bytes_accessed=bytes_accessed),
            **common,
        )(w_idx, embp, W1p, b1p, W2p, b2p)
    else:
        # Large-vocab fallback: one fused XLA bf16 gather on the already-padded
        # indices; x is produced directly at (B_pad, K) (no extra pad copy).
        emb_bf = embeddings.astype(jnp.bfloat16)
        x = jnp.take(emb_bf, w_idx.reshape(-1), axis=0).reshape(B_pad, K)
        flops = 2 * B_pad * (K * H_pad + H_pad * C_pad)
        bytes_accessed = (B_pad * K * 2 + K * H_pad * 2 + H_pad * 4
                          + H_pad * C_pad * 2 + C_pad * 4 + B_pad * C_pad * 2)
        out = pl.pallas_call(
            _mlp_kernel,
            in_specs=[
                pl.BlockSpec((tile_m, K), lambda i: (i, 0)),           # x
                pl.BlockSpec((K, H_pad), lambda i: (0, 0)),            # W1
                pl.BlockSpec((1, H_pad), lambda i: (0, 0)),            # b1
                pl.BlockSpec((H_pad, C_pad), lambda i: (0, 0)),        # W2
                pl.BlockSpec((1, C_pad), lambda i: (0, 0)),            # b2
            ],
            cost_estimate=pl.CostEstimate(flops=flops, transcendentals=0,
                                          bytes_accessed=bytes_accessed),
            **common,
        )(x, W1p, b1p, W2p, b2p)

    return out[:batch, :n_classes].astype(jnp.float32)


def _xavier_uniform(key, shape):
    fan_in, fan_out = shape
    limit = jnp.sqrt(6.0 / (fan_in + fan_out))
    return jax.random.uniform(key, shape, jnp.float32, -limit, limit)


if __name__ == "__main__":
    # Small but shape-consistent configuration.
    vocab_size = 100
    embed_size = 32
    n_features = 36
    hidden_size = 200
    n_classes = 3
    batch = 32

    key = jax.random.PRNGKey(0)
    k_emb, k_w1, k_b1, k_w2, k_b2, k_idx = jax.random.split(key, 6)

    # Deterministic parameter init mirroring the PyTorch module's __init__.
    embeddings = jax.random.normal(k_emb, (vocab_size, embed_size), jnp.float32)
    W1 = _xavier_uniform(k_w1, (n_features * embed_size, hidden_size))
    b1 = jax.random.uniform(k_b1, (hidden_size,), jnp.float32)   # nn.init.uniform_ -> U[0,1)
    W2 = _xavier_uniform(k_w2, (hidden_size, n_classes))
    b2 = jax.random.uniform(k_b2, (n_classes,), jnp.float32)

    w = jax.random.randint(k_idx, (batch, n_features), 0, vocab_size, jnp.int32)

    # Default path: fused in-kernel gather, tile_m=16 -> grid=(2,) (two parallel
    # batch tiles, so both v7x TensorCores would be fed even on this tiny batch).
    logits = parser_forward(w, embeddings, W1, b1, W2, b2)
    jax.block_until_ready(logits)
    assert logits.shape == (batch, n_classes)

    # Reference 1: same bf16 casts, f32 accumulation (matches kernel numerics,
    # modulo the bf16 rounding of the kernel's output slab).
    emb_bf = embeddings.astype(jnp.bfloat16)
    x_ref = jnp.take(emb_bf, w.reshape(-1), axis=0).reshape(batch, -1)
    h_ref = jnp.maximum(
        jnp.dot(x_ref, W1.astype(jnp.bfloat16), preferred_element_type=jnp.float32) + b1,
        0.0)
    logits_bf_ref = jnp.dot(h_ref.astype(jnp.bfloat16), W2.astype(jnp.bfloat16),
                            preferred_element_type=jnp.float32) + b2
    assert jnp.allclose(logits, logits_bf_ref, atol=3e-2, rtol=3e-2)

    # Reference 2: full f32 math (module semantics), looser tolerance for bf16 path.
    x_f32 = jnp.take(embeddings, w.reshape(-1), axis=0).reshape(batch, -1)
    logits_f32_ref = jnp.maximum(x_f32 @ W1 + b1, 0.0) @ W2 + b2
    assert jnp.allclose(logits, logits_f32_ref, atol=1e-1, rtol=1e-1)

    # Also exercise the large-vocab fallback path (wrapper-side XLA gather).
    logits_fb = parser_forward(w, embeddings, W1, b1, W2, b2, fuse_gather=False)
    jax.block_until_ready(logits_fb)
    assert jnp.allclose(logits_fb, logits_bf_ref, atol=3e-2, rtol=3e-2)

    print("KERNEL_OK")
</pallas_src>

<mosaic_0001>
module attributes {stable_mosaic.version = 11 : i64} {
  func.func @_fused_gather_mlp_kernel(%arg0: i32, %arg1: memref<16x36xi32, #tpu.memory_space<vmem>>, %arg2: memref<104x32xbf16, #tpu.memory_space<vmem>>, %arg3: memref<1152x256xbf16, #tpu.memory_space<vmem>>, %arg4: memref<1x256xf32, #tpu.memory_space<vmem>>, %arg5: memref<256x128xbf16, #tpu.memory_space<vmem>>, %arg6: memref<1x128xf32, #tpu.memory_space<vmem>>, %arg7: memref<16x128xbf16, #tpu.memory_space<vmem>>, %arg8: memref<16x1152xbf16, #tpu.memory_space<vmem>>) attributes {dimension_semantics = [#tpu.dimension_semantics<parallel>], iteration_bounds = array<i64: 2>, scalar_prefetch = 0 : i64, scratch_operands = 1 : i64, tpu.core_type = #tpu.core_type<tc>, window_params = [{transform_indices = @transform_0, window_bounds = array<i64: 16, 36>}, {pipeline_mode = #tpu.pipeline_mode<synchronous>, transform_indices = @transform_1, window_bounds = array<i64: 104, 32>}, {pipeline_mode = #tpu.pipeline_mode<synchronous>, transform_indices = @transform_2, window_bounds = array<i64: 1152, 256>}, {pipeline_mode = #tpu.pipeline_mode<synchronous>, transform_indices = @transform_3, window_bounds = array<i64: 1, 256>}, {pipeline_mode = #tpu.pipeline_mode<synchronous>, transform_indices = @transform_4, window_bounds = array<i64: 256, 128>}, {pipeline_mode = #tpu.pipeline_mode<synchronous>, transform_indices = @transform_5, window_bounds = array<i64: 1, 128>}, {transform_indices = @transform_6, window_bounds = array<i64: 16, 128>}]} {
    %c0 = arith.constant 0 : index
    %c0_0 = arith.constant 0 : index
    %0 = vector.load %arg2[%c0, %c0_0] : memref<104x32xbf16, #tpu.memory_space<vmem>>, vector<104x32xbf16>
    %c0_1 = arith.constant 0 : index
    %c0_2 = arith.constant 0 : index
    %1 = vector.load %arg1[%c0_1, %c0_2] : memref<16x36xi32, #tpu.memory_space<vmem>>, vector<16x36xi32>
    %2 = tpu.iota {dimensions = array<i32: 1>} : vector<16x104xi32>
    %3 = vector.extract_strided_slice %1 {offsets = [0, 0], sizes = [16, 1], strides = [1, 1]} : vector<16x36xi32> to vector<16x1xi32>
    %4 = vector.broadcast %3 : vector<16x1xi32> to vector<16x104xi32>
    %5 = arith.cmpi eq, %4, %2 : vector<16x104xi32>
    %6 = arith.extui %5 : vector<16x104xi1> to vector<16x104xi32>
    %7 = arith.sitofp %6 : vector<16x104xi32> to vector<16x104xf32>
    %8 = arith.truncf %7 : vector<16x104xf32> to vector<16x104xbf16>
    %cst = arith.constant dense<0.000000e+00> : vector<16x32xf32>
    %9 = tpu.matmul %8, %0, %cst {dimension_numbers = #tpu.dot_dimension_numbers<[1], [0], [0], [1], [0, 0, 1, 1], [], []>} : vector<16x104xbf16>, vector<104x32xbf16>, vector<16x32xf32> -> vector<16x32xf32>
    %10 = arith.truncf %9 : vector<16x32xf32> to vector<16x32xbf16>
    %c0_3 = arith.constant 0 : index
    %c0_4 = arith.constant 0 : index
    %11 = vector.load %arg8[%c0_3, %c0_4] : memref<16x1152xbf16, #tpu.memory_space<vmem>>, vector<16x32xbf16>
    tpu.vector_store %arg8[%c0_3, %c0_4], %10 {strides = array<i32>} : memref<16x1152xbf16, #tpu.memory_space<vmem>>, vector<16x32xbf16>,
    %12 = vector.extract_strided_slice %1 {offsets = [0, 1], sizes = [16, 1], strides = [1, 1]} : vector<16x36xi32> to vector<16x1xi32>
    %13 = vector.broadcast %12 : vector<16x1xi32> to vector<16x104xi32>
    %14 = arith.cmpi eq, %13, %2 : vector<16x104xi32>
    %15 = arith.extui %14 : vector<16x104xi1> to vector<16x104xi32>
    %16 = arith.sitofp %15 : vector<16x104xi32> to vector<16x104xf32>
    %17 = arith.truncf %16 : vector<16x104xf32> to vector<16x104xbf16>
    %cst_5 = arith.constant dense<0.000000e+00> : vector<16x32xf32>
    %18 = tpu.matmul %17, %0, %cst_5 {dimension_numbers = #tpu.dot_dimension_numbers<[1], [0], [0], [1], [0, 0, 1, 1], [], []>} : vector<16x104xbf16>, vector<104x32xbf16>, vector<16x32xf32> -> vector<16x32xf32>
    %19 = arith.truncf %18 : vector<16x32xf32> to vector<16x32xbf16>
    %c0_6 = arith.constant 0 : index
    %c32 = arith.constant 32 : index
    %20 = vector.load %arg8[%c0_6, %c32] : memref<16x1152xbf16, #tpu.memory_space<vmem>>, vector<16x32xbf16>
    tpu.vector_store %arg8[%c0_6, %c32], %19 {strides = array<i32>} : memref<16x1152xbf16, #tpu.memory_space<vmem>>, vector<16x32xbf16>,
    %21 = vector.extract_strided_slice %1 {offsets = [0, 2], sizes = [16, 1], strides = [1, 1]} : vector<16x36xi32> to vector<16x1xi32>
    %22 = vector.broadcast %21 : vector<16x1xi32> to vector<16x104xi32>
    %23 = arith.cmpi eq, %22, %2 : vector<16x104xi32>
    %24 = arith.extui %23 : vector<16x104xi1> to vector<16x104xi32>
    %25 = arith.sitofp %24 : vector<16x104xi32> to vector<16x104xf32>
    %26 = arith.truncf %25 : vector<16x104xf32> to vector<16x104xbf16>
    %cst_7 = arith.constant dense<0.000000e+00> : vector<16x32xf32>
    %27 = tpu.matmul %26, %0, %cst_7 {dimension_numbers = #tpu.dot_dimension_numbers<[1], [0], [0], [1], [0, 0, 1, 1], [], []>} : vector<16x104xbf16>, vector<104x32xbf16>, vector<16x32xf32> -> vector<16x32xf32>
    %28 = arith.truncf %27 : vector<16x32xf32> to vector<16x32xbf16>
    %c0_8 = arith.constant 0 : index
    %c64 = arith.constant 64 : index
    %29 = vector.load %arg8[%c0_8, %c64] : memref<16x1152xbf16, #tpu.memory_space<vmem>>, vector<16x32xbf16>
    tpu.vector_store %arg8[%c0_8, %c64], %28 {strides = array<i32>} : memref<16x1152xbf16, #tpu.memory_space<vmem>>, vector<16x32xbf16>,
    %30 = vector.extract_strided_slice %1 {offsets = [0, 3], sizes = [16, 1], strides = [1, 1]} : vector<16x36xi32> to vector<16x1xi32>
    %31 = vector.broadcast %30 : vector<16x1xi32> to vector<16x104xi32>
    %32 = arith.cmpi eq, %31, %2 : vector<16x104xi32>
    %33 = arith.extui %32 : vector<16x104xi1> to vector<16x104xi32>
    %34 = arith.sitofp %33 : vector<16x104xi32> to vector<16x104xf32>
    %35 = arith.truncf %34 : vector<16x104xf32> to vector<16x104xbf16>
    %cst_9 = arith.constant dense<0.000000e+00> : vector<16x32xf32>
    %36 = tpu.matmul %35, %0, %cst_9 {dimension_numbers = #tpu.dot_dimension_numbers<[1], [0], [0], [1], [0, 0, 1, 1], [], []>} : vector<16x104xbf16>, vector<104x32xbf16>, vector<16x32xf32> -> vector<16x32xf32>
    %37 = arith.truncf %36 : vector<16x32xf32> to vector<16x32xbf16>
    %c0_10 = arith.constant 0 : index
    %c96 = arith.constant 96 : index
    %38 = vector.load %arg8[%c0_10, %c96] : memref<16x1152xbf16, #tpu.memory_space<vmem>>, vector<16x32xbf16>
    tpu.vector_store %arg8[%c0_10, %c96], %37 {strides = array<i32>} : memref<16x1152xbf16, #tpu.memory_space<vmem>>, vector<16x32xbf16>,
    %39 = vector.extract_strided_slice %1 {offsets = [0, 4], sizes = [16, 1], strides = [1, 1]} : vector<16x36xi32> to vector<16x1xi32>
    %40 = vector.broadcast %39 : vector<16x1xi32> to vector<16x104xi32>
    %41 = arith.cmpi eq, %40, %2 : vector<16x104xi32>
    %42 = arith.extui %41 : vector<16x104xi1> to vector<16x104xi32>
    %43 = arith.sitofp %42 : vector<16x104xi32> to vector<16x104xf32>
    %44 = arith.truncf %43 : vector<16x104xf32> to vector<16x104xbf16>
    %cst_11 = arith.constant dense<0.000000e+00> : vector<16x32xf32>
    %45 = tpu.matmul %44, %0, %cst_11 {dimension_numbers = #tpu.dot_dimension_numbers<[1], [0], [0], [1], [0, 0, 1, 1], [], []>} : vector<16x104xbf16>, vector<104x32xbf16>, vector<16x32xf32> -> vector<16x32xf32>
    %46 = arith.truncf %45 : vector<16x32xf32> to vector<16x32xbf16>
    %c0_12 = arith.constant 0 : index
    %c128 = arith.constant 128 : index
    %47 = vector.load %arg8[%c0_12, %c128] : memref<16x1152xbf16, #tpu.memory_space<vmem>>, vector<16x32xbf16>
    tpu.vector_store %arg8[%c0_12, %c128], %46 {strides = array<i32>} : memref<16x1152xbf16, #tpu.memory_space<vmem>>, vector<16x32xbf16>,
    %48 = vector.extract_strided_slice %1 {offsets = [0, 5], sizes = [16, 1], strides = [1, 1]} : vector<16x36xi32> to vector<16x1xi32>
    %49 = vector.broadcast %48 : vector<16x1xi32> to vector<16x104xi32>
    %50 = arith.cmpi eq, %49, %2 : vector<16x104xi32>
    %51 = arith.extui %50 : vector<16x104xi1> to vector<16x104xi32>
    %52 = arith.sitofp %51 : vector<16x104xi32> to vector<16x104xf32>
    %53 = arith.truncf %52 : vector<16x104xf32> to vector<16x104xbf16>
    %cst_13 = arith.constant dense<0.000000e+00> : vector<16x32xf32>
    %54 = tpu.matmul %53, %0, %cst_13 {dimension_numbers = #tpu.dot_dimension_numbers<[1], [0], [0], [1], [0, 0, 1, 1], [], []>} : vector<16x104xbf16>, vector<104x32xbf16>, vector<16x32xf32> -> vector<16x32xf32>
    %55 = arith.truncf %54 : vector<16x32xf32> to vector<16x32xbf16>
    %c0_14 = arith.constant 0 : index
    %c160 = arith.constant 160 : index
    %56 = vector.load %arg8[%c0_14, %c160] : memref<16x1152xbf16, #tpu.memory_space<vmem>>, vector<16x32xbf16>
    tpu.vector_store %arg8[%c0_14, %c160], %55 {strides = array<i32>} : memref<16x1152xbf16, #tpu.memory_space<vmem>>, vector<16x32xbf16>,
    %57 = vector.extract_strided_slice %1 {offsets = [0, 6], sizes = [16, 1], strides = [1, 1]} : vector<16x36xi32> to vector<16x1xi32>
    %58 = vector.broadcast %57 : vector<16x1xi32> to vector<16x104xi32>
    %59 = arith.cmpi eq, %58, %2 : vector<16x104xi32>
    %60 = arith.extui %59 : vector<16x104xi1> to vector<16x104xi32>
    %61 = arith.sitofp %60 : vector<16x104xi32> to vector<16x104xf32>
    %62 = arith.truncf %61 : vector<16x104xf32> to vector<16x104xbf16>
    %cst_15 = arith.constant dense<0.000000e+00> : vector<16x32xf32>
    %63 = tpu.matmul %62, %0, %cst_15 {dimension_numbers = #tpu.dot_dimension_numbers<[1], [0], [0], [1], [0, 0, 1, 1], [], []>} : vector<16x104xbf16>, vector<104x32xbf16>, vector<16x32xf32> -> vector<16x32xf32>
    %64 = arith.truncf %63 : vector<16x32xf32> to vector<16x32xbf16>
    %c0_16 = arith.constant 0 : index
    %c192 = arith.constant 192 : index
    %65 = vector.load %arg8[%c0_16, %c192] : memref<16x1152xbf16, #tpu.memory_space<vmem>>, vector<16x32xbf16>
    tpu.vector_store %arg8[%c0_16, %c192], %64 {strides = array<i32>} : memref<16x1152xbf16, #tpu.memory_space<vmem>>, vector<16x32xbf16>,
    %66 = vector.extract_strided_slice %1 {offsets = [0, 7], sizes = [16, 1], strides = [1, 1]} : vector<16x36xi32> to vector<16x1xi32>
    %67 = vector.broadcast %66 : vector<16x1xi32> to vector<16x104xi32>
    %68 = arith.cmpi eq, %67, %2 : vector<16x104xi32>
    %69 = arith.extui %68 : vector<16x104xi1> to vector<16x104xi32>
    %70 = arith.sitofp %69 : vector<16x104xi32> to vector<16x104xf32>
    %71 = arith.truncf %70 : vector<16x104xf32> to vector<16x104xbf16>
    %cst_17 = arith.constant dense<0.000000e+00> : vector<16x32xf32>
    %72 = tpu.matmul %71, %0, %cst_17 {dimension_numbers = #tpu.dot_dimension_numbers<[1], [0], [0], [1], [0, 0, 1, 1], [], []>} : vector<16x104xbf16>, vector<104x32xbf16>, vector<16x32xf32> -> vector<16x32xf32>
    %73 = arith.truncf %72 : vector<16x32xf32> to vector<16x32xbf16>
    %c0_18 = arith.constant 0 : index
    %c224 = arith.constant 224 : index
    %74 = vector.load %arg8[%c0_18, %c224] : memref<16x1152xbf16, #tpu.memory_space<vmem>>, vector<16x32xbf16>
    tpu.vector_store %arg8[%c0_18, %c224], %73 {strides = array<i32>} : memref<16x1152xbf16, #tpu.memory_space<vmem>>, vector<16x32xbf16>,
    %75 = vector.extract_strided_slice %1 {offsets = [0, 8], sizes = [16, 1], strides = [1, 1]} : vector<16x36xi32> to vector<16x1xi32>
    %76 = vector.broadcast %75 : vector<16x1xi32> to vector<16x104xi32>
    %77 = arith.cmpi eq, %76, %2 : vector<16x104xi32>
    %78 = arith.extui %77 : vector<16x104xi1> to vector<16x104xi32>
    %79 = arith.sitofp %78 : vector<16x104xi32> to vector<16x104xf32>
    %80 = arith.truncf %79 : vector<16x104xf32> to vector<16x104xbf16>
    %cst_19 = arith.constant dense<0.000000e+00> : vector<16x32xf32>
    %81 = tpu.matmul %80, %0, %cst_19 {dimension_numbers = #tpu.dot_dimension_numbers<[1], [0], [0], [1], [0, 0, 1, 1], [], []>} : vector<16x104xbf16>, vector<104x32xbf16>, vector<16x32xf32> -> vector<16x32xf32>
    %82 = arith.truncf %81 : vector<16x32xf32> to vector<16x32xbf16>
    %c0_20 = arith.constant 0 : index
    %c256 = arith.constant 256 : index
    %83 = vector.load %arg8[%c0_20, %c256] : memref<16x1152xbf16, #tpu.memory_space<vmem>>, vector<16x32xbf16>
    tpu.vector_store %arg8[%c0_20, %c256], %82 {strides = array<i32>} : memref<16x1152xbf16, #tpu.memory_space<vmem>>, vector<16x32xbf16>,
    %84 = vector.extract_strided_slice %1 {offsets = [0, 9], sizes = [16, 1], strides = [1, 1]} : vector<16x36xi32> to vector<16x1xi32>
    %85 = vector.broadcast %84 : vector<16x1xi32> to vector<16x104xi32>
    %86 = arith.cmpi eq, %85, %2 : vector<16x104xi32>
    %87 = arith.extui %86 : vector<16x104xi1> to vector<16x104xi32>
    %88 = arith.sitofp %87 : vector<16x104xi32> to vector<16x104xf32>
    %89 = arith.truncf %88 : vector<16x104xf32> to vector<16x104xbf16>
    %cst_21 = arith.constant dense<0.000000e+00> : vector<16x32xf32>
    %90 = tpu.matmul %89, %0, %cst_21 {dimension_numbers = #tpu.dot_dimension_numbers<[1], [0], [0], [1], [0, 0, 1, 1], [], []>} : vector<16x104xbf16>, vector<104x32xbf16>, vector<16x32xf32> -> vector<16x32xf32>
    %91 = arith.truncf %90 : vector<16x32xf32> to vector<16x32xbf16>
    %c0_22 = arith.constant 0 : index
    %c288 = arith.constant 288 : index
    %92 = vector.load %arg8[%c0_22, %c288] : memref<16x1152xbf16, #tpu.memory_space<vmem>>, vector<16x32xbf16>
    tpu.vector_store %arg8[%c0_22, %c288], %91 {strides = array<i32>} : memref<16x1152xbf16, #tpu.memory_space<vmem>>, vector<16x32xbf16>,
    %93 = vector.extract_strided_slice %1 {offsets = [0, 10], sizes = [16, 1], strides = [1, 1]} : vector<16x36xi32> to vector<16x1xi32>
    %94 = vector.broadcast %93 : vector<16x1xi32> to vector<16x104xi32>
    %95 = arith.cmpi eq, %94, %2 : vector<16x104xi32>
    %96 = arith.extui %95 : vector<16x104xi1> to vector<16x104xi32>
    %97 = arith.sitofp %96 : vector<16x104xi32> to vector<16x104xf32>
    %98 = arith.truncf %97 : vector<16x104xf32> to vector<16x104xbf16>
    %cst_23 = arith.constant dense<0.000000e+00> : vector<16x32xf32>
    %99 = tpu.matmul %98, %0, %cst_23 {dimension_numbers = #tpu.dot_dimension_numbers<[1], [0], [0], [1], [0, 0, 1, 1], [], []>} : vector<16x104xbf16>, vector<104x32xbf16>, vector<16x32xf32> -> vector<16x32xf32>
    %100 = arith.truncf %99 : vector<16x32xf32> to vector<16x32xbf16>
    %c0_24 = arith.constant 0 : index
    %c320 = arith.constant 320 : index
    %101 = vector.load %arg8[%c0_24, %c320] : memref<16x1152xbf16, #tpu.memory_space<vmem>>, vector<16x32xbf16>
    tpu.vector_store %arg8[%c0_24, %c320], %100 {strides = array<i32>} : memref<16x1152xbf16, #tpu.memory_space<vmem>>, vector<16x32xbf16>,
    %102 = vector.extract_strided_slice %1 {offsets = [0, 11], sizes = [16, 1], strides = [1, 1]} : vector<16x36xi32> to vector<16x1xi32>
    %103 = vector.broadcast %102 : vector<16x1xi32> to vector<16x104xi32>
    %104 = arith.cmpi eq, %103, %2 : vector<16x104xi32>
    %105 = arith.extui %104 : vector<16x104xi1> to vector<16x104xi32>
    %106 = arith.sitofp %105 : vector<16x104xi32> to vector<16x104xf32>
    %107 = arith.truncf %106 : vector<16x104xf32> to vector<16x104xbf16>
    %cst_25 = arith.constant dense<0.000000e+00> : vector<16x32xf32>
    %108 = tpu.matmul %107, %0, %cst_25 {dimension_numbers = #tpu.dot_dimension_numbers<[1], [0], [0], [1], [0, 0, 1, 1], [], []>} : vector<16x104xbf16>, vector<104x32xbf16>, vector<16x32xf32> -> vector<16x32xf32>
    %109 = arith.truncf %108 : vector<16x32xf32> to vector<16x32xbf16>
    %c0_26 = arith.constant 0 : index
    %c352 = arith.constant 352 : index
    %110 = vector.load %arg8[%c0_26, %c352] : memref<16x1152xbf16, #tpu.memory_space<vmem>>, vector<16x32xbf16>
    tpu.vector_store %arg8[%c0_26, %c352], %109 {strides = array<i32>} : memref<16x1152xbf16, #tpu.memory_space<vmem>>, vector<16x32xbf16>,
    %111 = vector.extract_strided_slice %1 {offsets = [0, 12], sizes = [16, 1], strides = [1, 1]} : vector<16x36xi32> to vector<16x1xi32>
    %112 = vector.broadcast %111 : vector<16x1xi32> to vector<16x104xi32>
    %113 = arith.cmpi eq, %112, %2 : vector<16x104xi32>
    %114 = arith.extui %113 : vector<16x104xi1> to vector<16x104xi32>
    %115 = arith.sitofp %114 : vector<16x104xi32> to vector<16x104xf32>
    %116 = arith.truncf %115 : vector<16x104xf32> to vector<16x104xbf16>
    %cst_27 = arith.constant dense<0.000000e+00> : vector<16x32xf32>
    %117 = tpu.matmul %116, %0, %cst_27 {dimension_numbers = #tpu.dot_dimension_numbers<[1], [0], [0], [1], [0, 0, 1, 1], [], []>} : vector<16x104xbf16>, vector<104x32xbf16>, vector<16x32xf32> -> vector<16x32xf32>
    %118 = arith.truncf %117 : vector<16x32xf32> to vector<16x32xbf16>
    %c0_28 = arith.constant 0 : index
    %c384 = arith.constant 384 : index
    %119 = vector.load %arg8[%c0_28, %c384] : memref<16x1152xbf16, #tpu.memory_space<vmem>>, vector<16x32xbf16>
    tpu.vector_store %arg8[%c0_28, %c384], %118 {strides = array<i32>} : memref<16x1152xbf16, #tpu.memory_space<vmem>>, vector<16x32xbf16>,
    %120 = vector.extract_strided_slice %1 {offsets = [0, 13], sizes = [16, 1], strides = [1, 1]} : vector<16x36xi32> to vector<16x1xi32>
    %121 = vector.broadcast %120 : vector<16x1xi32> to vector<16x104xi32>
    %122 = arith.cmpi eq, %121, %2 : vector<16x104xi32>
    %123 = arith.extui %122 : vector<16x104xi1> to vector<16x104xi32>
    %124 = arith.sitofp %123 : vector<16x104xi32> to vector<16x104xf32>
    %125 = arith.truncf %124 : vector<16x104xf32> to vector<16x104xbf16>
    %cst_29 = arith.constant dense<0.000000e+00> : vector<16x32xf32>
    %126 = tpu.matmul %125, %0, %cst_29 {dimension_numbers = #tpu.dot_dimension_numbers<[1], [0], [0], [1], [0, 0, 1, 1], [], []>} : vector<16x104xbf16>, vector<104x32xbf16>, vector<16x32xf32> -> vector<16x32xf32>
    %127 = arith.truncf %126 : vector<16x32xf32> to vector<16x32xbf16>
    %c0_30 = arith.constant 0 : index
    %c416 = arith.constant 416 : index
    %128 = vector.load %arg8[%c0_30, %c416] : memref<16x1152xbf16, #tpu.memory_space<vmem>>, vector<16x32xbf16>
    tpu.vector_store %arg8[%c0_30, %c416], %127 {strides = array<i32>} : memref<16x1152xbf16, #tpu.memory_space<vmem>>, vector<16x32xbf16>,
    %129 = vector.extract_strided_slice %1 {offsets = [0, 14], sizes = [16, 1], strides = [1, 1]} : vector<16x36xi32> to vector<16x1xi32>
    %130 = vector.broadcast %129 : vector<16x1xi32> to vector<16x104xi32>
    %131 = arith.cmpi eq, %130, %2 : vector<16x104xi32>
    %132 = arith.extui %131 : vector<16x104xi1> to vector<16x104xi32>
    %133 = arith.sitofp %132 : vector<16x104xi32> to vector<16x104xf32>
    %134 = arith.truncf %133 : vector<16x104xf32> to vector<16x104xbf16>
    %cst_31 = arith.constant dense<0.000000e+00> : vector<16x32xf32>
    %135 = tpu.matmul %134, %0, %cst_31 {dimension_numbers = #tpu.dot_dimension_numbers<[1], [0], [0], [1], [0, 0, 1, 1], [], []>} : vector<16x104xbf16>, vector<104x32xbf16>, vector<16x32xf32> -> vector<16x32xf32>
    %136 = arith.truncf %135 : vector<16x32xf32> to vector<16x32xbf16>
    %c0_32 = arith.constant 0 : index
    %c448 = arith.constant 448 : index
    %137 = vector.load %arg8[%c0_32, %c448] : memref<16x1152xbf16, #tpu.memory_space<vmem>>, vector<16x32xbf16>
    tpu.vector_store %arg8[%c0_32, %c448], %136 {strides = array<i32>} : memref<16x1152xbf16, #tpu.memory_space<vmem>>, vector<16x32xbf16>,
    %138 = vector.extract_strided_slice %1 {offsets = [0, 15], sizes = [16, 1], strides = [1, 1]} : vector<16x36xi32> to vector<16x1xi32>
    %139 = vector.broadcast %138 : vector<16x1xi32> to vector<16x104xi32>
    %140 = arith.cmpi eq, %139, %2 : vector<16x104xi32>
    %141 = arith.extui %140 : vector<16x104xi1> to vector<16x104xi32>
    %142 = arith.sitofp %141 : vector<16x104xi32> to vector<16x104xf32>
    %143 = arith.truncf %142 : vector<16x104xf32> to vector<16x104xbf16>
    %cst_33 = arith.constant dense<0.000000e+00> : vector<16x32xf32>
    %144 = tpu.matmul %143, %0, %cst_33 {dimension_numbers = #tpu.dot_dimension_numbers<[1], [0], [0], [1], [0, 0, 1, 1], [], []>} : vector<16x104xbf16>, vector<104x32xbf16>, vector<16x32xf32> -> vector<16x32xf32>
    %145 = arith.truncf %144 : vector<16x32xf32> to vector<16x32xbf16>
    %c0_34 = arith.constant 0 : index
    %c480 = arith.constant 480 : index
    %146 = vector.load %arg8[%c0_34, %c480] : memref<16x1152xbf16, #tpu.memory_space<vmem>>, vector<16x32xbf16>
    tpu.vector_store %arg8[%c0_34, %c480], %145 {strides = array<i32>} : memref<16x1152xbf16, #tpu.memory_space<vmem>>, vector<16x32xbf16>,
    %147 = vector.extract_strided_slice %1 {offsets = [0, 16], sizes = [16, 1], strides = [1, 1]} : vector<16x36xi32> to vector<16x1xi32>
    %148 = vector.broadcast %147 : vector<16x1xi32> to vector<16x104xi32>
    %149 = arith.cmpi eq, %148, %2 : vector<16x104xi32>
    %150 = arith.extui %149 : vector<16x104xi1> to vector<16x104xi32>
    %151 = arith.sitofp %150 : vector<16x104xi32> to vector<16x104xf32>
    %152 = arith.truncf %151 : vector<16x104xf32> to vector<16x104xbf16>
    %cst_35 = arith.constant dense<0.000000e+00> : vector<16x32xf32>
    %153 = tpu.matmul %152, %0, %cst_35 {dimension_numbers = #tpu.dot_dimension_numbers<[1], [0], [0], [1], [0, 0, 1, 1], [], []>} : vector<16x104xbf16>, vector<104x32xbf16>, vector<16x32xf32> -> vector<16x32xf32>
    %154 = arith.truncf %153 : vector<16x32xf32> to vector<16x32xbf16>
    %c0_36 = arith.constant 0 : index
    %c512 = arith.constant 512 : index
    %155 = vector.load %arg8[%c0_36, %c512] : memref<16x1152xbf16, #tpu.memory_space<vmem>>, vector<16x32xbf16>
    tpu.vector_store %arg8[%c0_36, %c512], %154 {strides = array<i32>} : memref<16x1152xbf16, #tpu.memory_space<vmem>>, vector<16x32xbf16>,
    %156 = vector.extract_strided_slice %1 {offsets = [0, 17], sizes = [16, 1], strides = [1, 1]} : vector<16x36xi32> to vector<16x1xi32>
    %157 = vector.broadcast %156 : vector<16x1xi32> to vector<16x104xi32>
    %158 = arith.cmpi eq, %157, %2 : vector<16x104xi32>
    %159 = arith.extui %158 : vector<16x104xi1> to vector<16x104xi32>
    %160 = arith.sitofp %159 : vector<16x104xi32> to vector<16x104xf32>
    %161 = arith.truncf %160 : vector<16x104xf32> to vector<16x104xbf16>
    %cst_37 = arith.constant dense<0.000000e+00> : vector<16x32xf32>
    %162 = tpu.matmul %161, %0, %cst_37 {dimension_numbers = #tpu.dot_dimension_numbers<[1], [0], [0], [1], [0, 0, 1, 1], [], []>} : vector<16x104xbf16>, vector<104x32xbf16>, vector<16x32xf32> -> vector<16x32xf32>
    %163 = arith.truncf %162 : vector<16x32xf32> to vector<16x32xbf16>
    %c0_38 = arith.constant 0 : index
    %c544 = arith.constant 544 : index
    %164 = vector.load %arg8[%c0_38, %c544] : memref<16x1152xbf16, #tpu.memory_space<vmem>>, vector<16x32xbf16>
    tpu.vector_store %arg8[%c0_38, %c544], %163 {strides = array<i32>} : memref<16x1152xbf16, #tpu.memory_space<vmem>>, vector<16x32xbf16>,
    %165 = vector.extract_strided_slice %1 {offsets = [0, 18], sizes = [16, 1], strides = [1, 1]} : vector<16x36xi32> to vector<16x1xi32>
    %166 = vector.broadcast %165 : vector<16x1xi32> to vector<16x104xi32>
    %167 = arith.cmpi eq, %166, %2 : vector<16x104xi32>
    %168 = arith.extui %167 : vector<16x104xi1> to vector<16x104xi32>
    %169 = arith.sitofp %168 : vector<16x104xi32> to vector<16x104xf32>
    %170 = arith.truncf %169 : vector<16x104xf32> to vector<16x104xbf16>
    %cst_39 = arith.constant dense<0.000000e+00> : vector<16x32xf32>
    %171 = tpu.matmul %170, %0, %cst_39 {dimension_numbers = #tpu.dot_dimension_numbers<[1], [0], [0], [1], [0, 0, 1, 1], [], []>} : vector<16x104xbf16>, vector<104x32xbf16>, vector<16x32xf32> -> vector<16x32xf32>
    %172 = arith.truncf %171 : vector<16x32xf32> to vector<16x32xbf16>
    %c0_40 = arith.constant 0 : index
    %c576 = arith.constant 576 : index
    %173 = vector.load %arg8[%c0_40, %c576] : memref<16x1152xbf16, #tpu.memory_space<vmem>>, vector<16x32xbf16>
    tpu.vector_store %arg8[%c0_40, %c576], %172 {strides = array<i32>} : memref<16x1152xbf16, #tpu.memory_space<vmem>>, vector<16x32xbf16>,
    %174 = vector.extract_strided_slice %1 {offsets = [0, 19], sizes = [16, 1], strides = [1, 1]} : vector<16x36xi32> to vector<16x1xi32>
    %175 = vector.broadcast %174 : vector<16x1xi32> to vector<16x104xi32>
    %176 = arith.cmpi eq, %175, %2 : vector<16x104xi32>
    %177 = arith.extui %176 : vector<16x104xi1> to vector<16x104xi32>
    %178 = arith.sitofp %177 : vector<16x104xi32> to vector<16x104xf32>
    %179 = arith.truncf %178 : vector<16x104xf32> to vector<16x104xbf16>
    %cst_41 = arith.constant dense<0.000000e+00> : vector<16x32xf32>
    %180 = tpu.matmul %179, %0, %cst_41 {dimension_numbers = #tpu.dot_dimension_numbers<[1], [0], [0], [1], [0, 0, 1, 1], [], []>} : vector<16x104xbf16>, vector<104x32xbf16>, vector<16x32xf32> -> vector<16x32xf32>
    %181 = arith.truncf %180 : vector<16x32xf32> to vector<16x32xbf16>
    %c0_42 = arith.constant 0 : index
    %c608 = arith.constant 608 : index
    %182 = vector.load %arg8[%c0_42, %c608] : memref<16x1152xbf16, #tpu.memory_space<vmem>>, vector<16x32xbf16>
    tpu.vector_store %arg8[%c0_42, %c608], %181 {strides = array<i32>} : memref<16x1152xbf16, #tpu.memory_space<vmem>>, vector<16x32xbf16>,
    %183 = vector.extract_strided_slice %1 {offsets = [0, 20], sizes = [16, 1], strides = [1, 1]} : vector<16x36xi32> to vector<16x1xi32>
    %184 = vector.broadcast %183 : vector<16x1xi32> to vector<16x104xi32>
    %185 = arith.cmpi eq, %184, %2 : vector<16x104xi32>
    %186 = arith.extui %185 : vector<16x104xi1> to vector<16x104xi32>
    %187 = arith.sitofp %186 : vector<16x104xi32> to vector<16x104xf32>
    %188 = arith.truncf %187 : vector<16x104xf32> to vector<16x104xbf16>
    %cst_43 = arith.constant dense<0.000000e+00> : vector<16x32xf32>
    %189 = tpu.matmul %188, %0, %cst_43 {dimension_numbers = #tpu.dot_dimension_numbers<[1], [0], [0], [1], [0, 0, 1, 1], [], []>} : vector<16x104xbf16>, vector<104x32xbf16>, vector<16x32xf32> -> vector<16x32xf32>
    %190 = arith.truncf %189 : vector<16x32xf32> to vector<16x32xbf16>
    %c0_44 = arith.constant 0 : index
    %c640 = arith.constant 640 : index
    %191 = vector.load %arg8[%c0_44, %c640] : memref<16x1152xbf16, #tpu.memory_space<vmem>>, vector<16x32xbf16>
    tpu.vector_store %arg8[%c0_44, %c640], %190 {strides = array<i32>} : memref<16x1152xbf16, #tpu.memory_space<vmem>>, vector<16x32xbf16>,
    %192 = vector.extract_strided_slice %1 {offsets = [0, 21], sizes = [16, 1], strides = [1, 1]} : vector<16x36xi32> to vector<16x1xi32>
    %193 = vector.broadcast %192 : vector<16x1xi32> to vector<16x104xi32>
    %194 = arith.cmpi eq, %193, %2 : vector<16x104xi32>
    %195 = arith.extui %194 : vector<16x104xi1> to vector<16x104xi32>
    %196 = arith.sitofp %195 : vector<16x104xi32> to vector<16x104xf32>
    %197 = arith.truncf %196 : vector<16x104xf32> to vector<16x104xbf16>
    %cst_45 = arith.constant dense<0.000000e+00> : vector<16x32xf32>
    %198 = tpu.matmul %197, %0, %cst_45 {dimension_numbers = #tpu.dot_dimension_numbers<[1], [0], [0], [1], [0, 0, 1, 1], [], []>} : vector<16x104xbf16>, vector<104x32xbf16>, vector<16x32xf32> -> vector<16x32xf32>
    %199 = arith.truncf %198 : vector<16x32xf32> to vector<16x32xbf16>
    %c0_46 = arith.constant 0 : index
    %c672 = arith.constant 672 : index
    %200 = vector.load %arg8[%c0_46, %c672] : memref<16x1152xbf16, #tpu.memory_space<vmem>>, vector<16x32xbf16>
    tpu.vector_store %arg8[%c0_46, %c672], %199 {strides = array<i32>} : memref<16x1152xbf16, #tpu.memory_space<vmem>>, vector<16x32xbf16>,
    %201 = vector.extract_strided_slice %1 {offsets = [0, 22], sizes = [16, 1], strides = [1, 1]} : vector<16x36xi32> to vector<16x1xi32>
    %202 = vector.broadcast %201 : vector<16x1xi32> to vector<16x104xi32>
    %203 = arith.cmpi eq, %202, %2 : vector<16x104xi32>
    %204 = arith.extui %203 : vector<16x104xi1> to vector<16x104xi32>
    %205 = arith.sitofp %204 : vector<16x104xi32> to vector<16x104xf32>
    %206 = arith.truncf %205 : vector<16x104xf32> to vector<16x104xbf16>
    %cst_47 = arith.constant dense<0.000000e+00> : vector<16x32xf32>
    %207 = tpu.matmul %206, %0, %cst_47 {dimension_numbers = #tpu.dot_dimension_numbers<[1], [0], [0], [1], [0, 0, 1, 1], [], []>} : vector<16x104xbf16>, vector<104x32xbf16>, vector<16x32xf32> -> vector<16x32xf32>
    %208 = arith.truncf %207 : vector<16x32xf32> to vector<16x32xbf16>
    %c0_48 = arith.constant 0 : index
    %c704 = arith.constant 704 : index
    %209 = vector.load %arg8[%c0_48, %c704] : memref<16x1152xbf16, #tpu.memory_space<vmem>>, vector<16x32xbf16>
    tpu.vector_store %arg8[%c0_48, %c704], %208 {strides = array<i32>} : memref<16x1152xbf16, #tpu.memory_space<vmem>>, vector<16x32xbf16>,
    %210 = vector.extract_strided_slice %1 {offsets = [0, 23], sizes = [16, 1], strides = [1, 1]} : vector<16x36xi32> to vector<16x1xi32>
    %211 = vector.broadcast %210 : vector<16x1xi32> to vector<16x104xi32>
    %212 = arith.cmpi eq, %211, %2 : vector<16x104xi32>
    %213 = arith.extui %212 : vector<16x104xi1> to vector<16x104xi32>
    %214 = arith.sitofp %213 : vector<16x104xi32> to vector<16x104xf32>
    %215 = arith.truncf %214 : vector<16x104xf32> to vector<16x104xbf16>
    %cst_49 = arith.constant dense<0.000000e+00> : vector<16x32xf32>
    %216 = tpu.matmul %215, %0, %cst_49 {dimension_numbers = #tpu.dot_dimension_numbers<[1], [0], [0], [1], [0, 0, 1, 1], [], []>} : vector<16x104xbf16>, vector<104x32xbf16>, vector<16x32xf32> -> vector<16x32xf32>
    %217 = arith.truncf %216 : vector<16x32xf32> to vector<16x32xbf16>
    %c0_50 = arith.constant 0 : index
    %c736 = arith.constant 736 : index
    %218 = vector.load %arg8[%c0_50, %c736] : memref<16x1152xbf16, #tpu.memory_space<vmem>>, vector<16x32xbf16>
    tpu.vector_store %arg8[%c0_50, %c736], %217 {strides = array<i32>} : memref<16x1152xbf16, #tpu.memory_space<vmem>>, vector<16x32xbf16>,
    %219 = vector.extract_strided_slice %1 {offsets = [0, 24], sizes = [16, 1], strides = [1, 1]} : vector<16x36xi32> to vector<16x1xi32>
    %220 = vector.broadcast %219 : vector<16x1xi32> to vector<16x104xi32>
    %221 = arith.cmpi eq, %220, %2 : vector<16x104xi32>
    %222 = arith.extui %221 : vector<16x104xi1> to vector<16x104xi32>
    %223 = arith.sitofp %222 : vector<16x104xi32> to vector<16x104xf32>
    %224 = arith.truncf %223 : vector<16x104xf32> to vector<16x104xbf16>
    %cst_51 = arith.constant dense<0.000000e+00> : vector<16x32xf32>
    %225 = tpu.matmul %224, %0, %cst_51 {dimension_numbers = #tpu.dot_dimension_numbers<[1], [0], [0], [1], [0, 0, 1, 1], [], []>} : vector<16x104xbf16>, vector<104x32xbf16>, vector<16x32xf32> -> vector<16x32xf32>
    %226 = arith.truncf %225 : vector<16x32xf32> to vector<16x32xbf16>
    %c0_52 = arith.constant 0 : index
    %c768 = arith.constant 768 : index
    %227 = vector.load %arg8[%c0_52, %c768] : memref<16x1152xbf16, #tpu.memory_space<vmem>>, vector<16x32xbf16>
    tpu.vector_store %arg8[%c0_52, %c768], %226 {strides = array<i32>} : memref<16x1152xbf16, #tpu.memory_space<vmem>>, vector<16x32xbf16>,
    %228 = vector.extract_strided_slice %1 {offsets = [0, 25], sizes = [16, 1], strides = [1, 1]} : vector<16x36xi32> to vector<16x1xi32>
    %229 = vector.broadcast %228 : vector<16x1xi32> to vector<16x104xi32>
    %230 = arith.cmpi eq, %229, %2 : vector<16x104xi32>
    %231 = arith.extui %230 : vector<16x104xi1> to vector<16x104xi32>
    %232 = arith.sitofp %231 : vector<16x104xi32> to vector<16x104xf32>
    %233 = arith.truncf %232 : vector<16x104xf32> to vector<16x104xbf16>
    %cst_53 = arith.constant dense<0.000000e+00> : vector<16x32xf32>
    %234 = tpu.matmul %233, %0, %cst_53 {dimension_numbers = #tpu.dot_dimension_numbers<[1], [0], [0], [1], [0, 0, 1, 1], [], []>} : vector<16x104xbf16>, vector<104x32xbf16>, vector<16x32xf32> -> vector<16x32xf32>
    %235 = arith.truncf %234 : vector<16x32xf32> to vector<16x32xbf16>
    %c0_54 = arith.constant 0 : index
    %c800 = arith.constant 800 : index
    %236 = vector.load %arg8[%c0_54, %c800] : memref<16x1152xbf16, #tpu.memory_space<vmem>>, vector<16x32xbf16>
    tpu.vector_store %arg8[%c0_54, %c800], %235 {strides = array<i32>} : memref<16x1152xbf16, #tpu.memory_space<vmem>>, vector<16x32xbf16>,
    %237 = vector.extract_strided_slice %1 {offsets = [0, 26], sizes = [16, 1], strides = [1, 1]} : vector<16x36xi32> to vector<16x1xi32>
    %238 = vector.broadcast %237 : vector<16x1xi32> to vector<16x104xi32>
    %239 = arith.cmpi eq, %238, %2 : vector<16x104xi32>
    %240 = arith.extui %239 : vector<16x104xi1> to vector<16x104xi32>
    %241 = arith.sitofp %240 : vector<16x104xi32> to vector<16x104xf32>
    %242 = arith.truncf %241 : vector<16x104xf32> to vector<16x104xbf16>
    %cst_55 = arith.constant dense<0.000000e+00> : vector<16x32xf32>
    %243 = tpu.matmul %242, %0, %cst_55 {dimension_numbers = #tpu.dot_dimension_numbers<[1], [0], [0], [1], [0, 0, 1, 1], [], []>} : vector<16x104xbf16>, vector<104x32xbf16>, vector<16x32xf32> -> vector<16x32xf32>
    %244 = arith.truncf %243 : vector<16x32xf32> to vector<16x32xbf16>
    %c0_56 = arith.constant 0 : index
    %c832 = arith.constant 832 : index
    %245 = vector.load %arg8[%c0_56, %c832] : memref<16x1152xbf16, #tpu.memory_space<vmem>>, vector<16x32xbf16>
    tpu.vector_store %arg8[%c0_56, %c832], %244 {strides = array<i32>} : memref<16x1152xbf16, #tpu.memory_space<vmem>>, vector<16x32xbf16>,
    %246 = vector.extract_strided_slice %1 {offsets = [0, 27], sizes = [16, 1], strides = [1, 1]} : vector<16x36xi32> to vector<16x1xi32>
    %247 = vector.broadcast %246 : vector<16x1xi32> to vector<16x104xi32>
    %248 = arith.cmpi eq, %247, %2 : vector<16x104xi32>
    %249 = arith.extui %248 : vector<16x104xi1> to vector<16x104xi32>
    %250 = arith.sitofp %249 : vector<16x104xi32> to vector<16x104xf32>
    %251 = arith.truncf %250 : vector<16x104xf32> to vector<16x104xbf16>
    %cst_57 = arith.constant dense<0.000000e+00> : vector<16x32xf32>
    %252 = tpu.matmul %251, %0, %cst_57 {dimension_numbers = #tpu.dot_dimension_numbers<[1], [0], [0], [1], [0, 0, 1, 1], [], []>} : vector<16x104xbf16>, vector<104x32xbf16>, vector<16x32xf32> -> vector<16x32xf32>
    %253 = arith.truncf %252 : vector<16x32xf32> to vector<16x32xbf16>
    %c0_58 = arith.constant 0 : index
    %c864 = arith.constant 864 : index
    %254 = vector.load %arg8[%c0_58, %c864] : memref<16x1152xbf16, #tpu.memory_space<vmem>>, vector<16x32xbf16>
    tpu.vector_store %arg8[%c0_58, %c864], %253 {strides = array<i32>} : memref<16x1152xbf16, #tpu.memory_space<vmem>>, vector<16x32xbf16>,
    %255 = vector.extract_strided_slice %1 {offsets = [0, 28], sizes = [16, 1], strides = [1, 1]} : vector<16x36xi32> to vector<16x1xi32>
    %256 = vector.broadcast %255 : vector<16x1xi32> to vector<16x104xi32>
    %257 = arith.cmpi eq, %256, %2 : vector<16x104xi32>
    %258 = arith.extui %257 : vector<16x104xi1> to vector<16x104xi32>
    %259 = arith.sitofp %258 : vector<16x104xi32> to vector<16x104xf32>
    %260 = arith.truncf %259 : vector<16x104xf32> to vector<16x104xbf16>
    %cst_59 = arith.constant dense<0.000000e+00> : vector<16x32xf32>
    %261 = tpu.matmul %260, %0, %cst_59 {dimension_numbers = #tpu.dot_dimension_numbers<[1], [0], [0], [1], [0, 0, 1, 1], [], []>} : vector<16x104xbf16>, vector<104x32xbf16>, vector<16x32xf32> -> vector<16x32xf32>
    %262 = arith.truncf %261 : vector<16x32xf32> to vector<16x32xbf16>
    %c0_60 = arith.constant 0 : index
    %c896 = arith.constant 896 : index
    %263 = vector.load %arg8[%c0_60, %c896] : memref<16x1152xbf16, #tpu.memory_space<vmem>>, vector<16x32xbf16>
    tpu.vector_store %arg8[%c0_60, %c896], %262 {strides = array<i32>} : memref<16x1152xbf16, #tpu.memory_space<vmem>>, vector<16x32xbf16>,
    %264 = vector.extract_strided_slice %1 {offsets = [0, 29], sizes = [16, 1], strides = [1, 1]} : vector<16x36xi32> to vector<16x1xi32>
    %265 = vector.broadcast %264 : vector<16x1xi32> to vector<16x104xi32>
    %266 = arith.cmpi eq, %265, %2 : vector<16x104xi32>
    %267 = arith.extui %266 : vector<16x104xi1> to vector<16x104xi32>
    %268 = arith.sitofp %267 : vector<16x104xi32> to vector<16x104xf32>
    %269 = arith.truncf %268 : vector<16x104xf32> to vector<16x104xbf16>
    %cst_61 = arith.constant dense<0.000000e+00> : vector<16x32xf32>
    %270 = tpu.matmul %269, %0, %cst_61 {dimension_numbers = #tpu.dot_dimension_numbers<[1], [0], [0], [1], [0, 0, 1, 1], [], []>} : vector<16x104xbf16>, vector<104x32xbf16>, vector<16x32xf32> -> vector<16x32xf32>
    %271 = arith.truncf %270 : vector<16x32xf32> to vector<16x32xbf16>
    %c0_62 = arith.constant 0 : index
    %c928 = arith.constant 928 : index
    %272 = vector.load %arg8[%c0_62, %c928] : memref<16x1152xbf16, #tpu.memory_space<vmem>>, vector<16x32xbf16>
    tpu.vector_store %arg8[%c0_62, %c928], %271 {strides = array<i32>} : memref<16x1152xbf16, #tpu.memory_space<vmem>>, vector<16x32xbf16>,
    %273 = vector.extract_strided_slice %1 {offsets = [0, 30], sizes = [16, 1], strides = [1, 1]} : vector<16x36xi32> to vector<16x1xi32>
    %274 = vector.broadcast %273 : vector<16x1xi32> to vector<16x104xi32>
    %275 = arith.cmpi eq, %274, %2 : vector<16x104xi32>
    %276 = arith.extui %275 : vector<16x104xi1> to vector<16x104xi32>
    %277 = arith.sitofp %276 : vector<16x104xi32> to vector<16x104xf32>
    %278 = arith.truncf %277 : vector<16x104xf32> to vector<16x104xbf16>
    %cst_63 = arith.constant dense<0.000000e+00> : vector<16x32xf32>
    %279 = tpu.matmul %278, %0, %cst_63 {dimension_numbers = #tpu.dot_dimension_numbers<[1], [0], [0], [1], [0, 0, 1, 1], [], []>} : vector<16x104xbf16>, vector<104x32xbf16>, vector<16x32xf32> -> vector<16x32xf32>
    %280 = arith.truncf %279 : vector<16x32xf32> to vector<16x32xbf16>
    %c0_64 = arith.constant 0 : index
    %c960 = arith.constant 960 : index
    %281 = vector.load %arg8[%c0_64, %c960] : memref<16x1152xbf16, #tpu.memory_space<vmem>>, vector<16x32xbf16>
    tpu.vector_store %arg8[%c0_64, %c960], %280 {strides = array<i32>} : memref<16x1152xbf16, #tpu.memory_space<vmem>>, vector<16x32xbf16>,
    %282 = vector.extract_strided_slice %1 {offsets = [0, 31], sizes = [16, 1], strides = [1, 1]} : vector<16x36xi32> to vector<16x1xi32>
    %283 = vector.broadcast %282 : vector<16x1xi32> to vector<16x104xi32>
    %284 = arith.cmpi eq, %283, %2 : vector<16x104xi32>
    %285 = arith.extui %284 : vector<16x104xi1> to vector<16x104xi32>
    %286 = arith.sitofp %285 : vector<16x104xi32> to vector<16x104xf32>
    %287 = arith.truncf %286 : vector<16x104xf32> to vector<16x104xbf16>
    %cst_65 = arith.constant dense<0.000000e+00> : vector<16x32xf32>
    %288 = tpu.matmul %287, %0, %cst_65 {dimension_numbers = #tpu.dot_dimension_numbers<[1], [0], [0], [1], [0, 0, 1, 1], [], []>} : vector<16x104xbf16>, vector<104x32xbf16>, vector<16x32xf32> -> vector<16x32xf32>
    %289 = arith.truncf %288 : vector<16x32xf32> to vector<16x32xbf16>
    %c0_66 = arith.constant 0 : index
    %c992 = arith.constant 992 : index
    %290 = vector.load %arg8[%c0_66, %c992] : memref<16x1152xbf16, #tpu.memory_space<vmem>>, vector<16x32xbf16>
    tpu.vector_store %arg8[%c0_66, %c992], %289 {strides = array<i32>} : memref<16x1152xbf16, #tpu.memory_space<vmem>>, vector<16x32xbf16>,
    %291 = vector.extract_strided_slice %1 {offsets = [0, 32], sizes = [16, 1], strides = [1, 1]} : vector<16x36xi32> to vector<16x1xi32>
    %292 = vector.broadcast %291 : vector<16x1xi32> to vector<16x104xi32>
    %293 = arith.cmpi eq, %292, %2 : vector<16x104xi32>
    %294 = arith.extui %293 : vector<16x104xi1> to vector<16x104xi32>
    %295 = arith.sitofp %294 : vector<16x104xi32> to vector<16x104xf32>
    %296 = arith.truncf %295 : vector<16x104xf32> to vector<16x104xbf16>
    %cst_67 = arith.constant dense<0.000000e+00> : vector<16x32xf32>
    %297 = tpu.matmul %296, %0, %cst_67 {dimension_numbers = #tpu.dot_dimension_numbers<[1], [0], [0], [1], [0, 0, 1, 1], [], []>} : vector<16x104xbf16>, vector<104x32xbf16>, vector<16x32xf32> -> vector<16x32xf32>
    %298 = arith.truncf %297 : vector<16x32xf32> to vector<16x32xbf16>
    %c0_68 = arith.constant 0 : index
    %c1024 = arith.constant 1024 : index
    %299 = vector.load %arg8[%c0_68, %c1024] : memref<16x1152xbf16, #tpu.memory_space<vmem>>, vector<16x32xbf16>
    tpu.vector_store %arg8[%c0_68, %c1024], %298 {strides = array<i32>} : memref<16x1152xbf16, #tpu.memory_space<vmem>>, vector<16x32xbf16>,
    %300 = vector.extract_strided_slice %1 {offsets = [0, 33], sizes = [16, 1], strides = [1, 1]} : vector<16x36xi32> to vector<16x1xi32>
    %301 = vector.broadcast %300 : vector<16x1xi32> to vector<16x104xi32>
    %302 = arith.cmpi eq, %301, %2 : vector<16x104xi32>
    %303 = arith.extui %302 : vector<16x104xi1> to vector<16x104xi32>
    %304 = arith.sitofp %303 : vector<16x104xi32> to vector<16x104xf32>
    %305 = arith.truncf %304 : vector<16x104xf32> to vector<16x104xbf16>
    %cst_69 = arith.constant dense<0.000000e+00> : vector<16x32xf32>
    %306 = tpu.matmul %305, %0, %cst_69 {dimension_numbers = #tpu.dot_dimension_numbers<[1], [0], [0], [1], [0, 0, 1, 1], [], []>} : vector<16x104xbf16>, vector<104x32xbf16>, vector<16x32xf32> -> vector<16x32xf32>
    %307 = arith.truncf %306 : vector<16x32xf32> to vector<16x32xbf16>
    %c0_70 = arith.constant 0 : index
    %c1056 = arith.constant 1056 : index
    %308 = vector.load %arg8[%c0_70, %c1056] : memref<16x1152xbf16, #tpu.memory_space<vmem>>, vector<16x32xbf16>
    tpu.vector_store %arg8[%c0_70, %c1056], %307 {strides = array<i32>} : memref<16x1152xbf16, #tpu.memory_space<vmem>>, vector<16x32xbf16>,
    %309 = vector.extract_strided_slice %1 {offsets = [0, 34], sizes = [16, 1], strides = [1, 1]} : vector<16x36xi32> to vector<16x1xi32>
    %310 = vector.broadcast %309 : vector<16x1xi32> to vector<16x104xi32>
    %311 = arith.cmpi eq, %310, %2 : vector<16x104xi32>
    %312 = arith.extui %311 : vector<16x104xi1> to vector<16x104xi32>
    %313 = arith.sitofp %312 : vector<16x104xi32> to vector<16x104xf32>
    %314 = arith.truncf %313 : vector<16x104xf32> to vector<16x104xbf16>
    %cst_71 = arith.constant dense<0.000000e+00> : vector<16x32xf32>
    %315 = tpu.matmul %314, %0, %cst_71 {dimension_numbers = #tpu.dot_dimension_numbers<[1], [0], [0], [1], [0, 0, 1, 1], [], []>} : vector<16x104xbf16>, vector<104x32xbf16>, vector<16x32xf32> -> vector<16x32xf32>
    %316 = arith.truncf %315 : vector<16x32xf32> to vector<16x32xbf16>
    %c0_72 = arith.constant 0 : index
    %c1088 = arith.constant 1088 : index
    %317 = vector.load %arg8[%c0_72, %c1088] : memref<16x1152xbf16, #tpu.memory_space<vmem>>, vector<16x32xbf16>
    tpu.vector_store %arg8[%c0_72, %c1088], %316 {strides = array<i32>} : memref<16x1152xbf16, #tpu.memory_space<vmem>>, vector<16x32xbf16>,
    %318 = vector.extract_strided_slice %1 {offsets = [0, 35], sizes = [16, 1], strides = [1, 1]} : vector<16x36xi32> to vector<16x1xi32>
    %319 = vector.broadcast %318 : vector<16x1xi32> to vector<16x104xi32>
    %320 = arith.cmpi eq, %319, %2 : vector<16x104xi32>
    %321 = arith.extui %320 : vector<16x104xi1> to vector<16x104xi32>
    %322 = arith.sitofp %321 : vector<16x104xi32> to vector<16x104xf32>
    %323 = arith.truncf %322 : vector<16x104xf32> to vector<16x104xbf16>
    %cst_73 = arith.constant dense<0.000000e+00> : vector<16x32xf32>
    %324 = tpu.matmul %323, %0, %cst_73 {dimension_numbers = #tpu.dot_dimension_numbers<[1], [0], [0], [1], [0, 0, 1, 1], [], []>} : vector<16x104xbf16>, vector<104x32xbf16>, vector<16x32xf32> -> vector<16x32xf32>
    %325 = arith.truncf %324 : vector<16x32xf32> to vector<16x32xbf16>
    %c0_74 = arith.constant 0 : index
    %c1120 = arith.constant 1120 : index
    %326 = vector.load %arg8[%c0_74, %c1120] : memref<16x1152xbf16, #tpu.memory_space<vmem>>, vector<16x32xbf16>
    tpu.vector_store %arg8[%c0_74, %c1120], %325 {strides = array<i32>} : memref<16x1152xbf16, #tpu.memory_space<vmem>>, vector<16x32xbf16>,
    %c0_75 = arith.constant 0 : index
    %c0_76 = arith.constant 0 : index
    %327 = vector.load %arg8[%c0_75, %c0_76] : memref<16x1152xbf16, #tpu.memory_space<vmem>>, vector<16x1152xbf16>
    %c0_77 = arith.constant 0 : index
    %c0_78 = arith.constant 0 : index
    %328 = vector.load %arg3[%c0_77, %c0_78] : memref<1152x256xbf16, #tpu.memory_space<vmem>>, vector<1152x256xbf16>
    %cst_79 = arith.constant dense<0.000000e+00> : vector<16x256xf32>
    %329 = tpu.matmul %327, %328, %cst_79 {dimension_numbers = #tpu.dot_dimension_numbers<[1], [0], [0], [1], [0, 0, 1, 1], [], []>} : vector<16x1152xbf16>, vector<1152x256xbf16>, vector<16x256xf32> -> vector<16x256xf32>
    %c0_80 = arith.constant 0 : index
    %c0_81 = arith.constant 0 : index
    %330 = vector.load %arg4[%c0_80, %c0_81] : memref<1x256xf32, #tpu.memory_space<vmem>>, vector<1x256xf32>
    %331 = vector.broadcast %330 : vector<1x256xf32> to vector<16x256xf32>
    %332 = arith.addf %329, %331 : vector<16x256xf32>
    %cst_82 = arith.constant 0.000000e+00 : f32
    %333 = vector.broadcast %cst_82 : f32 to vector<16x256xf32>
    %334 = arith.maximumf %332, %333 : vector<16x256xf32>
    %335 = arith.truncf %334 : vector<16x256xf32> to vector<16x256xbf16>
    %c0_83 = arith.constant 0 : index
    %c0_84 = arith.constant 0 : index
    %336 = vector.load %arg5[%c0_83, %c0_84] : memref<256x128xbf16, #tpu.memory_space<vmem>>, vector<256x128xbf16>
    %cst_85 = arith.constant dense<0.000000e+00> : vector<16x128xf32>
    %337 = tpu.matmul %335, %336, %cst_85 {dimension_numbers = #tpu.dot_dimension_numbers<[1], [0], [0], [1], [0, 0, 1, 1], [], []>} : vector<16x256xbf16>, vector<256x128xbf16>, vector<16x128xf32> -> vector<16x128xf32>
    %c0_86 = arith.constant 0 : index
    %c0_87 = arith.constant 0 : index
    %338 = vector.load %arg6[%c0_86, %c0_87] : memref<1x128xf32, #tpu.memory_space<vmem>>, vector<1x128xf32>
    %339 = vector.broadcast %338 : vector<1x128xf32> to vector<16x128xf32>
    %340 = arith.addf %337, %339 : vector<16x128xf32>
    %341 = arith.truncf %340 : vector<16x128xf32> to vector<16x128xbf16>
    %c0_88 = arith.constant 0 : index
    %c0_89 = arith.constant 0 : index
    %342 = vector.load %arg7[%c0_88, %c0_89] : memref<16x128xbf16, #tpu.memory_space<vmem>>, vector<16x128xbf16>
    tpu.vector_store %arg7[%c0_88, %c0_89], %341 {strides = array<i32>} : memref<16x128xbf16, #tpu.memory_space<vmem>>, vector<16x128xbf16>,
    return
  }
  func.func @transform_0(%arg0: i32) -> (i32, i32) {
    %c0_i32 = arith.constant 0 : i32
    %c0_i32_0 = arith.constant 0 : i32
    return %arg0, %c0_i32 : i32, i32
  }
  func.func @transform_1(%arg0: i32) -> (i32, i32) {
    %c0_i32 = arith.constant 0 : i32
    %c0_i32_0 = arith.constant 0 : i32
    %c0_i32_1 = arith.constant 0 : i32
    return %c0_i32, %c0_i32_0 : i32, i32
  }
  func.func @transform_2(%arg0: i32) -> (i32, i32) {
    %c0_i32 = arith.constant 0 : i32
    %c0_i32_0 = arith.constant 0 : i32
    %c0_i32_1 = arith.constant 0 : i32
    return %c0_i32, %c0_i32_0 : i32, i32
  }
  func.func @transform_3(%arg0: i32) -> (i32, i32) {
    %c0_i32 = arith.constant 0 : i32
    %c0_i32_0 = arith.constant 0 : i32
    %c0_i32_1 = arith.constant 0 : i32
    return %c0_i32, %c0_i32_0 : i32, i32
  }
  func.func @transform_4(%arg0: i32) -> (i32, i32) {
    %c0_i32 = arith.constant 0 : i32
    %c0_i32_0 = arith.constant 0 : i32
    %c0_i32_1 = arith.constant 0 : i32
    return %c0_i32, %c0_i32_0 : i32, i32
  }
  func.func @transform_5(%arg0: i32) -> (i32, i32) {
    %c0_i32 = arith.constant 0 : i32
    %c0_i32_0 = arith.constant 0 : i32
    %c0_i32_1 = arith.constant 0 : i32
    return %c0_i32, %c0_i32_0 : i32, i32
  }
  func.func @transform_6(%arg0: i32) -> (i32, i32) {
    %c0_i32 = arith.constant 0 : i32
    %c0_i32_0 = arith.constant 0 : i32
    return %arg0, %c0_i32 : i32, i32
  }
}

</mosaic_0001>

<llo_original>
// kernel: parser_forward.1
$region0: #{parser_forward.1}
  #allocation0 [shape = 'u32[]', space=smem, size = 0x4, offset = 0x4, fixed_abs, tag = 'smem constant byte address 0x4 - core index']
  #allocation1 [shape = 'u32[72,128]{1,0:T(1,128)}', space=vmem, size = 0x9000, scoped, tag = 'internal scratch']
  #allocation2 [shape = 'bf16[16,1152]{1,0:T(8,128)(2,1)}', space=vmem, size = 0x9000, scoped, tag = 'scratch operand']
  %s0 = inlined_call_operand.vmem [shape: s32[32,36], index: 0, kind: input, shape index: {}]
  %s1 = inlined_call_operand.vmem [shape: bf16[104,32], index: 1, kind: input, shape index: {}]
  %s2 = inlined_call_operand.vmem [shape: bf16[1152,256], index: 2, kind: input, shape index: {}]
  %s3 = inlined_call_operand.vmem [shape: f32[1,256], index: 3, kind: input, shape index: {}]
  %s4 = inlined_call_operand.vmem [shape: bf16[256,128], index: 4, kind: input, shape index: {}]
  %s5 = inlined_call_operand.vmem [shape: f32[1,128], index: 5, kind: input, shape index: {}]
  %s6 = inlined_call_operand.vmem [shape: bf16[32,128], index: 6, kind: output, shape index: {}]
  %s7 = sld [smem:[#allocation0]]
  $region57: #{parser_forward.1} parent=0
    _
  %s9 = ssub.s32 1, %s7
  %s10 = scalar_select 0, %s9, %s7
  loop: start=0, step=1, limit=4
  $region2: #{parser_forward.1} parent=0 // loop_pre_header
    _
  $region3: #{parser_forward.1} parent=0 // loop_header
    %s12 = sphi 0, %s16
    %p13 = scmp.ge.s32.totalorder %s12, 4
    %s22 = sphi 0, %s24
    %s25 = sphi 0, %s22
    %s26 = sphi 0, %s25
    %s42 = sphi 0, %s26
    %s46 = sphi 0, %s46
    %s48 = sphi 0, %s46
    %s49 = sphi 0, %s48
    %s63 = sphi 0, %s49
    %s67 = sphi 0, %s67
    %s69 = sphi 0, %s67
    %s70 = sphi 0, %s69
    %s84 = sphi 0, %s70
    %s88 = sphi 0, %s88
    %s90 = sphi 0, %s88
    %s91 = sphi 0, %s90
    %s105 = sphi 0, %s91
    %s109 = sphi 0, %s109
    %s111 = sphi 0, %s109
    %s112 = sphi 0, %s111
    %s126 = sphi 0, %s112
    %s130 = sphi 0, %s130
    %s132 = sphi 0, %s130
    %s133 = sphi 0, %s132
    %s147 = sphi 0, %s133
    %s153 = sphi 0, %s155
    %s156 = sphi 0, %s153
    %s157 = sphi 0, %s156
    %s173 = sphi 0, %s157
  $region4: #{parser_forward.1} parent=0 // loop_header_branch
    %15 = sbr.rel (%p13) target = $region8
  $region5: #{parser_forward.1} parent=0 // loop_body
    %s17 = ssub.s32 %s12, 1
    %s18 = ssub.s32 %s12, 2
    %s19 = sadd.s32 %s12, 1
    %s20 = ssub.s32 %s12, %s19
    %p21 = scmp.eq.s32.totalorder %s20, 0
    %s23 = sadd.s32 %s22, 1
    %s24 = scalar_select %p21, %s22, %s23
    %p27 = pneg %p21
    %p28 = scmp.eq.s32.totalorder %s12, 1
    %p29 = por %p27, %p28
    %p30 = scmp.ne.s32.totalorder %s22, %s25
    %p31 = scmp.eq.s32.totalorder %s12, 0
    %p32 = por %p30, %p31
    %p33 = scmp.ne.s32.totalorder %s22, %s25
    %p34 = scmp.eq.s32.totalorder %s17, 1
    %p35 = por %p33, %p34
    %p36 = scmp.ne.s32.totalorder %s25, %s26
    %p37 = scmp.eq.s32.totalorder %s17, 0
    %p38 = por %p36, %p37
    %p39 = scmp.ne.s32.totalorder %s25, %s26
    %p40 = scmp.eq.s32.totalorder %s18, 1
    %p41 = por %p39, %p40
    %p43 = scmp.ne.s32.totalorder %s26, %s42
    %p44 = scmp.eq.s32.totalorder %s18, 0
    %p45 = por %p43, %p44
    %s47 = sadd.s32 %s46, 1
    %p50 = scmp.eq.s32.totalorder %s12, 1
    %p51 = scmp.ne.s32.totalorder %s46, %s48
    %p52 = scmp.eq.s32.totalorder %s12, 0
    %p53 = por %p51, %p52
    %p54 = scmp.ne.s32.totalorder %s46, %s48
    %p55 = scmp.eq.s32.totalorder %s17, 1
    %p56 = por %p54, %p55
    %p57 = scmp.ne.s32.totalorder %s48, %s49
    %p58 = scmp.eq.s32.totalorder %s17, 0
    %p59 = por %p57, %p58
    %p60 = scmp.ne.s32.totalorder %s48, %s49
    %p61 = scmp.eq.s32.totalorder %s18, 1
    %p62 = por %p60, %p61
    %p64 = scmp.ne.s32.totalorder %s49, %s63
    %p65 = scmp.eq.s32.totalorder %s18, 0
    %p66 = por %p64, %p65
    %s68 = sadd.s32 %s67, 1
    %p71 = scmp.eq.s32.totalorder %s12, 1
    %p72 = scmp.ne.s32.totalorder %s67, %s69
    %p73 = scmp.eq.s32.totalorder %s12, 0
    %p74 = por %p72, %p73
    %p75 = scmp.ne.s32.totalorder %s67, %s69
    %p76 = scmp.eq.s32.totalorder %s17, 1
    %p77 = por %p75, %p76
    %p78 = scmp.ne.s32.totalorder %s69, %s70
    %p79 = scmp.eq.s32.totalorder %s17, 0
    %p80 = por %p78, %p79
    %p81 = scmp.ne.s32.totalorder %s69, %s70
    %p82 = scmp.eq.s32.totalorder %s18, 1
    %p83 = por %p81, %p82
    %p85 = scmp.ne.s32.totalorder %s70, %s84
    %p86 = scmp.eq.s32.totalorder %s18, 0
    %p87 = por %p85, %p86
    %s89 = sadd.s32 %s88, 1
    %p92 = scmp.eq.s32.totalorder %s12, 1
    %p93 = scmp.ne.s32.totalorder %s88, %s90
    %p94 = scmp.eq.s32.totalorder %s12, 0
    %p95 = por %p93, %p94
    %p96 = scmp.ne.s32.totalorder %s88, %s90
    %p97 = scmp.eq.s32.totalorder %s17, 1
    %p98 = por %p96, %p97
    %p99 = scmp.ne.s32.totalorder %s90, %s91
    %p100 = scmp.eq.s32.totalorder %s17, 0
    %p101 = por %p99, %p100
    %p102 = scmp.ne.s32.totalorder %s90, %s91
    %p103 = scmp.eq.s32.totalorder %s18, 1
    %p104 = por %p102, %p103
    %p106 = scmp.ne.s32.totalorder %s91, %s105
    %p107 = scmp.eq.s32.totalorder %s18, 0
    %p108 = por %p106, %p107
    %s110 = sadd.s32 %s109, 1
    %p113 = scmp.eq.s32.totalorder %s12, 1
    %p114 = scmp.ne.s32.totalorder %s109, %s111
    %p115 = scmp.eq.s32.totalorder %s12, 0
    %p116 = por %p114, %p115
    %p117 = scmp.ne.s32.totalorder %s109, %s111
    %p118 = scmp.eq.s32.totalorder %s17, 1
    %p119 = por %p117, %p118
    %p120 = scmp.ne.s32.totalorder %s111, %s112
    %p121 = scmp.eq.s32.totalorder %s17, 0
    %p122 = por %p120, %p121
    %p123 = scmp.ne.s32.totalorder %s111, %s112
    %p124 = scmp.eq.s32.totalorder %s18, 1
    %p125 = por %p123, %p124
    %p127 = scmp.ne.s32.totalorder %s112, %s126
    %p128 = scmp.eq.s32.totalorder %s18, 0
    %p129 = por %p127, %p128
    %s131 = sadd.s32 %s130, 1
    %p134 = scmp.eq.s32.totalorder %s12, 1
    %p135 = scmp.ne.s32.totalorder %s130, %s132
    %p136 = scmp.eq.s32.totalorder %s12, 0
    %p137 = por %p135, %p136
    %p138 = scmp.ne.s32.totalorder %s130, %s132
    %p139 = scmp.eq.s32.totalorder %s17, 1
    %p140 = por %p138, %p139
    %p141 = scmp.ne.s32.totalorder %s132, %s133
    %p142 = scmp.eq.s32.totalorder %s17, 0
    %p143 = por %p141, %p142
    %p144 = scmp.ne.s32.totalorder %s132, %s133
    %p145 = scmp.eq.s32.totalorder %s18, 1
    %p146 = por %p144, %p145
    %p148 = scmp.ne.s32.totalorder %s133, %s147
    %p149 = scmp.eq.s32.totalorder %s18, 0
    %p150 = por %p148, %p149
    %s151 = ssub.s32 %s12, %s19
    %p152 = scmp.eq.s32.totalorder %s151, 0
    %s154 = sadd.s32 %s153, 1
    %s155 = scalar_select %p152, %s153, %s154
    %p158 = pneg %p152
    %p159 = scmp.eq.s32.totalorder %s12, 1
    %p160 = por %p158, %p159
    %p161 = scmp.ne.s32.totalorder %s153, %s156
    %p162 = scmp.eq.s32.totalorder %s12, 0
    %p163 = por %p161, %p162
    %p164 = scmp.ne.s32.totalorder %s153, %s156
    %p165 = scmp.eq.s32.totalorder %s17, 1
    %p166 = por %p164, %p165
    %p167 = scmp.ne.s32.totalorder %s156, %s157
    %p168 = scmp.eq.s32.totalorder %s17, 0
    %p169 = por %p167, %p168
    %p170 = scmp.ne.s32.totalorder %s156, %s157
    %p171 = scmp.eq.s32.totalorder %s18, 1
    %p172 = por %p170, %p171
    %p174 = scmp.ne.s32.totalorder %s157, %s173
    %p175 = scmp.eq.s32.totalorder %s18, 0
    %p176 = por %p174, %p175
    %p177 = scmp.le.s32.totalorder 1, %s12
    %p178 = scmp.lt.s32.totalorder %s12, 3
    %p179 = pnand %p177, %p178
    %p180 = pneg %p179
    // Predicated region
    $region9: #{parser_forward.1} parent=5 // pred_check
      _
    $region10: #{parser_forward.1} parent=5 // pred_check_branch
      %182 = sbr.rel (%p179) target = $region12
    $region11: #{parser_forward.1} parent=5 // pred_region
      %s183 = ssub.s32 %s12, 1
      // Predicated region
      $region13: #{parser_forward.1} parent=11 // pred_check
        %p184 = pneg %p59
      $region14: #{parser_forward.1} parent=11 // pred_check_branch
        %186 = sbr.rel (%p184) target = $region16
      $region15: #{parser_forward.1} parent=11 // pred_region
        _
      $region16: #{parser_forward.1} parent=11 // pred_fallthru
        _
      // Predicated region
      $region17: #{parser_forward.1} parent=11 // pred_check
        %p187 = pneg %p80
      $region18: #{parser_forward.1} parent=11 // pred_check_branch
        %189 = sbr.rel (%p187) target = $region20
      $region19: #{parser_forward.1} parent=11 // pred_region
        _
      $region20: #{parser_forward.1} parent=11 // pred_fallthru
        _
      // Predicated region
      $region21: #{parser_forward.1} parent=11 // pred_check
        %p190 = pneg %p101
      $region22: #{parser_forward.1} parent=11 // pred_check_branch
        %192 = sbr.rel (%p190) target = $region24
      $region23: #{parser_forward.1} parent=11 // pred_region
        _
      $region24: #{parser_forward.1} parent=11 // pred_fallthru
        _
      // Predicated region
      $region25: #{parser_forward.1} parent=11 // pred_check
        %p193 = pneg %p122
      $region26: #{parser_forward.1} parent=11 // pred_check_branch
        %195 = sbr.rel (%p193) target = $region28
      $region27: #{parser_forward.1} parent=11 // pred_region
        _
      $region28: #{parser_forward.1} parent=11 // pred_fallthru
        _
      // Predicated region
      $region29: #{parser_forward.1} parent=11 // pred_check
        %p196 = pneg %p143
      $region30: #{parser_forward.1} parent=11 // pred_check_branch
        %198 = sbr.rel (%p196) target = $region32
      $region31: #{parser_forward.1} parent=11 // pred_region
        _
      $region32: #{parser_forward.1} parent=11 // pred_fallthru
        _
    $region12: #{parser_forward.1} parent=5 // pred_fallthru
      _
    %p199 = scmp.lt.s32.totalorder %s12, 2
    // Predicated region
    $region33: #{parser_forward.1} parent=5 // pred_check
      %p200 = pneg %p199
    $region34: #{parser_forward.1} parent=5 // pred_check_branch
      %202 = sbr.rel (%p200) target = $region36
    $region35: #{parser_forward.1} parent=5 // pred_region
      // Predicated region
      $region37: #{parser_forward.1} parent=35 // pred_check
        %p203 = pneg %p32
      $region38: #{parser_forward.1} parent=35 // pred_check_branch
        %205 = sbr.rel (%p203) target = $region40
      $region39: #{parser_forward.1} parent=35 // pred_region
        %s206 = smul.u32 2, %s12
        %p207 = scmp.lt.s32.totalorder %s206, 3
        %s208 = scalar_select %p207, %s206, 3
        %s209 = smul.addr %s208, 8
        %s210 = scalar_lea.vmem %s0, %s209
        %s211 = smul.u32 2, %s12
      $region40: #{parser_forward.1} parent=35 // pred_fallthru
        _
    $region36: #{parser_forward.1} parent=5 // pred_fallthru
      _
    %p212 = scmp.le.s32.totalorder 1, %s12
    %p213 = scmp.lt.s32.totalorder %s12, 3
    %p214 = pnand %p212, %p213
    %p215 = pneg %p214
    // Predicated region
    $region41: #{parser_forward.1} parent=5 // pred_check
      _
    $region42: #{parser_forward.1} parent=5 // pred_check_branch
      %217 = sbr.rel (%p214) target = $region44
    $region43: #{parser_forward.1} parent=5 // pred_region
      %s218 = ssub.s32 %s12, 1
      %s219 = smul.u32 2, %s17
      %p220 = scmp.lt.s32.totalorder %s219, 3
      %s221 = scalar_select %p220, %s219, 3
      %s222 = smul.addr %s221, 8
      %s223 = scalar_lea.vmem %s0, %s222
      %p224 = pneg %p38
      %p225 = pneg %p35
      %p226 = pneg %p59
      %p227 = pneg %p56
      %p228 = pneg %p80
      %p229 = pneg %p77
      %p230 = pneg %p101
      %p231 = pneg %p98
      %p232 = pneg %p122
      %p233 = pneg %p119
      %p234 = pneg %p143
      %p235 = pneg %p140
      %p236 = pneg %p169
      %p237 = pneg %p166
      %s238 = smul.u32 2, %s17
      %p239 = scmp.lt.s32.totalorder %s238, 3
      %s240 = scalar_select %p239, %s238, 3
      %s241 = smul.addr %s240, 4
      %s242 = scalar_lea.vmem %s6, %s241
      %s243 = smul.u32 2, %s17
      %p244 = scmp.lt.s32.totalorder %s243, 3
      %s245 = scalar_select %p244, %s243, 3
      %s246 = smul.addr %s245, 8
      %s247 = scalar_lea.vmem %s0, %s246
      %s248 = smul.u32 2, %s17
      %s249 = smul.u32 2, %s17
      %p250 = scmp.lt.s32.totalorder %s249, 3
      %s251 = scalar_select %p250, %s249, 3
      %s252 = smul.addr %s251, 4
      %s253 = scalar_lea.vmem %s6, %s252
      %s254 = smul.u32 2, %s17
      %v256 = vld [vmem:[%s1] sm:$0xf]
      %v257 = vld [vmem:[%s1 + $0x4] sm:$0xf]
      %v258 = vld [vmem:[%s1 + $0x8] sm:$0xf]
      %v259 = vld [vmem:[%s1 + $0xc] sm:$0xf]
      %v260 = vld [vmem:[%s1 + $0x10] sm:$0xf]
      %v261 = vld [vmem:[%s1 + $0x14] sm:$0xf]
      %v262 = vld [vmem:[%s1 + $0x18] sm:$0xf]
      %v263 = vld [vmem:[%s1 + $0x1c] sm:$0xf]
      %v264 = vld [vmem:[%s1 + $0x20] sm:$0xf]
      %v265 = vld [vmem:[%s1 + $0x24] sm:$0xf]
      %v266 = vld [vmem:[%s1 + $0x28] sm:$0xf]
      %v267 = vld [vmem:[%s1 + $0x2c] sm:$0xf]
      %v268 = vld [vmem:[%s1 + $0x30] sm:$0xf]
      %v269 = vld [vmem:[%s247] sm:$0xff]
      %v270 = vld [vmem:[%s247 + $0x8] sm:$0xff]
      %v271 = vlaneseq
      %v272 = vand.u32 %v271, 127
      %273 = vset.pattern.permute.xlu0 0
      %274 = vperm.xlu0 %273, %v269
      %v275 = vpop.permute.xlu0 %274
      %276 = vset.pattern.permute.xlu0 0
      %277 = vperm.xlu0 %276, %v270
      %v278 = vpop.permute.xlu0 %277
      %vm279 = vcmp.eq.s32.totalorder %v275, %v272
      %vm280 = vcmp.eq.s32.totalorder %v278, %v272
      %v281 = vsel %vm279, 1, 0
      %v282 = vsel %vm280, 1, 0
      %v283 = vcvt.s32.f32 %v281
      %v284 = vcvt.s32.f32 %v282
      %v285 = vpack.c.bf16 %v284, %v283
      %v299 = vunpack.c.l.b16 %v256
      %v300 = vunpack.c.l.b16 %v257
      %v301 = vunpack.c.l.b16 %v258
      %v302 = vunpack.c.l.b16 %v259
      %v303 = vunpack.c.l.b16 %v260
      %v304 = vunpack.c.l.b16 %v261
      %v305 = vunpack.c.l.b16 %v262
      %v306 = vunpack.c.l.b16 %v263
      %v307 = vunpack.c.l.b16 %v264
      %v308 = vunpack.c.l.b16 %v265
      %v309 = vunpack.c.l.b16 %v266
      %v310 = vunpack.c.l.b16 %v267
      %v311 = vunpack.c.l.b16 %v268
      %v312 = vpack.c.b16 %v300, %v299
      %v313 = vpack.c.b16 %v302, %v301
      %v314 = vpack.c.b16 %v304, %v303
      %v315 = vpack.c.b16 %v306, %v305
      %v316 = vpack.c.b16 %v308, %v307
      %v317 = vpack.c.b16 %v310, %v309
      %v318 = vpack.c.b16 %v311, %v311
      %vm325 = vcmask 850944
      %v327 = vsel %vm325, %v285, 0
      %vm329 = vcmask 1043456
      %v331 = vsel %vm329, %v318, 0
      %333 = vmatpush.bf16.msra.mxu0 0
      %334 = vmatpush.bf16.msra.mxu0 %v331
      %335 = vmatpush.bf16.msra.mxu0 %v317
      %336 = vmatpush.bf16.msra.mxu0 %v316
      %337 = vmatpush.bf16.msra.mxu0 %v315
      %338 = vmatpush.bf16.msra.mxu0 %v314
      %339 = vmatpush.bf16.msra.mxu0 %v313
      %340 = vmatpush.bf16.msra.mxu0 %v312
      %341 = vmatmul.bf16.gmra.mxu0 %v327
      %v342 = vpop.f32.mrf.mxu0
      %v343 = vadd.f32 0.0, %v342
      %v344 = vpop.f32.mrf.mxu0
      %v345 = vadd.f32 0.0, %v344
      %346 = vdwg.mxu0
      %v347 = vpack.c.bf16 %v343, %v343
      %v348 = vpack.c.bf16 %v345, %v345
      %vm349 = vcmask 257024
      %350 = vst.msk [vmem:[#allocation2] sm:$0xf] %vm349, %v347
      %351 = vst.msk [vmem:[#allocation2 + $0x24] sm:$0xf] %vm349, %v348
      %352 = vset.pattern.permute.xlu0 1
      %353 = vperm.xlu0 %352, %v269
      %v354 = vpop.permute.xlu0 %353
      %355 = vset.pattern.permute.xlu0 1
      %356 = vperm.xlu0 %355, %v270
      %v357 = vpop.permute.xlu0 %356
      %vm358 = vcmp.eq.s32.totalorder %v354, %v272
      %vm359 = vcmp.eq.s32.totalorder %v357, %v272
      %v360 = vsel %vm358, 1, 0
      %v361 = vsel %vm359, 1, 0
      %v362 = vcvt.s32.f32 %v360
      %v363 = vcvt.s32.f32 %v361
      %v364 = vpack.c.bf16 %v363, %v362
      %v366 = vsel %vm325, %v364, 0
      %368 = vmatpush.bf16.msra.mxu0 0
      %369 = vmatpush.bf16.msra.mxu0 %v331
      %370 = vmatpush.bf16.msra.mxu0 %v317
      %371 = vmatpush.bf16.msra.mxu0 %v316
      %372 = vmatpush.bf16.msra.mxu0 %v315
      %373 = vmatpush.bf16.msra.mxu0 %v314
      %374 = vmatpush.bf16.msra.mxu0 %v313
      %375 = vmatpush.bf16.msra.mxu0 %v312
      %376 = vmatmul.bf16.gmra.mxu0 %v366
      %v377 = vpop.f32.mrf.mxu0
      %v378 = vadd.f32 0.0, %v377
      %v379 = vpop.f32.mrf.mxu0
      %v380 = vadd.f32 0.0, %v379
      %381 = vdwg.mxu0
      %v382 = vpack.c.bf16 %v378, %v378
      %v383 = vpack.c.bf16 %v380, %v380
      %386 = vrot.lane.b32.xlu0 %v382, 32
      %v387 = vpop.permute.xlu0 %386
      %388 = vrot.lane.b32.xlu0 %v383, 32
      %v389 = vpop.permute.xlu0 %388
      %vm392 = vcmask 519424
      %393 = vst.msk [vmem:[#allocation2] sm:$0xf] %vm392, %v387
      %394 = vst.msk [vmem:[#allocation2 + $0x24] sm:$0xf] %vm392, %v389
      %395 = vset.pattern.permute.xlu0 2
      %396 = vperm.xlu0 %395, %v269
      %v397 = vpop.permute.xlu0 %396
      %398 = vset.pattern.permute.xlu0 2
      %399 = vperm.xlu0 %398, %v270
      %v400 = vpop.permute.xlu0 %399
      %vm401 = vcmp.eq.s32.totalorder %v397, %v272
      %vm402 = vcmp.eq.s32.totalorder %v400, %v272
      %v403 = vsel %vm401, 1, 0
      %v404 = vsel %vm402, 1, 0
      %v405 = vcvt.s32.f32 %v403
      %v406 = vcvt.s32.f32 %v404
      %v407 = vpack.c.bf16 %v406, %v405
      %v409 = vsel %vm325, %v407, 0
      %411 = vmatpush.bf16.msra.mxu0 0
      %412 = vmatpush.bf16.msra.mxu0 %v331
      %413 = vmatpush.bf16.msra.mxu0 %v317
      %414 = vmatpush.bf16.msra.mxu0 %v316
      %415 = vmatpush.bf16.msra.mxu0 %v315
      %416 = vmatpush.bf16.msra.mxu0 %v314
      %417 = vmatpush.bf16.msra.mxu0 %v313
      %418 = vmatpush.bf16.msra.mxu0 %v312
      %419 = vmatmul.bf16.gmra.mxu0 %v409
      %v420 = vpop.f32.mrf.mxu0
      %v421 = vadd.f32 0.0, %v420
      %v422 = vpop.f32.mrf.mxu0
      %v423 = vadd.f32 0.0, %v422
      %424 = vdwg.mxu0
      %v425 = vpack.c.bf16 %v421, %v421
      %v426 = vpack.c.bf16 %v423, %v423
      %429 = vrot.lane.b32.xlu0 %v425, 64
      %v430 = vpop.permute.xlu0 %429
      %431 = vrot.lane.b32.xlu0 %v426, 64
      %v432 = vpop.permute.xlu0 %431
      %vm435 = vcmask 781824
      %436 = vst.msk [vmem:[#allocation2] sm:$0xf] %vm435, %v430
      %437 = vst.msk [vmem:[#allocation2 + $0x24] sm:$0xf] %vm435, %v432
      %438 = vset.pattern.permute.xlu0 3
      %439 = vperm.xlu0 %438, %v269
      %v440 = vpop.permute.xlu0 %439
      %441 = vset.pattern.permute.xlu0 3
      %442 = vperm.xlu0 %441, %v270
      %v443 = vpop.permute.xlu0 %442
      %vm444 = vcmp.eq.s32.totalorder %v440, %v272
      %vm445 = vcmp.eq.s32.totalorder %v443, %v272
      %v446 = vsel %vm444, 1, 0
      %v447 = vsel %vm445, 1, 0
      %v448 = vcvt.s32.f32 %v446
      %v449 = vcvt.s32.f32 %v447
      %v450 = vpack.c.bf16 %v449, %v448
      %v452 = vsel %vm325, %v450, 0
      %454 = vmatpush.bf16.msra.mxu0 0
      %455 = vmatpush.bf16.msra.mxu0 %v331
      %456 = vmatpush.bf16.msra.mxu0 %v317
      %457 = vmatpush.bf16.msra.mxu0 %v316
      %458 = vmatpush.bf16.msra.mxu0 %v315
      %459 = vmatpush.bf16.msra.mxu0 %v314
      %460 = vmatpush.bf16.msra.mxu0 %v313
      %461 = vmatpush.bf16.msra.mxu0 %v312
      %462 = vmatmul.bf16.gmra.mxu0 %v452
      %v463 = vpop.f32.mrf.mxu0
      %v464 = vadd.f32 0.0, %v463
      %v465 = vpop.f32.mrf.mxu0
      %v466 = vadd.f32 0.0, %v465
      %467 = vdwg.mxu0
      %v468 = vpack.c.bf16 %v464, %v464
      %v469 = vpack.c.bf16 %v466, %v466
      %472 = vrot.lane.b32.xlu0 %v468, 96
      %v473 = vpop.permute.xlu0 %472
      %474 = vrot.lane.b32.xlu0 %v469, 96
      %v475 = vpop.permute.xlu0 %474
      %vm478 = vcmask 1044224
      %479 = vst.msk [vmem:[#allocation2] sm:$0xf] %vm478, %v473
      %480 = vst.msk [vmem:[#allocation2 + $0x24] sm:$0xf] %vm478, %v475
      %481 = vset.pattern.permute.xlu0 4
      %482 = vperm.xlu0 %481, %v269
      %v483 = vpop.permute.xlu0 %482
      %484 = vset.pattern.permute.xlu0 4
      %485 = vperm.xlu0 %484, %v270
      %v486 = vpop.permute.xlu0 %485
      %vm487 = vcmp.eq.s32.totalorder %v483, %v272
      %vm488 = vcmp.eq.s32.totalorder %v486, %v272
      %v489 = vsel %vm487, 1, 0
      %v490 = vsel %vm488, 1, 0
      %v491 = vcvt.s32.f32 %v489
      %v492 = vcvt.s32.f32 %v490
      %v493 = vpack.c.bf16 %v492, %v491
      %v495 = vsel %vm325, %v493, 0
      %497 = vmatpush.bf16.msra.mxu0 0
      %498 = vmatpush.bf16.msra.mxu0 %v331
      %499 = vmatpush.bf16.msra.mxu0 %v317
      %500 = vmatpush.bf16.msra.mxu0 %v316
      %501 = vmatpush.bf16.msra.mxu0 %v315
      %502 = vmatpush.bf16.msra.mxu0 %v314
      %503 = vmatpush.bf16.msra.mxu0 %v313
      %504 = vmatpush.bf16.msra.mxu0 %v312
      %505 = vmatmul.bf16.gmra.mxu0 %v495
      %v506 = vpop.f32.mrf.mxu0
      %v507 = vadd.f32 0.0, %v506
      %v508 = vpop.f32.mrf.mxu0
      %v509 = vadd.f32 0.0, %v508
      %510 = vdwg.mxu0
      %v511 = vpack.c.bf16 %v507, %v507
      %v512 = vpack.c.bf16 %v509, %v509
      %513 = vst.msk [vmem:[#allocation2 + $0x4] sm:$0xf] %vm349, %v511
      %514 = vst.msk [vmem:[#allocation2 + $0x28] sm:$0xf] %vm349, %v512
      %515 = vset.pattern.permute.xlu0 5
      %516 = vperm.xlu0 %515, %v269
      %v517 = vpop.permute.xlu0 %516
      %518 = vset.pattern.permute.xlu0 5
      %519 = vperm.xlu0 %518, %v270
      %v520 = vpop.permute.xlu0 %519
      %vm521 = vcmp.eq.s32.totalorder %v517, %v272
      %vm522 = vcmp.eq.s32.totalorder %v520, %v272
      %v523 = vsel %vm521, 1, 0
      %v524 = vsel %vm522, 1, 0
      %v525 = vcvt.s32.f32 %v523
      %v526 = vcvt.s32.f32 %v524
      %v527 = vpack.c.bf16 %v526, %v525
      %v529 = vsel %vm325, %v527, 0
      %531 = vmatpush.bf16.msra.mxu0 0
      %532 = vmatpush.bf16.msra.mxu0 %v331
      %533 = vmatpush.bf16.msra.mxu0 %v317
      %534 = vmatpush.bf16.msra.mxu0 %v316
      %535 = vmatpush.bf16.msra.mxu0 %v315
      %536 = vmatpush.bf16.msra.mxu0 %v314
      %537 = vmatpush.bf16.msra.mxu0 %v313
      %538 = vmatpush.bf16.msra.mxu0 %v312
      %539 = vmatmul.bf16.gmra.mxu0 %v529
      %v540 = vpop.f32.mrf.mxu0
      %v541 = vadd.f32 0.0, %v540
      %v542 = vpop.f32.mrf.mxu0
      %v543 = vadd.f32 0.0, %v542
      %544 = vdwg.mxu0
      %v545 = vpack.c.bf16 %v541, %v541
      %v546 = vpack.c.bf16 %v543, %v543
      %549 = vrot.lane.b32.xlu0 %v545, 32
      %v550 = vpop.permute.xlu0 %549
      %551 = vrot.lane.b32.xlu0 %v546, 32
      %v552 = vpop.permute.xlu0 %551
      %555 = vst.msk [vmem:[#allocation2 + $0x4] sm:$0xf] %vm392, %v550
      %556 = vst.msk [vmem:[#allocation2 + $0x28] sm:$0xf] %vm392, %v552
      %557 = vset.pattern.permute.xlu0 6
      %558 = vperm.xlu0 %557, %v269
      %v559 = vpop.permute.xlu0 %558
      %560 = vset.pattern.permute.xlu0 6
      %561 = vperm.xlu0 %560, %v270
      %v562 = vpop.permute.xlu0 %561
      %vm563 = vcmp.eq.s32.totalorder %v559, %v272
      %vm564 = vcmp.eq.s32.totalorder %v562, %v272
      %v565 = vsel %vm563, 1, 0
      %v566 = vsel %vm564, 1, 0
      %v567 = vcvt.s32.f32 %v565
      %v568 = vcvt.s32.f32 %v566
      %v569 = vpack.c.bf16 %v568, %v567
      %v571 = vsel %vm325, %v569, 0
      %573 = vmatpush.bf16.msra.mxu0 0
      %574 = vmatpush.bf16.msra.mxu0 %v331
      %575 = vmatpush.bf16.msra.mxu0 %v317
      %576 = vmatpush.bf16.msra.mxu0 %v316
      %577 = vmatpush.bf16.msra.mxu0 %v315
      %578 = vmatpush.bf16.msra.mxu0 %v314
      %579 = vmatpush.bf16.msra.mxu0 %v313
      %580 = vmatpush.bf16.msra.mxu0 %v312
      %581 = vmatmul.bf16.gmra.mxu0 %v571
      %v582 = vpop.f32.mrf.mxu0
      %v583 = vadd.f32 0.0, %v582
      %v584 = vpop.f32.mrf.mxu0
      %v585 = vadd.f32 0.0, %v584
      %586 = vdwg.mxu0
      %v587 = vpack.c.bf16 %v583, %v583
      %v588 = vpack.c.bf16 %v585, %v585
      %591 = vrot.lane.b32.xlu0 %v587, 64
      %v592 = vpop.permute.xlu0 %591
      %593 = vrot.lane.b32.xlu0 %v588, 64
      %v594 = vpop.permute.xlu0 %593
      %597 = vst.msk [vmem:[#allocation2 + $0x4] sm:$0xf] %vm435, %v592
      %598 = vst.msk [vmem:[#allocation2 + $0x28] sm:$0xf] %vm435, %v594
      %599 = vset.pattern.permute.xlu0 7
      %600 = vperm.xlu0 %599, %v269
      %v601 = vpop.permute.xlu0 %600
      %602 = vset.pattern.permute.xlu0 7
      %603 = vperm.xlu0 %602, %v270
      %v604 = vpop.permute.xlu0 %603
      %vm605 = vcmp.eq.s32.totalorder %v601, %v272
      %vm606 = vcmp.eq.s32.totalorder %v604, %v272
      %v607 = vsel %vm605, 1, 0
      %v608 = vsel %vm606, 1, 0
      %v609 = vcvt.s32.f32 %v607
      %v610 = vcvt.s32.f32 %v608
      %v611 = vpack.c.bf16 %v610, %v609
      %v613 = vsel %vm325, %v611, 0
      %615 = vmatpush.bf16.msra.mxu0 0
      %616 = vmatpush.bf16.msra.mxu0 %v331
      %617 = vmatpush.bf16.msra.mxu0 %v317
      %618 = vmatpush.bf16.msra.mxu0 %v316
      %619 = vmatpush.bf16.msra.mxu0 %v315
      %620 = vmatpush.bf16.msra.mxu0 %v314
      %621 = vmatpush.bf16.msra.mxu0 %v313
      %622 = vmatpush.bf16.msra.mxu0 %v312
      %623 = vmatmul.bf16.gmra.mxu0 %v613
      %v624 = vpop.f32.mrf.mxu0
      %v625 = vadd.f32 0.0, %v624
      %v626 = vpop.f32.mrf.mxu0
      %v627 = vadd.f32 0.0, %v626
      %628 = vdwg.mxu0
      %v629 = vpack.c.bf16 %v625, %v625
      %v630 = vpack.c.bf16 %v627, %v627
      %633 = vrot.lane.b32.xlu0 %v629, 96
      %v634 = vpop.permute.xlu0 %633
      %635 = vrot.lane.b32.xlu0 %v630, 96
      %v636 = vpop.permute.xlu0 %635
      %639 = vst.msk [vmem:[#allocation2 + $0x4] sm:$0xf] %vm478, %v634
      %640 = vst.msk [vmem:[#allocation2 + $0x28] sm:$0xf] %vm478, %v636
      %641 = vset.pattern.permute.xlu0 8
      %642 = vperm.xlu0 %641, %v269
      %v643 = vpop.permute.xlu0 %642
      %644 = vset.pattern.permute.xlu0 8
      %645 = vperm.xlu0 %644, %v270
      %v646 = vpop.permute.xlu0 %645
      %vm647 = vcmp.eq.s32.totalorder %v643, %v272
      %vm648 = vcmp.eq.s32.totalorder %v646, %v272
      %v649 = vsel %vm647, 1, 0
      %v650 = vsel %vm648, 1, 0
      %v651 = vcvt.s32.f32 %v649
      %v652 = vcvt.s32.f32 %v650
      %v653 = vpack.c.bf16 %v652, %v651
      %v655 = vsel %vm325, %v653, 0
      %657 = vmatpush.bf16.msra.mxu0 0
      %658 = vmatpush.bf16.msra.mxu0 %v331
      %659 = vmatpush.bf16.msra.mxu0 %v317
      %660 = vmatpush.bf16.msra.mxu0 %v316
      %661 = vmatpush.bf16.msra.mxu0 %v315
      %662 = vmatpush.bf16.msra.mxu0 %v314
      %663 = vmatpush.bf16.msra.mxu0 %v313
      %664 = vmatpush.bf16.msra.mxu0 %v312
      %665 = vmatmul.bf16.gmra.mxu0 %v655
      %v666 = vpop.f32.mrf.mxu0
      %v667 = vadd.f32 0.0, %v666
      %v668 = vpop.f32.mrf.mxu0
      %v669 = vadd.f32 0.0, %v668
      %670 = vdwg.mxu0
      %v671 = vpack.c.bf16 %v667, %v667
      %v672 = vpack.c.bf16 %v669, %v669
      %673 = vst.msk [vmem:[#allocation2 + $0x8] sm:$0xf] %vm349, %v671
      %674 = vst.msk [vmem:[#allocation2 + $0x2c] sm:$0xf] %vm349, %v672
      %675 = vset.pattern.permute.xlu0 9
      %676 = vperm.xlu0 %675, %v269
      %v677 = vpop.permute.xlu0 %676
      %678 = vset.pattern.permute.xlu0 9
      %679 = vperm.xlu0 %678, %v270
      %v680 = vpop.permute.xlu0 %679
      %vm681 = vcmp.eq.s32.totalorder %v677, %v272
      %vm682 = vcmp.eq.s32.totalorder %v680, %v272
      %v683 = vsel %vm681, 1, 0
      %v684 = vsel %vm682, 1, 0
      %v685 = vcvt.s32.f32 %v683
      %v686 = vcvt.s32.f32 %v684
      %v687 = vpack.c.bf16 %v686, %v685
      %v689 = vsel %vm325, %v687, 0
      %691 = vmatpush.bf16.msra.mxu0 0
      %692 = vmatpush.bf16.msra.mxu0 %v331
      %693 = vmatpush.bf16.msra.mxu0 %v317
      %694 = vmatpush.bf16.msra.mxu0 %v316
      %695 = vmatpush.bf16.msra.mxu0 %v315
      %696 = vmatpush.bf16.msra.mxu0 %v314
      %697 = vmatpush.bf16.msra.mxu0 %v313
      %698 = vmatpush.bf16.msra.mxu0 %v312
      %699 = vmatmul.bf16.gmra.mxu0 %v689
      %v700 = vpop.f32.mrf.mxu0
      %v701 = vadd.f32 0.0, %v700
      %v702 = vpop.f32.mrf.mxu0
      %v703 = vadd.f32 0.0, %v702
      %704 = vdwg.mxu0
      %v705 = vpack.c.bf16 %v701, %v701
      %v706 = vpack.c.bf16 %v703, %v703
      %709 = vrot.lane.b32.xlu0 %v705, 32
      %v710 = vpop.permute.xlu0 %709
      %711 = vrot.lane.b32.xlu0 %v706, 32
      %v712 = vpop.permute.xlu0 %711
      %715 = vst.msk [vmem:[#allocation2 + $0x8] sm:$0xf] %vm392, %v710
      %716 = vst.msk [vmem:[#allocation2 + $0x2c] sm:$0xf] %vm392, %v712
      %717 = vset.pattern.permute.xlu0 10
      %718 = vperm.xlu0 %717, %v269
      %v719 = vpop.permute.xlu0 %718
      %720 = vset.pattern.permute.xlu0 10
      %721 = vperm.xlu0 %720, %v270
      %v722 = vpop.permute.xlu0 %721
      %vm723 = vcmp.eq.s32.totalorder %v719, %v272
      %vm724 = vcmp.eq.s32.totalorder %v722, %v272
      %v725 = vsel %vm723, 1, 0
      %v726 = vsel %vm724, 1, 0
      %v727 = vcvt.s32.f32 %v725
      %v728 = vcvt.s32.f32 %v726
      %v729 = vpack.c.bf16 %v728, %v727
      %v731 = vsel %vm325, %v729, 0
      %733 = vmatpush.bf16.msra.mxu0 0
      %734 = vmatpush.bf16.msra.mxu0 %v331
      %735 = vmatpush.bf16.msra.mxu0 %v317
      %736 = vmatpush.bf16.msra.mxu0 %v316
      %737 = vmatpush.bf16.msra.mxu0 %v315
      %738 = vmatpush.bf16.msra.mxu0 %v314
      %739 = vmatpush.bf16.msra.mxu0 %v313
      %740 = vmatpush.bf16.msra.mxu0 %v312
      %741 = vmatmul.bf16.gmra.mxu0 %v731
      %v742 = vpop.f32.mrf.mxu0
      %v743 = vadd.f32 0.0, %v742
      %v744 = vpop.f32.mrf.mxu0
      %v745 = vadd.f32 0.0, %v744
      %746 = vdwg.mxu0
      %v747 = vpack.c.bf16 %v743, %v743
      %v748 = vpack.c.bf16 %v745, %v745
      %751 = vrot.lane.b32.xlu0 %v747, 64
      %v752 = vpop.permute.xlu0 %751
      %753 = vrot.lane.b32.xlu0 %v748, 64
      %v754 = vpop.permute.xlu0 %753
      %757 = vst.msk [vmem:[#allocation2 + $0x8] sm:$0xf] %vm435, %v752
      %758 = vst.msk [vmem:[#allocation2 + $0x2c] sm:$0xf] %vm435, %v754
      %759 = vset.pattern.permute.xlu0 11
      %760 = vperm.xlu0 %759, %v269
      %v761 = vpop.permute.xlu0 %760
      %762 = vset.pattern.permute.xlu0 11
      %763 = vperm.xlu0 %762, %v270
      %v764 = vpop.permute.xlu0 %763
      %vm765 = vcmp.eq.s32.totalorder %v761, %v272
      %vm766 = vcmp.eq.s32.totalorder %v764, %v272
      %v767 = vsel %vm765, 1, 0
      %v768 = vsel %vm766, 1, 0
      %v769 = vcvt.s32.f32 %v767
      %v770 = vcvt.s32.f32 %v768
      %v771 = vpack.c.bf16 %v770, %v769
      %v773 = vsel %vm325, %v771, 0
      %775 = vmatpush.bf16.msra.mxu0 0
      %776 = vmatpush.bf16.msra.mxu0 %v331
      %777 = vmatpush.bf16.msra.mxu0 %v317
      %778 = vmatpush.bf16.msra.mxu0 %v316
      %779 = vmatpush.bf16.msra.mxu0 %v315
      %780 = vmatpush.bf16.msra.mxu0 %v314
      %781 = vmatpush.bf16.msra.mxu0 %v313
      %782 = vmatpush.bf16.msra.mxu0 %v312
      %783 = vmatmul.bf16.gmra.mxu0 %v773
      %v784 = vpop.f32.mrf.mxu0
      %v785 = vadd.f32 0.0, %v784
      %v786 = vpop.f32.mrf.mxu0
      %v787 = vadd.f32 0.0, %v786
      %788 = vdwg.mxu0
      %v789 = vpack.c.bf16 %v785, %v785
      %v790 = vpack.c.bf16 %v787, %v787
      %793 = vrot.lane.b32.xlu0 %v789, 96
      %v794 = vpop.permute.xlu0 %793
      %795 = vrot.lane.b32.xlu0 %v790, 96
      %v796 = vpop.permute.xlu0 %795
      %799 = vst.msk [vmem:[#allocation2 + $0x8] sm:$0xf] %vm478, %v794
      %800 = vst.msk [vmem:[#allocation2 + $0x2c] sm:$0xf] %vm478, %v796
      %801 = vset.pattern.permute.xlu0 12
      %802 = vperm.xlu0 %801, %v269
      %v803 = vpop.permute.xlu0 %802
      %804 = vset.pattern.permute.xlu0 12
      %805 = vperm.xlu0 %804, %v270
      %v806 = vpop.permute.xlu0 %805
      %vm807 = vcmp.eq.s32.totalorder %v803, %v272
      %vm808 = vcmp.eq.s32.totalorder %v806, %v272
      %v809 = vsel %vm807, 1, 0
      %v810 = vsel %vm808, 1, 0
      %v811 = vcvt.s32.f32 %v809
      %v812 = vcvt.s32.f32 %v810
      %v813 = vpack.c.bf16 %v812, %v811
      %v815 = vsel %vm325, %v813, 0
      %817 = vmatpush.bf16.msra.mxu0 0
      %818 = vmatpush.bf16.msra.mxu0 %v331
      %819 = vmatpush.bf16.msra.mxu0 %v317
      %820 = vmatpush.bf16.msra.mxu0 %v316
      %821 = vmatpush.bf16.msra.mxu0 %v315
      %822 = vmatpush.bf16.msra.mxu0 %v314
      %823 = vmatpush.bf16.msra.mxu0 %v313
      %824 = vmatpush.bf16.msra.mxu0 %v312
      %825 = vmatmul.bf16.gmra.mxu0 %v815
      %v826 = vpop.f32.mrf.mxu0
      %v827 = vadd.f32 0.0, %v826
      %v828 = vpop.f32.mrf.mxu0
      %v829 = vadd.f32 0.0, %v828
      %830 = vdwg.mxu0
      %v831 = vpack.c.bf16 %v827, %v827
      %v832 = vpack.c.bf16 %v829, %v829
      %833 = vst.msk [vmem:[#allocation2 + $0xc] sm:$0xf] %vm349, %v831
      %834 = vst.msk [vmem:[#allocation2 + $0x30] sm:$0xf] %vm349, %v832
      %835 = vset.pattern.permute.xlu0 13
      %836 = vperm.xlu0 %835, %v269
      %v837 = vpop.permute.xlu0 %836
      %838 = vset.pattern.permute.xlu0 13
      %839 = vperm.xlu0 %838, %v270
      %v840 = vpop.permute.xlu0 %839
      %vm841 = vcmp.eq.s32.totalorder %v837, %v272
      %vm842 = vcmp.eq.s32.totalorder %v840, %v272
      %v843 = vsel %vm841, 1, 0
      %v844 = vsel %vm842, 1, 0
      %v845 = vcvt.s32.f32 %v843
      %v846 = vcvt.s32.f32 %v844
      %v847 = vpack.c.bf16 %v846, %v845
      %v849 = vsel %vm325, %v847, 0
      %851 = vmatpush.bf16.msra.mxu0 0
      %852 = vmatpush.bf16.msra.mxu0 %v331
      %853 = vmatpush.bf16.msra.mxu0 %v317
      %854 = vmatpush.bf16.msra.mxu0 %v316
      %855 = vmatpush.bf16.msra.mxu0 %v315
      %856 = vmatpush.bf16.msra.mxu0 %v314
      %857 = vmatpush.bf16.msra.mxu0 %v313
      %858 = vmatpush.bf16.msra.mxu0 %v312
      %859 = vmatmul.bf16.gmra.mxu0 %v849
      %v860 = vpop.f32.mrf.mxu0
      %v861 = vadd.f32 0.0, %v860
      %v862 = vpop.f32.mrf.mxu0
      %v863 = vadd.f32 0.0, %v862
      %864 = vdwg.mxu0
      %v865 = vpack.c.bf16 %v861, %v861
      %v866 = vpack.c.bf16 %v863, %v863
      %869 = vrot.lane.b32.xlu0 %v865, 32
      %v870 = vpop.permute.xlu0 %869
      %871 = vrot.lane.b32.xlu0 %v866, 32
      %v872 = vpop.permute.xlu0 %871
      %875 = vst.msk [vmem:[#allocation2 + $0xc] sm:$0xf] %vm392, %v870
      %876 = vst.msk [vmem:[#allocation2 + $0x30] sm:$0xf] %vm392, %v872
      %877 = vset.pattern.permute.xlu0 14
      %878 = vperm.xlu0 %877, %v269
      %v879 = vpop.permute.xlu0 %878
      %880 = vset.pattern.permute.xlu0 14
      %881 = vperm.xlu0 %880, %v270
      %v882 = vpop.permute.xlu0 %881
      %vm883 = vcmp.eq.s32.totalorder %v879, %v272
      %vm884 = vcmp.eq.s32.totalorder %v882, %v272
      %v885 = vsel %vm883, 1, 0
      %v886 = vsel %vm884, 1, 0
      %v887 = vcvt.s32.f32 %v885
      %v888 = vcvt.s32.f32 %v886
      %v889 = vpack.c.bf16 %v888, %v887
      %v891 = vsel %vm325, %v889, 0
      %893 = vmatpush.bf16.msra.mxu0 0
      %894 = vmatpush.bf16.msra.mxu0 %v331
      %895 = vmatpush.bf16.msra.mxu0 %v317
      %896 = vmatpush.bf16.msra.mxu0 %v316
      %897 = vmatpush.bf16.msra.mxu0 %v315
      %898 = vmatpush.bf16.msra.mxu0 %v314
      %899 = vmatpush.bf16.msra.mxu0 %v313
      %900 = vmatpush.bf16.msra.mxu0 %v312
      %901 = vmatmul.bf16.gmra.mxu0 %v891
      %v902 = vpop.f32.mrf.mxu0
      %v903 = vadd.f32 0.0, %v902
      %v904 = vpop.f32.mrf.mxu0
      %v905 = vadd.f32 0.0, %v904
      %906 = vdwg.mxu0
      %v907 = vpack.c.bf16 %v903, %v903
      %v908 = vpack.c.bf16 %v905, %v905
      %911 = vrot.lane.b32.xlu0 %v907, 64
      %v912 = vpop.permute.xlu0 %911
      %913 = vrot.lane.b32.xlu0 %v908, 64
      %v914 = vpop.permute.xlu0 %913
      %917 = vst.msk [vmem:[#allocation2 + $0xc] sm:$0xf] %vm435, %v912
      %918 = vst.msk [vmem:[#allocation2 + $0x30] sm:$0xf] %vm435, %v914
      %919 = vset.pattern.permute.xlu0 15
      %920 = vperm.xlu0 %919, %v269
      %v921 = vpop.permute.xlu0 %920
      %922 = vset.pattern.permute.xlu0 15
      %923 = vperm.xlu0 %922, %v270
      %v924 = vpop.permute.xlu0 %923
      %vm925 = vcmp.eq.s32.totalorder %v921, %v272
      %vm926 = vcmp.eq.s32.totalorder %v924, %v272
      %v927 = vsel %vm925, 1, 0
      %v928 = vsel %vm926, 1, 0
      %v929 = vcvt.s32.f32 %v927
      %v930 = vcvt.s32.f32 %v928
      %v931 = vpack.c.bf16 %v930, %v929
      %v933 = vsel %vm325, %v931, 0
      %935 = vmatpush.bf16.msra.mxu0 0
      %936 = vmatpush.bf16.msra.mxu0 %v331
      %937 = vmatpush.bf16.msra.mxu0 %v317
      %938 = vmatpush.bf16.msra.mxu0 %v316
      %939 = vmatpush.bf16.msra.mxu0 %v315
      %940 = vmatpush.bf16.msra.mxu0 %v314
      %941 = vmatpush.bf16.msra.mxu0 %v313
      %942 = vmatpush.bf16.msra.mxu0 %v312
      %943 = vmatmul.bf16.gmra.mxu0 %v933
      %v944 = vpop.f32.mrf.mxu0
      %v945 = vadd.f32 0.0, %v944
      %v946 = vpop.f32.mrf.mxu0
      %v947 = vadd.f32 0.0, %v946
      %948 = vdwg.mxu0
      %v949 = vpack.c.bf16 %v945, %v945
      %v950 = vpack.c.bf16 %v947, %v947
      %953 = vrot.lane.b32.xlu0 %v949, 96
      %v954 = vpop.permute.xlu0 %953
      %955 = vrot.lane.b32.xlu0 %v950, 96
      %v956 = vpop.permute.xlu0 %955
      %959 = vst.msk [vmem:[#allocation2 + $0xc] sm:$0xf] %vm478, %v954
      %960 = vst.msk [vmem:[#allocation2 + $0x30] sm:$0xf] %vm478, %v956
      %961 = vset.pattern.permute.xlu0 16
      %962 = vperm.xlu0 %961, %v269
      %v963 = vpop.permute.xlu0 %962
      %964 = vset.pattern.permute.xlu0 16
      %965 = vperm.xlu0 %964, %v270
      %v966 = vpop.permute.xlu0 %965
      %vm967 = vcmp.eq.s32.totalorder %v963, %v272
      %vm968 = vcmp.eq.s32.totalorder %v966, %v272
      %v969 = vsel %vm967, 1, 0
      %v970 = vsel %vm968, 1, 0
      %v971 = vcvt.s32.f32 %v969
      %v972 = vcvt.s32.f32 %v970
      %v973 = vpack.c.bf16 %v972, %v971
      %v975 = vsel %vm325, %v973, 0
      %977 = vmatpush.bf16.msra.mxu0 0
      %978 = vmatpush.bf16.msra.mxu0 %v331
      %979 = vmatpush.bf16.msra.mxu0 %v317
      %980 = vmatpush.bf16.msra.mxu0 %v316
      %981 = vmatpush.bf16.msra.mxu0 %v315
      %982 = vmatpush.bf16.msra.mxu0 %v314
      %983 = vmatpush.bf16.msra.mxu0 %v313
      %984 = vmatpush.bf16.msra.mxu0 %v312
      %985 = vmatmul.bf16.gmra.mxu0 %v975
      %v986 = vpop.f32.mrf.mxu0
      %v987 = vadd.f32 0.0, %v986
      %v988 = vpop.f32.mrf.mxu0
      %v989 = vadd.f32 0.0, %v988
      %990 = vdwg.mxu0
      %v991 = vpack.c.bf16 %v987, %v987
      %v992 = vpack.c.bf16 %v989, %v989
      %993 = vst.msk [vmem:[#allocation2 + $0x10] sm:$0xf] %vm349, %v991
      %994 = vst.msk [vmem:[#allocation2 + $0x34] sm:$0xf] %vm349, %v992
      %995 = vset.pattern.permute.xlu0 17
      %996 = vperm.xlu0 %995, %v269
      %v997 = vpop.permute.xlu0 %996
      %998 = vset.pattern.permute.xlu0 17
      %999 = vperm.xlu0 %998, %v270
      %v1000 = vpop.permute.xlu0 %999
      %vm1001 = vcmp.eq.s32.totalorder %v997, %v272
      %vm1002 = vcmp.eq.s32.totalorder %v1000, %v272
      %v1003 = vsel %vm1001, 1, 0
      %v1004 = vsel %vm1002, 1, 0
      %v1005 = vcvt.s32.f32 %v1003
      %v1006 = vcvt.s32.f32 %v1004
      %v1007 = vpack.c.bf16 %v1006, %v1005
      %v1009 = vsel %vm325, %v1007, 0
      %1011 = vmatpush.bf16.msra.mxu0 0
      %1012 = vmatpush.bf16.msra.mxu0 %v331
      %1013 = vmatpush.bf16.msra.mxu0 %v317
      %1014 = vmatpush.bf16.msra.mxu0 %v316
      %1015 = vmatpush.bf16.msra.mxu0 %v315
      %1016 = vmatpush.bf16.msra.mxu0 %v314
      %1017 = vmatpush.bf16.msra.mxu0 %v313
      %1018 = vmatpush.bf16.msra.mxu0 %v312
      %1019 = vmatmul.bf16.gmra.mxu0 %v1009
      %v1020 = vpop.f32.mrf.mxu0
      %v1021 = vadd.f32 0.0, %v1020
      %v1022 = vpop.f32.mrf.mxu0
      %v1023 = vadd.f32 0.0, %v1022
      %1024 = vdwg.mxu0
      %v1025 = vpack.c.bf16 %v1021, %v1021
      %v1026 = vpack.c.bf16 %v1023, %v1023
      %1029 = vrot.lane.b32.xlu0 %v1025, 32
      %v1030 = vpop.permute.xlu0 %1029
      %1031 = vrot.lane.b32.xlu0 %v1026, 32
      %v1032 = vpop.permute.xlu0 %1031
      %1035 = vst.msk [vmem:[#allocation2 + $0x10] sm:$0xf] %vm392, %v1030
      %1036 = vst.msk [vmem:[#allocation2 + $0x34] sm:$0xf] %vm392, %v1032
      %1037 = vset.pattern.permute.xlu0 18
      %1038 = vperm.xlu0 %1037, %v269
      %v1039 = vpop.permute.xlu0 %1038
      %1040 = vset.pattern.permute.xlu0 18
      %1041 = vperm.xlu0 %1040, %v270
      %v1042 = vpop.permute.xlu0 %1041
      %vm1043 = vcmp.eq.s32.totalorder %v1039, %v272
      %vm1044 = vcmp.eq.s32.totalorder %v1042, %v272
      %v1045 = vsel %vm1043, 1, 0
      %v1046 = vsel %vm1044, 1, 0
      %v1047 = vcvt.s32.f32 %v1045
      %v1048 = vcvt.s32.f32 %v1046
      %v1049 = vpack.c.bf16 %v1048, %v1047
      %v1051 = vsel %vm325, %v1049, 0
      %1053 = vmatpush.bf16.msra.mxu0 0
      %1054 = vmatpush.bf16.msra.mxu0 %v331
      %1055 = vmatpush.bf16.msra.mxu0 %v317
      %1056 = vmatpush.bf16.msra.mxu0 %v316
      %1057 = vmatpush.bf16.msra.mxu0 %v315
      %1058 = vmatpush.bf16.msra.mxu0 %v314
      %1059 = vmatpush.bf16.msra.mxu0 %v313
      %1060 = vmatpush.bf16.msra.mxu0 %v312
      %1061 = vmatmul.bf16.gmra.mxu0 %v1051
      %v1062 = vpop.f32.mrf.mxu0
      %v1063 = vadd.f32 0.0, %v1062
      %v1064 = vpop.f32.mrf.mxu0
      %v1065 = vadd.f32 0.0, %v1064
      %1066 = vdwg.mxu0
      %v1067 = vpack.c.bf16 %v1063, %v1063
      %v1068 = vpack.c.bf16 %v1065, %v1065
      %1071 = vrot.lane.b32.xlu0 %v1067, 64
      %v1072 = vpop.permute.xlu0 %1071
      %1073 = vrot.lane.b32.xlu0 %v1068, 64
      %v1074 = vpop.permute.xlu0 %1073
      %1077 = vst.msk [vmem:[#allocation2 + $0x10] sm:$0xf] %vm435, %v1072
      %1078 = vst.msk [vmem:[#allocation2 + $0x34] sm:$0xf] %vm435, %v1074
      %1079 = vset.pattern.permute.xlu0 19
      %1080 = vperm.xlu0 %1079, %v269
      %v1081 = vpop.permute.xlu0 %1080
      %1082 = vset.pattern.permute.xlu0 19
      %1083 = vperm.xlu0 %1082, %v270
      %v1084 = vpop.permute.xlu0 %1083
      %vm1085 = vcmp.eq.s32.totalorder %v1081, %v272
      %vm1086 = vcmp.eq.s32.totalorder %v1084, %v272
      %v1087 = vsel %vm1085, 1, 0
      %v1088 = vsel %vm1086, 1, 0
      %v1089 = vcvt.s32.f32 %v1087
      %v1090 = vcvt.s32.f32 %v1088
      %v1091 = vpack.c.bf16 %v1090, %v1089
      %v1093 = vsel %vm325, %v1091, 0
      %1095 = vmatpush.bf16.msra.mxu0 0
      %1096 = vmatpush.bf16.msra.mxu0 %v331
      %1097 = vmatpush.bf16.msra.mxu0 %v317
      %1098 = vmatpush.bf16.msra.mxu0 %v316
      %1099 = vmatpush.bf16.msra.mxu0 %v315
      %1100 = vmatpush.bf16.msra.mxu0 %v314
      %1101 = vmatpush.bf16.msra.mxu0 %v313
      %1102 = vmatpush.bf16.msra.mxu0 %v312
      %1103 = vmatmul.bf16.gmra.mxu0 %v1093
      %v1104 = vpop.f32.mrf.mxu0
      %v1105 = vadd.f32 0.0, %v1104
      %v1106 = vpop.f32.mrf.mxu0
      %v1107 = vadd.f32 0.0, %v1106
      %1108 = vdwg.mxu0
      %v1109 = vpack.c.bf16 %v1105, %v1105
      %v1110 = vpack.c.bf16 %v1107, %v1107
      %1113 = vrot.lane.b32.xlu0 %v1109, 96
      %v1114 = vpop.permute.xlu0 %1113
      %1115 = vrot.lane.b32.xlu0 %v1110, 96
      %v1116 = vpop.permute.xlu0 %1115
      %1119 = vst.msk [vmem:[#allocation2 + $0x10] sm:$0xf] %vm478, %v1114
      %1120 = vst.msk [vmem:[#allocation2 + $0x34] sm:$0xf] %vm478, %v1116
      %1121 = vset.pattern.permute.xlu0 20
      %1122 = vperm.xlu0 %1121, %v269
      %v1123 = vpop.permute.xlu0 %1122
      %1124 = vset.pattern.permute.xlu0 20
      %1125 = vperm.xlu0 %1124, %v270
      %v1126 = vpop.permute.xlu0 %1125
      %vm1127 = vcmp.eq.s32.totalorder %v1123, %v272
      %vm1128 = vcmp.eq.s32.totalorder %v1126, %v272
      %v1129 = vsel %vm1127, 1, 0
      %v1130 = vsel %vm1128, 1, 0
      %v1131 = vcvt.s32.f32 %v1129
      %v1132 = vcvt.s32.f32 %v1130
      %v1133 = vpack.c.bf16 %v1132, %v1131
      %v1135 = vsel %vm325, %v1133, 0
      %1137 = vmatpush.bf16.msra.mxu0 0
      %1138 = vmatpush.bf16.msra.mxu0 %v331
      %1139 = vmatpush.bf16.msra.mxu0 %v317
      %1140 = vmatpush.bf16.msra.mxu0 %v316
      %1141 = vmatpush.bf16.msra.mxu0 %v315
      %1142 = vmatpush.bf16.msra.mxu0 %v314
      %1143 = vmatpush.bf16.msra.mxu0 %v313
      %1144 = vmatpush.bf16.msra.mxu0 %v312
      %1145 = vmatmul.bf16.gmra.mxu0 %v1135
      %v1146 = vpop.f32.mrf.mxu0
      %v1147 = vadd.f32 0.0, %v1146
      %v1148 = vpop.f32.mrf.mxu0
      %v1149 = vadd.f32 0.0, %v1148
      %1150 = vdwg.mxu0
      %v1151 = vpack.c.bf16 %v1147, %v1147
      %v1152 = vpack.c.bf16 %v1149, %v1149
      %1153 = vst.msk [vmem:[#allocation2 + $0x14] sm:$0xf] %vm349, %v1151
      %1154 = vst.msk [vmem:[#allocation2 + $0x38] sm:$0xf] %vm349, %v1152
      %1155 = vset.pattern.permute.xlu0 21
      %1156 = vperm.xlu0 %1155, %v269
      %v1157 = vpop.permute.xlu0 %1156
      %1158 = vset.pattern.permute.xlu0 21
      %1159 = vperm.xlu0 %1158, %v270
      %v1160 = vpop.permute.xlu0 %1159
      %vm1161 = vcmp.eq.s32.totalorder %v1157, %v272
      %vm1162 = vcmp.eq.s32.totalorder %v1160, %v272
      %v1163 = vsel %vm1161, 1, 0
      %v1164 = vsel %vm1162, 1, 0
      %v1165 = vcvt.s32.f32 %v1163
      %v1166 = vcvt.s32.f32 %v1164
      %v1167 = vpack.c.bf16 %v1166, %v1165
      %v1169 = vsel %vm325, %v1167, 0
      %1171 = vmatpush.bf16.msra.mxu0 0
      %1172 = vmatpush.bf16.msra.mxu0 %v331
      %1173 = vmatpush.bf16.msra.mxu0 %v317
      %1174 = vmatpush.bf16.msra.mxu0 %v316
      %1175 = vmatpush.bf16.msra.mxu0 %v315
      %1176 = vmatpush.bf16.msra.mxu0 %v314
      %1177 = vmatpush.bf16.msra.mxu0 %v313
      %1178 = vmatpush.bf16.msra.mxu0 %v312
      %1179 = vmatmul.bf16.gmra.mxu0 %v1169
      %v1180 = vpop.f32.mrf.mxu0
      %v1181 = vadd.f32 0.0, %v1180
      %v1182 = vpop.f32.mrf.mxu0
      %v1183 = vadd.f32 0.0, %v1182
      %1184 = vdwg.mxu0
      %v1185 = vpack.c.bf16 %v1181, %v1181
      %v1186 = vpack.c.bf16 %v1183, %v1183
      %1189 = vrot.lane.b32.xlu0 %v1185, 32
      %v1190 = vpop.permute.xlu0 %1189
      %1191 = vrot.lane.b32.xlu0 %v1186, 32
      %v1192 = vpop.permute.xlu0 %1191
      %1195 = vst.msk [vmem:[#allocation2 + $0x14] sm:$0xf] %vm392, %v1190
      %1196 = vst.msk [vmem:[#allocation2 + $0x38] sm:$0xf] %vm392, %v1192
      %1197 = vset.pattern.permute.xlu0 22
      %1198 = vperm.xlu0 %1197, %v269
      %v1199 = vpop.permute.xlu0 %1198
      %1200 = vset.pattern.permute.xlu0 22
      %1201 = vperm.xlu0 %1200, %v270
      %v1202 = vpop.permute.xlu0 %1201
      %vm1203 = vcmp.eq.s32.totalorder %v1199, %v272
      %vm1204 = vcmp.eq.s32.totalorder %v1202, %v272
      %v1205 = vsel %vm1203, 1, 0
      %v1206 = vsel %vm1204, 1, 0
      %v1207 = vcvt.s32.f32 %v1205
      %v1208 = vcvt.s32.f32 %v1206
      %v1209 = vpack.c.bf16 %v1208, %v1207
      %v1211 = vsel %vm325, %v1209, 0
      %1213 = vmatpush.bf16.msra.mxu0 0
      %1214 = vmatpush.bf16.msra.mxu0 %v331
      %1215 = vmatpush.bf16.msra.mxu0 %v317
      %1216 = vmatpush.bf16.msra.mxu0 %v316
      %1217 = vmatpush.bf16.msra.mxu0 %v315
      %1218 = vmatpush.bf16.msra.mxu0 %v314
      %1219 = vmatpush.bf16.msra.mxu0 %v313
      %1220 = vmatpush.bf16.msra.mxu0 %v312
      %1221 = vmatmul.bf16.gmra.mxu0 %v1211
      %v1222 = vpop.f32.mrf.mxu0
      %v1223 = vadd.f32 0.0, %v1222
      %v1224 = vpop.f32.mrf.mxu0
      %v1225 = vadd.f32 0.0, %v1224
      %1226 = vdwg.mxu0
      %v1227 = vpack.c.bf16 %v1223, %v1223
      %v1228 = vpack.c.bf16 %v1225, %v1225
      %1231 = vrot.lane.b32.xlu0 %v1227, 64
      %v1232 = vpop.permute.xlu0 %1231
      %1233 = vrot.lane.b32.xlu0 %v1228, 64
      %v1234 = vpop.permute.xlu0 %1233
      %1237 = vst.msk [vmem:[#allocation2 + $0x14] sm:$0xf] %vm435, %v1232
      %1238 = vst.msk [vmem:[#allocation2 + $0x38] sm:$0xf] %vm435, %v1234
      %1239 = vset.pattern.permute.xlu0 23
      %1240 = vperm.xlu0 %1239, %v269
      %v1241 = vpop.permute.xlu0 %1240
      %1242 = vset.pattern.permute.xlu0 23
      %1243 = vperm.xlu0 %1242, %v270
      %v1244 = vpop.permute.xlu0 %1243
      %vm1245 = vcmp.eq.s32.totalorder %v1241, %v272
      %vm1246 = vcmp.eq.s32.totalorder %v1244, %v272
      %v1247 = vsel %vm1245, 1, 0
      %v1248 = vsel %vm1246, 1, 0
      %v1249 = vcvt.s32.f32 %v1247
      %v1250 = vcvt.s32.f32 %v1248
      %v1251 = vpack.c.bf16 %v1250, %v1249
      %v1253 = vsel %vm325, %v1251, 0
      %1255 = vmatpush.bf16.msra.mxu0 0
      %1256 = vmatpush.bf16.msra.mxu0 %v331
      %1257 = vmatpush.bf16.msra.mxu0 %v317
      %1258 = vmatpush.bf16.msra.mxu0 %v316
      %1259 = vmatpush.bf16.msra.mxu0 %v315
      %1260 = vmatpush.bf16.msra.mxu0 %v314
      %1261 = vmatpush.bf16.msra.mxu0 %v313
      %1262 = vmatpush.bf16.msra.mxu0 %v312
      %1263 = vmatmul.bf16.gmra.mxu0 %v1253
      %v1264 = vpop.f32.mrf.mxu0
      %v1265 = vadd.f32 0.0, %v1264
      %v1266 = vpop.f32.mrf.mxu0
      %v1267 = vadd.f32 0.0, %v1266
      %1268 = vdwg.mxu0
      %v1269 = vpack.c.bf16 %v1265, %v1265
      %v1270 = vpack.c.bf16 %v1267, %v1267
      %1273 = vrot.lane.b32.xlu0 %v1269, 96
      %v1274 = vpop.permute.xlu0 %1273
      %1275 = vrot.lane.b32.xlu0 %v1270, 96
      %v1276 = vpop.permute.xlu0 %1275
      %1279 = vst.msk [vmem:[#allocation2 + $0x14] sm:$0xf] %vm478, %v1274
      %1280 = vst.msk [vmem:[#allocation2 + $0x38] sm:$0xf] %vm478, %v1276
      %1281 = vset.pattern.permute.xlu0 24
      %1282 = vperm.xlu0 %1281, %v269
      %v1283 = vpop.permute.xlu0 %1282
      %1284 = vset.pattern.permute.xlu0 24
      %1285 = vperm.xlu0 %1284, %v270
      %v1286 = vpop.permute.xlu0 %1285
      %vm1287 = vcmp.eq.s32.totalorder %v1283, %v272
      %vm1288 = vcmp.eq.s32.totalorder %v1286, %v272
      %v1289 = vsel %vm1287, 1, 0
      %v1290 = vsel %vm1288, 1, 0
      %v1291 = vcvt.s32.f32 %v1289
      %v1292 = vcvt.s32.f32 %v1290
      %v1293 = vpack.c.bf16 %v1292, %v1291
      %v1295 = vsel %vm325, %v1293, 0
      %1297 = vmatpush.bf16.msra.mxu0 0
      %1298 = vmatpush.bf16.msra.mxu0 %v331
      %1299 = vmatpush.bf16.msra.mxu0 %v317
      %1300 = vmatpush.bf16.msra.mxu0 %v316
      %1301 = vmatpush.bf16.msra.mxu0 %v315
      %1302 = vmatpush.bf16.msra.mxu0 %v314
      %1303 = vmatpush.bf16.msra.mxu0 %v313
      %1304 = vmatpush.bf16.msra.mxu0 %v312
      %1305 = vmatmul.bf16.gmra.mxu0 %v1295
      %v1306 = vpop.f32.mrf.mxu0
      %v1307 = vadd.f32 0.0, %v1306
      %v1308 = vpop.f32.mrf.mxu0
      %v1309 = vadd.f32 0.0, %v1308
      %1310 = vdwg.mxu0
      %v1311 = vpack.c.bf16 %v1307, %v1307
      %v1312 = vpack.c.bf16 %v1309, %v1309
      %1313 = vst.msk [vmem:[#allocation2 + $0x18] sm:$0xf] %vm349, %v1311
      %1314 = vst.msk [vmem:[#allocation2 + $0x3c] sm:$0xf] %vm349, %v1312
      %1315 = vset.pattern.permute.xlu0 25
      %1316 = vperm.xlu0 %1315, %v269
      %v1317 = vpop.permute.xlu0 %1316
      %1318 = vset.pattern.permute.xlu0 25
      %1319 = vperm.xlu0 %1318, %v270
      %v1320 = vpop.permute.xlu0 %1319
      %vm1321 = vcmp.eq.s32.totalorder %v1317, %v272
      %vm1322 = vcmp.eq.s32.totalorder %v1320, %v272
      %v1323 = vsel %vm1321, 1, 0
      %v1324 = vsel %vm1322, 1, 0
      %v1325 = vcvt.s32.f32 %v1323
      %v1326 = vcvt.s32.f32 %v1324
      %v1327 = vpack.c.bf16 %v1326, %v1325
      %v1329 = vsel %vm325, %v1327, 0
      %1331 = vmatpush.bf16.msra.mxu0 0
      %1332 = vmatpush.bf16.msra.mxu0 %v331
      %1333 = vmatpush.bf16.msra.mxu0 %v317
      %1334 = vmatpush.bf16.msra.mxu0 %v316
      %1335 = vmatpush.bf16.msra.mxu0 %v315
      %1336 = vmatpush.bf16.msra.mxu0 %v314
      %1337 = vmatpush.bf16.msra.mxu0 %v313
      %1338 = vmatpush.bf16.msra.mxu0 %v312
      %1339 = vmatmul.bf16.gmra.mxu0 %v1329
      %v1340 = vpop.f32.mrf.mxu0
      %v1341 = vadd.f32 0.0, %v1340
      %v1342 = vpop.f32.mrf.mxu0
      %v1343 = vadd.f32 0.0, %v1342
      %1344 = vdwg.mxu0
      %v1345 = vpack.c.bf16 %v1341, %v1341
      %v1346 = vpack.c.bf16 %v1343, %v1343
      %1349 = vrot.lane.b32.xlu0 %v1345, 32
      %v1350 = vpop.permute.xlu0 %1349
      %1351 = vrot.lane.b32.xlu0 %v1346, 32
      %v1352 = vpop.permute.xlu0 %1351
      %1355 = vst.msk [vmem:[#allocation2 + $0x18] sm:$0xf] %vm392, %v1350
      %1356 = vst.msk [vmem:[#allocation2 + $0x3c] sm:$0xf] %vm392, %v1352
      %1357 = vset.pattern.permute.xlu0 26
      %1358 = vperm.xlu0 %1357, %v269
      %v1359 = vpop.permute.xlu0 %1358
      %1360 = vset.pattern.permute.xlu0 26
      %1361 = vperm.xlu0 %1360, %v270
      %v1362 = vpop.permute.xlu0 %1361
      %vm1363 = vcmp.eq.s32.totalorder %v1359, %v272
      %vm1364 = vcmp.eq.s32.totalorder %v1362, %v272
      %v1365 = vsel %vm1363, 1, 0
      %v1366 = vsel %vm1364, 1, 0
      %v1367 = vcvt.s32.f32 %v1365
      %v1368 = vcvt.s32.f32 %v1366
      %v1369 = vpack.c.bf16 %v1368, %v1367
      %v1371 = vsel %vm325, %v1369, 0
      %1373 = vmatpush.bf16.msra.mxu0 0
      %1374 = vmatpush.bf16.msra.mxu0 %v331
      %1375 = vmatpush.bf16.msra.mxu0 %v317
      %1376 = vmatpush.bf16.msra.mxu0 %v316
      %1377 = vmatpush.bf16.msra.mxu0 %v315
      %1378 = vmatpush.bf16.msra.mxu0 %v314
      %1379 = vmatpush.bf16.msra.mxu0 %v313
      %1380 = vmatpush.bf16.msra.mxu0 %v312
      %1381 = vmatmul.bf16.gmra.mxu0 %v1371
      %v1382 = vpop.f32.mrf.mxu0
      %v1383 = vadd.f32 0.0, %v1382
      %v1384 = vpop.f32.mrf.mxu0
      %v1385 = vadd.f32 0.0, %v1384
      %1386 = vdwg.mxu0
      %v1387 = vpack.c.bf16 %v1383, %v1383
      %v1388 = vpack.c.bf16 %v1385, %v1385
      %1391 = vrot.lane.b32.xlu0 %v1387, 64
      %v1392 = vpop.permute.xlu0 %1391
      %1393 = vrot.lane.b32.xlu0 %v1388, 64
      %v1394 = vpop.permute.xlu0 %1393
      %1397 = vst.msk [vmem:[#allocation2 + $0x18] sm:$0xf] %vm435, %v1392
      %1398 = vst.msk [vmem:[#allocation2 + $0x3c] sm:$0xf] %vm435, %v1394
      %1399 = vset.pattern.permute.xlu0 27
      %1400 = vperm.xlu0 %1399, %v269
      %v1401 = vpop.permute.xlu0 %1400
      %1402 = vset.pattern.permute.xlu0 27
      %1403 = vperm.xlu0 %1402, %v270
      %v1404 = vpop.permute.xlu0 %1403
      %vm1405 = vcmp.eq.s32.totalorder %v1401, %v272
      %vm1406 = vcmp.eq.s32.totalorder %v1404, %v272
      %v1407 = vsel %vm1405, 1, 0
      %v1408 = vsel %vm1406, 1, 0
      %v1409 = vcvt.s32.f32 %v1407
      %v1410 = vcvt.s32.f32 %v1408
      %v1411 = vpack.c.bf16 %v1410, %v1409
      %v1413 = vsel %vm325, %v1411, 0
      %1415 = vmatpush.bf16.msra.mxu0 0
      %1416 = vmatpush.bf16.msra.mxu0 %v331
      %1417 = vmatpush.bf16.msra.mxu0 %v317
      %1418 = vmatpush.bf16.msra.mxu0 %v316
      %1419 = vmatpush.bf16.msra.mxu0 %v315
      %1420 = vmatpush.bf16.msra.mxu0 %v314
      %1421 = vmatpush.bf16.msra.mxu0 %v313
      %1422 = vmatpush.bf16.msra.mxu0 %v312
      %1423 = vmatmul.bf16.gmra.mxu0 %v1413
      %v1424 = vpop.f32.mrf.mxu0
      %v1425 = vadd.f32 0.0, %v1424
      %v1426 = vpop.f32.mrf.mxu0
      %v1427 = vadd.f32 0.0, %v1426
      %1428 = vdwg.mxu0
      %v1429 = vpack.c.bf16 %v1425, %v1425
      %v1430 = vpack.c.bf16 %v1427, %v1427
      %1433 = vrot.lane.b32.xlu0 %v1429, 96
      %v1434 = vpop.permute.xlu0 %1433
      %1435 = vrot.lane.b32.xlu0 %v1430, 96
      %v1436 = vpop.permute.xlu0 %1435
      %1439 = vst.msk [vmem:[#allocation2 + $0x18] sm:$0xf] %vm478, %v1434
      %1440 = vst.msk [vmem:[#allocation2 + $0x3c] sm:$0xf] %vm478, %v1436
      %1441 = vset.pattern.permute.xlu0 28
      %1442 = vperm.xlu0 %1441, %v269
      %v1443 = vpop.permute.xlu0 %1442
      %1444 = vset.pattern.permute.xlu0 28
      %1445 = vperm.xlu0 %1444, %v270
      %v1446 = vpop.permute.xlu0 %1445
      %vm1447 = vcmp.eq.s32.totalorder %v1443, %v272
      %vm1448 = vcmp.eq.s32.totalorder %v1446, %v272
      %v1449 = vsel %vm1447, 1, 0
      %v1450 = vsel %vm1448, 1, 0
      %v1451 = vcvt.s32.f32 %v1449
      %v1452 = vcvt.s32.f32 %v1450
      %v1453 = vpack.c.bf16 %v1452, %v1451
      %v1455 = vsel %vm325, %v1453, 0
      %1457 = vmatpush.bf16.msra.mxu0 0
      %1458 = vmatpush.bf16.msra.mxu0 %v331
      %1459 = vmatpush.bf16.msra.mxu0 %v317
      %1460 = vmatpush.bf16.msra.mxu0 %v316
      %1461 = vmatpush.bf16.msra.mxu0 %v315
      %1462 = vmatpush.bf16.msra.mxu0 %v314
      %1463 = vmatpush.bf16.msra.mxu0 %v313
      %1464 = vmatpush.bf16.msra.mxu0 %v312
      %1465 = vmatmul.bf16.gmra.mxu0 %v1455
      %v1466 = vpop.f32.mrf.mxu0
      %v1467 = vadd.f32 0.0, %v1466
      %v1468 = vpop.f32.mrf.mxu0
      %v1469 = vadd.f32 0.0, %v1468
      %1470 = vdwg.mxu0
      %v1471 = vpack.c.bf16 %v1467, %v1467
      %v1472 = vpack.c.bf16 %v1469, %v1469
      %1473 = vst.msk [vmem:[#allocation2 + $0x1c] sm:$0xf] %vm349, %v1471
      %1474 = vst.msk [vmem:[#allocation2 + $0x40] sm:$0xf] %vm349, %v1472
      %1475 = vset.pattern.permute.xlu0 29
      %1476 = vperm.xlu0 %1475, %v269
      %v1477 = vpop.permute.xlu0 %1476
      %1478 = vset.pattern.permute.xlu0 29
      %1479 = vperm.xlu0 %1478, %v270
      %v1480 = vpop.permute.xlu0 %1479
      %vm1481 = vcmp.eq.s32.totalorder %v1477, %v272
      %vm1482 = vcmp.eq.s32.totalorder %v1480, %v272
      %v1483 = vsel %vm1481, 1, 0
      %v1484 = vsel %vm1482, 1, 0
      %v1485 = vcvt.s32.f32 %v1483
      %v1486 = vcvt.s32.f32 %v1484
      %v1487 = vpack.c.bf16 %v1486, %v1485
      %v1489 = vsel %vm325, %v1487, 0
      %1491 = vmatpush.bf16.msra.mxu0 0
      %1492 = vmatpush.bf16.msra.mxu0 %v331
      %1493 = vmatpush.bf16.msra.mxu0 %v317
      %1494 = vmatpush.bf16.msra.mxu0 %v316
      %1495 = vmatpush.bf16.msra.mxu0 %v315
      %1496 = vmatpush.bf16.msra.mxu0 %v314
      %1497 = vmatpush.bf16.msra.mxu0 %v313
      %1498 = vmatpush.bf16.msra.mxu0 %v312
      %1499 = vmatmul.bf16.gmra.mxu0 %v1489
      %v1500 = vpop.f32.mrf.mxu0
      %v1501 = vadd.f32 0.0, %v1500
      %v1502 = vpop.f32.mrf.mxu0
      %v1503 = vadd.f32 0.0, %v1502
      %1504 = vdwg.mxu0
      %v1505 = vpack.c.bf16 %v1501, %v1501
      %v1506 = vpack.c.bf16 %v1503, %v1503
      %1509 = vrot.lane.b32.xlu0 %v1505, 32
      %v1510 = vpop.permute.xlu0 %1509
      %1511 = vrot.lane.b32.xlu0 %v1506, 32
      %v1512 = vpop.permute.xlu0 %1511
      %1515 = vst.msk [vmem:[#allocation2 + $0x1c] sm:$0xf] %vm392, %v1510
      %1516 = vst.msk [vmem:[#allocation2 + $0x40] sm:$0xf] %vm392, %v1512
      %1517 = vset.pattern.permute.xlu0 30
      %1518 = vperm.xlu0 %1517, %v269
      %v1519 = vpop.permute.xlu0 %1518
      %1520 = vset.pattern.permute.xlu0 30
      %1521 = vperm.xlu0 %1520, %v270
      %v1522 = vpop.permute.xlu0 %1521
      %vm1523 = vcmp.eq.s32.totalorder %v1519, %v272
      %vm1524 = vcmp.eq.s32.totalorder %v1522, %v272
      %v1525 = vsel %vm1523, 1, 0
      %v1526 = vsel %vm1524, 1, 0
      %v1527 = vcvt.s32.f32 %v1525
      %v1528 = vcvt.s32.f32 %v1526
      %v1529 = vpack.c.bf16 %v1528, %v1527
      %v1531 = vsel %vm325, %v1529, 0
      %1533 = vmatpush.bf16.msra.mxu0 0
      %1534 = vmatpush.bf16.msra.mxu0 %v331
      %1535 = vmatpush.bf16.msra.mxu0 %v317
      %1536 = vmatpush.bf16.msra.mxu0 %v316
      %1537 = vmatpush.bf16.msra.mxu0 %v315
      %1538 = vmatpush.bf16.msra.mxu0 %v314
      %1539 = vmatpush.bf16.msra.mxu0 %v313
      %1540 = vmatpush.bf16.msra.mxu0 %v312
      %1541 = vmatmul.bf16.gmra.mxu0 %v1531
      %v1542 = vpop.f32.mrf.mxu0
      %v1543 = vadd.f32 0.0, %v1542
      %v1544 = vpop.f32.mrf.mxu0
      %v1545 = vadd.f32 0.0, %v1544
      %1546 = vdwg.mxu0
      %v1547 = vpack.c.bf16 %v1543, %v1543
      %v1548 = vpack.c.bf16 %v1545, %v1545
      %1551 = vrot.lane.b32.xlu0 %v1547, 64
      %v1552 = vpop.permute.xlu0 %1551
      %1553 = vrot.lane.b32.xlu0 %v1548, 64
      %v1554 = vpop.permute.xlu0 %1553
      %1557 = vst.msk [vmem:[#allocation2 + $0x1c] sm:$0xf] %vm435, %v1552
      %1558 = vst.msk [vmem:[#allocation2 + $0x40] sm:$0xf] %vm435, %v1554
      %1559 = vset.pattern.permute.xlu0 31
      %1560 = vperm.xlu0 %1559, %v269
      %v1561 = vpop.permute.xlu0 %1560
      %1562 = vset.pattern.permute.xlu0 31
      %1563 = vperm.xlu0 %1562, %v270
      %v1564 = vpop.permute.xlu0 %1563
      %vm1565 = vcmp.eq.s32.totalorder %v1561, %v272
      %vm1566 = vcmp.eq.s32.totalorder %v1564, %v272
      %v1567 = vsel %vm1565, 1, 0
      %v1568 = vsel %vm1566, 1, 0
      %v1569 = vcvt.s32.f32 %v1567
      %v1570 = vcvt.s32.f32 %v1568
      %v1571 = vpack.c.bf16 %v1570, %v1569
      %v1573 = vsel %vm325, %v1571, 0
      %1575 = vmatpush.bf16.msra.mxu0 0
      %1576 = vmatpush.bf16.msra.mxu0 %v331
      %1577 = vmatpush.bf16.msra.mxu0 %v317
      %1578 = vmatpush.bf16.msra.mxu0 %v316
      %1579 = vmatpush.bf16.msra.mxu0 %v315
      %1580 = vmatpush.bf16.msra.mxu0 %v314
      %1581 = vmatpush.bf16.msra.mxu0 %v313
      %1582 = vmatpush.bf16.msra.mxu0 %v312
      %1583 = vmatmul.bf16.gmra.mxu0 %v1573
      %v1584 = vpop.f32.mrf.mxu0
      %v1585 = vadd.f32 0.0, %v1584
      %v1586 = vpop.f32.mrf.mxu0
      %v1587 = vadd.f32 0.0, %v1586
      %1588 = vdwg.mxu0
      %v1589 = vpack.c.bf16 %v1585, %v1585
      %v1590 = vpack.c.bf16 %v1587, %v1587
      %1593 = vrot.lane.b32.xlu0 %v1589, 96
      %v1594 = vpop.permute.xlu0 %1593
      %1595 = vrot.lane.b32.xlu0 %v1590, 96
      %v1596 = vpop.permute.xlu0 %1595
      %1599 = vst.msk [vmem:[#allocation2 + $0x1c] sm:$0xf] %vm478, %v1594
      %1600 = vst.msk [vmem:[#allocation2 + $0x40] sm:$0xf] %vm478, %v1596
      %1601 = vset.pattern.permute.xlu0 32
      %1602 = vperm.xlu0 %1601, %v269
      %v1603 = vpop.permute.xlu0 %1602
      %1604 = vset.pattern.permute.xlu0 32
      %1605 = vperm.xlu0 %1604, %v270
      %v1606 = vpop.permute.xlu0 %1605
      %vm1607 = vcmp.eq.s32.totalorder %v1603, %v272
      %vm1608 = vcmp.eq.s32.totalorder %v1606, %v272
      %v1609 = vsel %vm1607, 1, 0
      %v1610 = vsel %vm1608, 1, 0
      %v1611 = vcvt.s32.f32 %v1609
      %v1612 = vcvt.s32.f32 %v1610
      %v1613 = vpack.c.bf16 %v1612, %v1611
      %v1615 = vsel %vm325, %v1613, 0
      %1617 = vmatpush.bf16.msra.mxu0 0
      %1618 = vmatpush.bf16.msra.mxu0 %v331
      %1619 = vmatpush.bf16.msra.mxu0 %v317
      %1620 = vmatpush.bf16.msra.mxu0 %v316
      %1621 = vmatpush.bf16.msra.mxu0 %v315
      %1622 = vmatpush.bf16.msra.mxu0 %v314
      %1623 = vmatpush.bf16.msra.mxu0 %v313
      %1624 = vmatpush.bf16.msra.mxu0 %v312
      %1625 = vmatmul.bf16.gmra.mxu0 %v1615
      %v1626 = vpop.f32.mrf.mxu0
      %v1627 = vadd.f32 0.0, %v1626
      %v1628 = vpop.f32.mrf.mxu0
      %v1629 = vadd.f32 0.0, %v1628
      %1630 = vdwg.mxu0
      %v1631 = vpack.c.bf16 %v1627, %v1627
      %v1632 = vpack.c.bf16 %v1629, %v1629
      %1633 = vst.msk [vmem:[#allocation2 + $0x20] sm:$0xf] %vm349, %v1631
      %1634 = vst.msk [vmem:[#allocation2 + $0x44] sm:$0xf] %vm349, %v1632
      %1635 = vset.pattern.permute.xlu0 33
      %1636 = vperm.xlu0 %1635, %v269
      %v1637 = vpop.permute.xlu0 %1636
      %1638 = vset.pattern.permute.xlu0 33
      %1639 = vperm.xlu0 %1638, %v270
      %v1640 = vpop.permute.xlu0 %1639
      %vm1641 = vcmp.eq.s32.totalorder %v1637, %v272
      %vm1642 = vcmp.eq.s32.totalorder %v1640, %v272
      %v1643 = vsel %vm1641, 1, 0
      %v1644 = vsel %vm1642, 1, 0
      %v1645 = vcvt.s32.f32 %v1643
      %v1646 = vcvt.s32.f32 %v1644
      %v1647 = vpack.c.bf16 %v1646, %v1645
      %v1649 = vsel %vm325, %v1647, 0
      %1651 = vmatpush.bf16.msra.mxu0 0
      %1652 = vmatpush.bf16.msra.mxu0 %v331
      %1653 = vmatpush.bf16.msra.mxu0 %v317
      %1654 = vmatpush.bf16.msra.mxu0 %v316
      %1655 = vmatpush.bf16.msra.mxu0 %v315
      %1656 = vmatpush.bf16.msra.mxu0 %v314
      %1657 = vmatpush.bf16.msra.mxu0 %v313
      %1658 = vmatpush.bf16.msra.mxu0 %v312
      %1659 = vmatmul.bf16.gmra.mxu0 %v1649
      %v1660 = vpop.f32.mrf.mxu0
      %v1661 = vadd.f32 0.0, %v1660
      %v1662 = vpop.f32.mrf.mxu0
      %v1663 = vadd.f32 0.0, %v1662
      %1664 = vdwg.mxu0
      %v1665 = vpack.c.bf16 %v1661, %v1661
      %v1666 = vpack.c.bf16 %v1663, %v1663
      %1669 = vrot.lane.b32.xlu0 %v1665, 32
      %v1670 = vpop.permute.xlu0 %1669
      %1671 = vrot.lane.b32.xlu0 %v1666, 32
      %v1672 = vpop.permute.xlu0 %1671
      %1675 = vst.msk [vmem:[#allocation2 + $0x20] sm:$0xf] %vm392, %v1670
      %1676 = vst.msk [vmem:[#allocation2 + $0x44] sm:$0xf] %vm392, %v1672
      %1677 = vset.pattern.permute.xlu0 34
      %1678 = vperm.xlu0 %1677, %v269
      %v1679 = vpop.permute.xlu0 %1678
      %1680 = vset.pattern.permute.xlu0 34
      %1681 = vperm.xlu0 %1680, %v270
      %v1682 = vpop.permute.xlu0 %1681
      %vm1683 = vcmp.eq.s32.totalorder %v1679, %v272
      %vm1684 = vcmp.eq.s32.totalorder %v1682, %v272
      %v1685 = vsel %vm1683, 1, 0
      %v1686 = vsel %vm1684, 1, 0
      %v1687 = vcvt.s32.f32 %v1685
      %v1688 = vcvt.s32.f32 %v1686
      %v1689 = vpack.c.bf16 %v1688, %v1687
      %v1691 = vsel %vm325, %v1689, 0
      %1693 = vmatpush.bf16.msra.mxu0 0
      %1694 = vmatpush.bf16.msra.mxu0 %v331
      %1695 = vmatpush.bf16.msra.mxu0 %v317
      %1696 = vmatpush.bf16.msra.mxu0 %v316
      %1697 = vmatpush.bf16.msra.mxu0 %v315
      %1698 = vmatpush.bf16.msra.mxu0 %v314
      %1699 = vmatpush.bf16.msra.mxu0 %v313
      %1700 = vmatpush.bf16.msra.mxu0 %v312
      %1701 = vmatmul.bf16.gmra.mxu0 %v1691
      %v1702 = vpop.f32.mrf.mxu0
      %v1703 = vadd.f32 0.0, %v1702
      %v1704 = vpop.f32.mrf.mxu0
      %v1705 = vadd.f32 0.0, %v1704
      %1706 = vdwg.mxu0
      %v1707 = vpack.c.bf16 %v1703, %v1703
      %v1708 = vpack.c.bf16 %v1705, %v1705
      %1711 = vrot.lane.b32.xlu0 %v1707, 64
      %v1712 = vpop.permute.xlu0 %1711
      %1713 = vrot.lane.b32.xlu0 %v1708, 64
      %v1714 = vpop.permute.xlu0 %1713
      %1717 = vst.msk [vmem:[#allocation2 + $0x20] sm:$0xf] %vm435, %v1712
      %1718 = vst.msk [vmem:[#allocation2 + $0x44] sm:$0xf] %vm435, %v1714
      %1719 = vset.pattern.permute.xlu0 35
      %1720 = vperm.xlu0 %1719, %v269
      %v1721 = vpop.permute.xlu0 %1720
      %1722 = vset.pattern.permute.xlu0 35
      %1723 = vperm.xlu0 %1722, %v270
      %v1724 = vpop.permute.xlu0 %1723
      %vm1725 = vcmp.eq.s32.totalorder %v1721, %v272
      %vm1726 = vcmp.eq.s32.totalorder %v1724, %v272
      %v1727 = vsel %vm1725, 1, 0
      %v1728 = vsel %vm1726, 1, 0
      %v1729 = vcvt.s32.f32 %v1727
      %v1730 = vcvt.s32.f32 %v1728
      %v1731 = vpack.c.bf16 %v1730, %v1729
      %v1733 = vsel %vm325, %v1731, 0
      %1735 = vmatpush.bf16.msra.mxu0 0
      %1736 = vmatpush.bf16.msra.mxu0 %v331
      %1737 = vmatpush.bf16.msra.mxu0 %v317
      %1738 = vmatpush.bf16.msra.mxu0 %v316
      %1739 = vmatpush.bf16.msra.mxu0 %v315
      %1740 = vmatpush.bf16.msra.mxu0 %v314
      %1741 = vmatpush.bf16.msra.mxu0 %v313
      %1742 = vmatpush.bf16.msra.mxu0 %v312
      %1743 = vmatmul.bf16.gmra.mxu0 %v1733
      %v1744 = vpop.f32.mrf.mxu0
      %v1745 = vadd.f32 0.0, %v1744
      %v1746 = vpop.f32.mrf.mxu0
      %v1747 = vadd.f32 0.0, %v1746
      %1748 = vdwg.mxu0
      %v1749 = vpack.c.bf16 %v1745, %v1745
      %v1750 = vpack.c.bf16 %v1747, %v1747
      %1753 = vrot.lane.b32.xlu0 %v1749, 96
      %v1754 = vpop.permute.xlu0 %1753
      %1755 = vrot.lane.b32.xlu0 %v1750, 96
      %v1756 = vpop.permute.xlu0 %1755
      %1759 = vst.msk [vmem:[#allocation2 + $0x20] sm:$0xf] %vm478, %v1754
      %1760 = vst.msk [vmem:[#allocation2 + $0x44] sm:$0xf] %vm478, %v1756
      %v1761 = vld [vmem:[#allocation2] sm:$0xff]
      %v1762 = vld [vmem:[#allocation2 + $0x8] sm:$0xff]
      %v1763 = vld [vmem:[#allocation2 + $0x10] sm:$0xff]
      %v1764 = vld [vmem:[#allocation2 + $0x18] sm:$0xff]
      %v1765 = vld [vmem:[#allocation2 + $0x20] sm:$0xf]
      %v1766 = vld [vmem:[#allocation2 + $0x24] sm:$0xff]
      %v1767 = vld [vmem:[#allocation2 + $0x2c] sm:$0xff]
      %v1768 = vld [vmem:[#allocation2 + $0x34] sm:$0xff]
      %v1769 = vld [vmem:[#allocation2 + $0x3c] sm:$0xff]
      %v1770 = vld [vmem:[#allocation2 + $0x44] sm:$0xf]
      %v1771 = vld [vmem:[%s2] sm:$0xff]
      %v1772 = vld [vmem:[%s2 + $0x8] sm:$0xff]
      %v1773 = vld [vmem:[%s2 + $0x10] sm:$0xff]
      %v1774 = vld [vmem:[%s2 + $0x18] sm:$0xff]
      %v1775 = vld [vmem:[%s2 + $0x20] sm:$0xff]
      %v1776 = vld [vmem:[%s2 + $0x28] sm:$0xff]
      %v1777 = vld [vmem:[%s2 + $0x30] sm:$0xff]
      %v1778 = vld [vmem:[%s2 + $0x38] sm:$0xff]
      %v1779 = vld [vmem:[%s2 + $0x40] sm:$0xff]
      %v1780 = vld [vmem:[%s2 + $0x48] sm:$0xff]
      %v1781 = vld [vmem:[%s2 + $0x50] sm:$0xff]
      %v1782 = vld [vmem:[%s2 + $0x58] sm:$0xff]
      %v1783 = vld [vmem:[%s2 + $0x60] sm:$0xff]
      %v1784 = vld [vmem:[%s2 + $0x68] sm:$0xff]
      %v1785 = vld [vmem:[%s2 + $0x70] sm:$0xff]
      %v1786 = vld [vmem:[%s2 + $0x78] sm:$0xff]
      %v1787 = vld [vmem:[%s2 + $0x80] sm:$0xff]
      %v1788 = vld [vmem:[%s2 + $0x88] sm:$0xff]
      %v1789 = vld [vmem:[%s2 + $0x90] sm:$0xff]
      %v1790 = vld [vmem:[%s2 + $0x98] sm:$0xff]
      %v1791 = vld [vmem:[%s2 + $0xa0] sm:$0xff]
      %v1792 = vld [vmem:[%s2 + $0xa8] sm:$0xff]
      %v1793 = vld [vmem:[%s2 + $0xb0] sm:$0xff]
      %v1794 = vld [vmem:[%s2 + $0xb8] sm:$0xff]
      %v1795 = vld [vmem:[%s2 + $0xc0] sm:$0xff]
      %v1796 = vld [vmem:[%s2 + $0xc8] sm:$0xff]
      %v1797 = vld [vmem:[%s2 + $0xd0] sm:$0xff]
      %v1798 = vld [vmem:[%s2 + $0xd8] sm:$0xff]
      %v1799 = vld [vmem:[%s2 + $0xe0] sm:$0xff]
      %v1800 = vld [vmem:[%s2 + $0xe8] sm:$0xff]
      %v1801 = vld [vmem:[%s2 + $0xf0] sm:$0xff]
      %v1802 = vld [vmem:[%s2 + $0xf8] sm:$0xff]
      %v1803 = vld [vmem:[%s2 + $0x100] sm:$0xff]
      %v1804 = vld [vmem:[%s2 + $0x108] sm:$0xff]
      %v1805 = vld [vmem:[%s2 + $0x110] sm:$0xff]
      %v1806 = vld [vmem:[%s2 + $0x118] sm:$0xff]
      %v1807 = vld [vmem:[%s2 + $0x120] sm:$0xff]
      %v1808 = vld [vmem:[%s2 + $0x128] sm:$0xff]
      %v1809 = vld [vmem:[%s2 + $0x130] sm:$0xff]
      %v1810 = vld [vmem:[%s2 + $0x138] sm:$0xff]
      %v1811 = vld [vmem:[%s2 + $0x140] sm:$0xff]
      %v1812 = vld [vmem:[%s2 + $0x148] sm:$0xff]
      %v1813 = vld [vmem:[%s2 + $0x150] sm:$0xff]
      %v1814 = vld [vmem:[%s2 + $0x158] sm:$0xff]
      %v1815 = vld [vmem:[%s2 + $0x160] sm:$0xff]
      %v1816 = vld [vmem:[%s2 + $0x168] sm:$0xff]
      %v1817 = vld [vmem:[%s2 + $0x170] sm:$0xff]
      %v1818 = vld [vmem:[%s2 + $0x178] sm:$0xff]
      %v1819 = vld [vmem:[%s2 + $0x180] sm:$0xff]
      %v1820 = vld [vmem:[%s2 + $0x188] sm:$0xff]
      %v1821 = vld [vmem:[%s2 + $0x190] sm:$0xff]
      %v1822 = vld [vmem:[%s2 + $0x198] sm:$0xff]
      %v1823 = vld [vmem:[%s2 + $0x1a0] sm:$0xff]
      %v1824 = vld [vmem:[%s2 + $0x1a8] sm:$0xff]
      %v1825 = vld [vmem:[%s2 + $0x1b0] sm:$0xff]
      %v1826 = vld [vmem:[%s2 + $0x1b8] sm:$0xff]
      %v1827 = vld [vmem:[%s2 + $0x1c0] sm:$0xff]
      %v1828 = vld [vmem:[%s2 + $0x1c8] sm:$0xff]
      %v1829 = vld [vmem:[%s2 + $0x1d0] sm:$0xff]
      %v1830 = vld [vmem:[%s2 + $0x1d8] sm:$0xff]
      %v1831 = vld [vmem:[%s2 + $0x1e0] sm:$0xff]
      %v1832 = vld [vmem:[%s2 + $0x1e8] sm:$0xff]
      %v1833 = vld [vmem:[%s2 + $0x1f0] sm:$0xff]
      %v1834 = vld [vmem:[%s2 + $0x1f8] sm:$0xff]
      %v1835 = vld [vmem:[%s2 + $0x200] sm:$0xff]
      %v1836 = vld [vmem:[%s2 + $0x208] sm:$0xff]
      %v1837 = vld [vmem:[%s2 + $0x210] sm:$0xff]
      %v1838 = vld [vmem:[%s2 + $0x218] sm:$0xff]
      %v1839 = vld [vmem:[%s2 + $0x220] sm:$0xff]
      %v1840 = vld [vmem:[%s2 + $0x228] sm:$0xff]
      %v1841 = vld [vmem:[%s2 + $0x230] sm:$0xff]
      %v1842 = vld [vmem:[%s2 + $0x238] sm:$0xff]
      %v1843 = vld [vmem:[%s2 + $0x240] sm:$0xff]
      %v1844 = vld [vmem:[%s2 + $0x248] sm:$0xff]
      %v1845 = vld [vmem:[%s2 + $0x250] sm:$0xff]
      %v1846 = vld [vmem:[%s2 + $0x258] sm:$0xff]
      %v1847 = vld [vmem:[%s2 + $0x260] sm:$0xff]
      %v1848 = vld [vmem:[%s2 + $0x268] sm:$0xff]
      %v1849 = vld [vmem:[%s2 + $0x270] sm:$0xff]
      %v1850 = vld [vmem:[%s2 + $0x278] sm:$0xff]
      %v1851 = vld [vmem:[%s2 + $0x280] sm:$0xff]
      %v1852 = vld [vmem:[%s2 + $0x288] sm:$0xff]
      %v1853 = vld [vmem:[%s2 + $0x290] sm:$0xff]
      %v1854 = vld [vmem:[%s2 + $0x298] sm:$0xff]
      %v1855 = vld [vmem:[%s2 + $0x2a0] sm:$0xff]
      %v1856 = vld [vmem:[%s2 + $0x2a8] sm:$0xff]
      %v1857 = vld [vmem:[%s2 + $0x2b0] sm:$0xff]
      %v1858 = vld [vmem:[%s2 + $0x2b8] sm:$0xff]
      %v1859 = vld [vmem:[%s2 + $0x2c0] sm:$0xff]
      %v1860 = vld [vmem:[%s2 + $0x2c8] sm:$0xff]
      %v1861 = vld [vmem:[%s2 + $0x2d0] sm:$0xff]
      %v1862 = vld [vmem:[%s2 + $0x2d8] sm:$0xff]
      %v1863 = vld [vmem:[%s2 + $0x2e0] sm:$0xff]
      %v1864 = vld [vmem:[%s2 + $0x2e8] sm:$0xff]
      %v1865 = vld [vmem:[%s2 + $0x2f0] sm:$0xff]
      %v1866 = vld [vmem:[%s2 + $0x2f8] sm:$0xff]
      %v1867 = vld [vmem:[%s2 + $0x300] sm:$0xff]
      %v1868 = vld [vmem:[%s2 + $0x308] sm:$0xff]
      %v1869 = vld [vmem:[%s2 + $0x310] sm:$0xff]
      %v1870 = vld [vmem:[%s2 + $0x318] sm:$0xff]
      %v1871 = vld [vmem:[%s2 + $0x320] sm:$0xff]
      %v1872 = vld [vmem:[%s2 + $0x328] sm:$0xff]
      %v1873 = vld [vmem:[%s2 + $0x330] sm:$0xff]
      %v1874 = vld [vmem:[%s2 + $0x338] sm:$0xff]
      %v1875 = vld [vmem:[%s2 + $0x340] sm:$0xff]
      %v1876 = vld [vmem:[%s2 + $0x348] sm:$0xff]
      %v1877 = vld [vmem:[%s2 + $0x350] sm:$0xff]
      %v1878 = vld [vmem:[%s2 + $0x358] sm:$0xff]
      %v1879 = vld [vmem:[%s2 + $0x360] sm:$0xff]
      %v1880 = vld [vmem:[%s2 + $0x368] sm:$0xff]
      %v1881 = vld [vmem:[%s2 + $0x370] sm:$0xff]
      %v1882 = vld [vmem:[%s2 + $0x378] sm:$0xff]
      %v1883 = vld [vmem:[%s2 + $0x380] sm:$0xff]
      %v1884 = vld [vmem:[%s2 + $0x388] sm:$0xff]
      %v1885 = vld [vmem:[%s2 + $0x390] sm:$0xff]
      %v1886 = vld [vmem:[%s2 + $0x398] sm:$0xff]
      %v1887 = vld [vmem:[%s2 + $0x3a0] sm:$0xff]
      %v1888 = vld [vmem:[%s2 + $0x3a8] sm:$0xff]
      %v1889 = vld [vmem:[%s2 + $0x3b0] sm:$0xff]
      %v1890 = vld [vmem:[%s2 + $0x3b8] sm:$0xff]
      %v1891 = vld [vmem:[%s2 + $0x3c0] sm:$0xff]
      %v1892 = vld [vmem:[%s2 + $0x3c8] sm:$0xff]
      %v1893 = vld [vmem:[%s2 + $0x3d0] sm:$0xff]
      %v1894 = vld [vmem:[%s2 + $0x3d8] sm:$0xff]
      %v1895 = vld [vmem:[%s2 + $0x3e0] sm:$0xff]
      %v1896 = vld [vmem:[%s2 + $0x3e8] sm:$0xff]
      %v1897 = vld [vmem:[%s2 + $0x3f0] sm:$0xff]
      %v1898 = vld [vmem:[%s2 + $0x3f8] sm:$0xff]
      %v1899 = vld [vmem:[%s2 + $0x400] sm:$0xff]
      %v1900 = vld [vmem:[%s2 + $0x408] sm:$0xff]
      %v1901 = vld [vmem:[%s2 + $0x410] sm:$0xff]
      %v1902 = vld [vmem:[%s2 + $0x418] sm:$0xff]
      %v1903 = vld [vmem:[%s2 + $0x420] sm:$0xff]
      %v1904 = vld [vmem:[%s2 + $0x428] sm:$0xff]
      %v1905 = vld [vmem:[%s2 + $0x430] sm:$0xff]
      %v1906 = vld [vmem:[%s2 + $0x438] sm:$0xff]
      %v1907 = vld [vmem:[%s2 + $0x440] sm:$0xff]
      %v1908 = vld [vmem:[%s2 + $0x448] sm:$0xff]
      %v1909 = vld [vmem:[%s2 + $0x450] sm:$0xff]
      %v1910 = vld [vmem:[%s2 + $0x458] sm:$0xff]
      %v1911 = vld [vmem:[%s2 + $0x460] sm:$0xff]
      %v1912 = vld [vmem:[%s2 + $0x468] sm:$0xff]
      %v1913 = vld [vmem:[%s2 + $0x470] sm:$0xff]
      %v1914 = vld [vmem:[%s2 + $0x478] sm:$0xff]
      %v1915 = vld [vmem:[%s3] sm:$0x3]
      %v1917 = vperm.slane %v1915, 0
      %v1918 = vperm.slane %v1915, 1
      %v1931 = vunpack.c.l.b16 %v1761
      %v1932 = vunpack.c.h.b16 %v1761
      %v1933 = vunpack.c.l.b16 %v1762
      %v1934 = vunpack.c.h.b16 %v1762
      %v1935 = vunpack.c.l.b16 %v1763
      %v1936 = vunpack.c.h.b16 %v1763
      %v1937 = vunpack.c.l.b16 %v1764
      %v1938 = vunpack.c.h.b16 %v1764
      %v1939 = vunpack.c.l.b16 %v1765
      %v1940 = vunpack.c.l.b16 %v1766
      %v1941 = vunpack.c.h.b16 %v1766
      %v1942 = vunpack.c.l.b16 %v1767
      %v1943 = vunpack.c.h.b16 %v1767
      %v1944 = vunpack.c.l.b16 %v1768
      %v1945 = vunpack.c.h.b16 %v1768
      %v1946 = vunpack.c.l.b16 %v1769
      %v1947 = vunpack.c.h.b16 %v1769
      %v1948 = vunpack.c.l.b16 %v1770
      %v1949 = vpack.c.b16 %v1940, %v1931
      %v1950 = vpack.c.b16 %v1941, %v1932
      %v1951 = vpack.c.b16 %v1942, %v1933
      %v1952 = vpack.c.b16 %v1943, %v1934
      %v1953 = vpack.c.b16 %v1944, %v1935
      %v1954 = vpack.c.b16 %v1945, %v1936
      %v1955 = vpack.c.b16 %v1946, %v1937
      %v1956 = vpack.c.b16 %v1947, %v1938
      %v1957 = vpack.c.b16 %v1948, %v1939
      %v2111 = vunpack.c.l.b16 %v1771
      %v2112 = vunpack.c.h.b16 %v1771
      %v2113 = vunpack.c.l.b16 %v1772
      %v2114 = vunpack.c.h.b16 %v1772
      %v2115 = vunpack.c.l.b16 %v1773
      %v2116 = vunpack.c.h.b16 %v1773
      %v2117 = vunpack.c.l.b16 %v1774
      %v2118 = vunpack.c.h.b16 %v1774
      %v2119 = vunpack.c.l.b16 %v1775
      %v2120 = vunpack.c.h.b16 %v1775
      %v2121 = vunpack.c.l.b16 %v1776
      %v2122 = vunpack.c.h.b16 %v1776
      %v2123 = vunpack.c.l.b16 %v1777
      %v2124 = vunpack.c.h.b16 %v1777
      %v2125 = vunpack.c.l.b16 %v1778
      %v2126 = vunpack.c.h.b16 %v1778
      %v2127 = vunpack.c.l.b16 %v1779
      %v2128 = vunpack.c.h.b16 %v1779
      %v2129 = vunpack.c.l.b16 %v1780
      %v2130 = vunpack.c.h.b16 %v1780
      %v2131 = vunpack.c.l.b16 %v1781
      %v2132 = vunpack.c.h.b16 %v1781
      %v2133 = vunpack.c.l.b16 %v1782
      %v2134 = vunpack.c.h.b16 %v1782
      %v2135 = vunpack.c.l.b16 %v1783
      %v2136 = vunpack.c.h.b16 %v1783
      %v2137 = vunpack.c.l.b16 %v1784
      %v2138 = vunpack.c.h.b16 %v1784
      %v2139 = vunpack.c.l.b16 %v1785
      %v2140 = vunpack.c.h.b16 %v1785
      %v2141 = vunpack.c.l.b16 %v1786
      %v2142 = vunpack.c.h.b16 %v1786
      %v2143 = vunpack.c.l.b16 %v1787
      %v2144 = vunpack.c.h.b16 %v1787
      %v2145 = vunpack.c.l.b16 %v1788
      %v2146 = vunpack.c.h.b16 %v1788
      %v2147 = vunpack.c.l.b16 %v1789
      %v2148 = vunpack.c.h.b16 %v1789
      %v2149 = vunpack.c.l.b16 %v1790
      %v2150 = vunpack.c.h.b16 %v1790
      %v2151 = vunpack.c.l.b16 %v1791
      %v2152 = vunpack.c.h.b16 %v1791
      %v2153 = vunpack.c.l.b16 %v1792
      %v2154 = vunpack.c.h.b16 %v1792
      %v2155 = vunpack.c.l.b16 %v1793
      %v2156 = vunpack.c.h.b16 %v1793
      %v2157 = vunpack.c.l.b16 %v1794
      %v2158 = vunpack.c.h.b16 %v1794
      %v2159 = vunpack.c.l.b16 %v1795
      %v2160 = vunpack.c.h.b16 %v1795
      %v2161 = vunpack.c.l.b16 %v1796
      %v2162 = vunpack.c.h.b16 %v1796
      %v2163 = vunpack.c.l.b16 %v1797
      %v2164 = vunpack.c.h.b16 %v1797
      %v2165 = vunpack.c.l.b16 %v1798
      %v2166 = vunpack.c.h.b16 %v1798
      %v2167 = vunpack.c.l.b16 %v1799
      %v2168 = vunpack.c.h.b16 %v1799
      %v2169 = vunpack.c.l.b16 %v1800
      %v2170 = vunpack.c.h.b16 %v1800
      %v2171 = vunpack.c.l.b16 %v1801
      %v2172 = vunpack.c.h.b16 %v1801
      %v2173 = vunpack.c.l.b16 %v1802
      %v2174 = vunpack.c.h.b16 %v1802
      %v2175 = vunpack.c.l.b16 %v1803
      %v2176 = vunpack.c.h.b16 %v1803
      %v2177 = vunpack.c.l.b16 %v1804
      %v2178 = vunpack.c.h.b16 %v1804
      %v2179 = vunpack.c.l.b16 %v1805
      %v2180 = vunpack.c.h.b16 %v1805
      %v2181 = vunpack.c.l.b16 %v1806
      %v2182 = vunpack.c.h.b16 %v1806
      %v2183 = vunpack.c.l.b16 %v1807
      %v2184 = vunpack.c.h.b16 %v1807
      %v2185 = vunpack.c.l.b16 %v1808
      %v2186 = vunpack.c.h.b16 %v1808
      %v2187 = vunpack.c.l.b16 %v1809
      %v2188 = vunpack.c.h.b16 %v1809
      %v2189 = vunpack.c.l.b16 %v1810
      %v2190 = vunpack.c.h.b16 %v1810
      %v2191 = vunpack.c.l.b16 %v1811
      %v2192 = vunpack.c.h.b16 %v1811
      %v2193 = vunpack.c.l.b16 %v1812
      %v2194 = vunpack.c.h.b16 %v1812
      %v2195 = vunpack.c.l.b16 %v1813
      %v2196 = vunpack.c.h.b16 %v1813
      %v2197 = vunpack.c.l.b16 %v1814
      %v2198 = vunpack.c.h.b16 %v1814
      %v2199 = vunpack.c.l.b16 %v1815
      %v2200 = vunpack.c.h.b16 %v1815
      %v2201 = vunpack.c.l.b16 %v1816
      %v2202 = vunpack.c.h.b16 %v1816
      %v2203 = vunpack.c.l.b16 %v1817
      %v2204 = vunpack.c.h.b16 %v1817
      %v2205 = vunpack.c.l.b16 %v1818
      %v2206 = vunpack.c.h.b16 %v1818
      %v2207 = vunpack.c.l.b16 %v1819
      %v2208 = vunpack.c.h.b16 %v1819
      %v2209 = vunpack.c.l.b16 %v1820
      %v2210 = vunpack.c.h.b16 %v1820
      %v2211 = vunpack.c.l.b16 %v1821
      %v2212 = vunpack.c.h.b16 %v1821
      %v2213 = vunpack.c.l.b16 %v1822
      %v2214 = vunpack.c.h.b16 %v1822
      %v2215 = vunpack.c.l.b16 %v1823
      %v2216 = vunpack.c.h.b16 %v1823
      %v2217 = vunpack.c.l.b16 %v1824
      %v2218 = vunpack.c.h.b16 %v1824
      %v2219 = vunpack.c.l.b16 %v1825
      %v2220 = vunpack.c.h.b16 %v1825
      %v2221 = vunpack.c.l.b16 %v1826
      %v2222 = vunpack.c.h.b16 %v1826
      %v2223 = vunpack.c.l.b16 %v1827
      %v2224 = vunpack.c.h.b16 %v1827
      %v2225 = vunpack.c.l.b16 %v1828
      %v2226 = vunpack.c.h.b16 %v1828
      %v2227 = vunpack.c.l.b16 %v1829
      %v2228 = vunpack.c.h.b16 %v1829
      %v2229 = vunpack.c.l.b16 %v1830
      %v2230 = vunpack.c.h.b16 %v1830
      %v2231 = vunpack.c.l.b16 %v1831
      %v2232 = vunpack.c.h.b16 %v1831
      %v2233 = vunpack.c.l.b16 %v1832
      %v2234 = vunpack.c.h.b16 %v1832
      %v2235 = vunpack.c.l.b16 %v1833
      %v2236 = vunpack.c.h.b16 %v1833
      %v2237 = vunpack.c.l.b16 %v1834
      %v2238 = vunpack.c.h.b16 %v1834
      %v2239 = vunpack.c.l.b16 %v1835
      %v2240 = vunpack.c.h.b16 %v1835
      %v2241 = vunpack.c.l.b16 %v1836
      %v2242 = vunpack.c.h.b16 %v1836
      %v2243 = vunpack.c.l.b16 %v1837
      %v2244 = vunpack.c.h.b16 %v1837
      %v2245 = vunpack.c.l.b16 %v1838
      %v2246 = vunpack.c.h.b16 %v1838
      %v2247 = vunpack.c.l.b16 %v1839
      %v2248 = vunpack.c.h.b16 %v1839
      %v2249 = vunpack.c.l.b16 %v1840
      %v2250 = vunpack.c.h.b16 %v1840
      %v2251 = vunpack.c.l.b16 %v1841
      %v2252 = vunpack.c.h.b16 %v1841
      %v2253 = vunpack.c.l.b16 %v1842
      %v2254 = vunpack.c.h.b16 %v1842
      %v2255 = vunpack.c.l.b16 %v1843
      %v2256 = vunpack.c.h.b16 %v1843
      %v2257 = vunpack.c.l.b16 %v1844
      %v2258 = vunpack.c.h.b16 %v1844
      %v2259 = vunpack.c.l.b16 %v1845
      %v2260 = vunpack.c.h.b16 %v1845
      %v2261 = vunpack.c.l.b16 %v1846
      %v2262 = vunpack.c.h.b16 %v1846
      %v2263 = vunpack.c.l.b16 %v1847
      %v2264 = vunpack.c.h.b16 %v1847
      %v2265 = vunpack.c.l.b16 %v1848
      %v2266 = vunpack.c.h.b16 %v1848
      %v2267 = vunpack.c.l.b16 %v1849
      %v2268 = vunpack.c.h.b16 %v1849
      %v2269 = vunpack.c.l.b16 %v1850
      %v2270 = vunpack.c.h.b16 %v1850
      %v2271 = vunpack.c.l.b16 %v1851
      %v2272 = vunpack.c.h.b16 %v1851
      %v2273 = vunpack.c.l.b16 %v1852
      %v2274 = vunpack.c.h.b16 %v1852
      %v2275 = vunpack.c.l.b16 %v1853
      %v2276 = vunpack.c.h.b16 %v1853
      %v2277 = vunpack.c.l.b16 %v1854
      %v2278 = vunpack.c.h.b16 %v1854
      %v2279 = vunpack.c.l.b16 %v1855
      %v2280 = vunpack.c.h.b16 %v1855
      %v2281 = vunpack.c.l.b16 %v1856
      %v2282 = vunpack.c.h.b16 %v1856
      %v2283 = vunpack.c.l.b16 %v1857
      %v2284 = vunpack.c.h.b16 %v1857
      %v2285 = vunpack.c.l.b16 %v1858
      %v2286 = vunpack.c.h.b16 %v1858
      %v2287 = vunpack.c.l.b16 %v1859
      %v2288 = vunpack.c.h.b16 %v1859
      %v2289 = vunpack.c.l.b16 %v1860
      %v2290 = vunpack.c.h.b16 %v1860
      %v2291 = vunpack.c.l.b16 %v1861
      %v2292 = vunpack.c.h.b16 %v1861
      %v2293 = vunpack.c.l.b16 %v1862
      %v2294 = vunpack.c.h.b16 %v1862
      %v2295 = vunpack.c.l.b16 %v1863
      %v2296 = vunpack.c.h.b16 %v1863
      %v2297 = vunpack.c.l.b16 %v1864
      %v2298 = vunpack.c.h.b16 %v1864
      %v2299 = vunpack.c.l.b16 %v1865
      %v2300 = vunpack.c.h.b16 %v1865
      %v2301 = vunpack.c.l.b16 %v1866
      %v2302 = vunpack.c.h.b16 %v1866
      %v2303 = vunpack.c.l.b16 %v1867
      %v2304 = vunpack.c.h.b16 %v1867
      %v2305 = vunpack.c.l.b16 %v1868
      %v2306 = vunpack.c.h.b16 %v1868
      %v2307 = vunpack.c.l.b16 %v1869
      %v2308 = vunpack.c.h.b16 %v1869
      %v2309 = vunpack.c.l.b16 %v1870
      %v2310 = vunpack.c.h.b16 %v1870
      %v2311 = vunpack.c.l.b16 %v1871
      %v2312 = vunpack.c.h.b16 %v1871
      %v2313 = vunpack.c.l.b16 %v1872
      %v2314 = vunpack.c.h.b16 %v1872
      %v2315 = vunpack.c.l.b16 %v1873
      %v2316 = vunpack.c.h.b16 %v1873
      %v2317 = vunpack.c.l.b16 %v1874
      %v2318 = vunpack.c.h.b16 %v1874
      %v2319 = vunpack.c.l.b16 %v1875
      %v2320 = vunpack.c.h.b16 %v1875
      %v2321 = vunpack.c.l.b16 %v1876
      %v2322 = vunpack.c.h.b16 %v1876
      %v2323 = vunpack.c.l.b16 %v1877
      %v2324 = vunpack.c.h.b16 %v1877
      %v2325 = vunpack.c.l.b16 %v1878
      %v2326 = vunpack.c.h.b16 %v1878
      %v2327 = vunpack.c.l.b16 %v1879
      %v2328 = vunpack.c.h.b16 %v1879
      %v2329 = vunpack.c.l.b16 %v1880
      %v2330 = vunpack.c.h.b16 %v1880
      %v2331 = vunpack.c.l.b16 %v1881
      %v2332 = vunpack.c.h.b16 %v1881
      %v2333 = vunpack.c.l.b16 %v1882
      %v2334 = vunpack.c.h.b16 %v1882
      %v2335 = vunpack.c.l.b16 %v1883
      %v2336 = vunpack.c.h.b16 %v1883
      %v2337 = vunpack.c.l.b16 %v1884
      %v2338 = vunpack.c.h.b16 %v1884
      %v2339 = vunpack.c.l.b16 %v1885
      %v2340 = vunpack.c.h.b16 %v1885
      %v2341 = vunpack.c.l.b16 %v1886
      %v2342 = vunpack.c.h.b16 %v1886
      %v2343 = vunpack.c.l.b16 %v1887
      %v2344 = vunpack.c.h.b16 %v1887
      %v2345 = vunpack.c.l.b16 %v1888
      %v2346 = vunpack.c.h.b16 %v1888
      %v2347 = vunpack.c.l.b16 %v1889
      %v2348 = vunpack.c.h.b16 %v1889
      %v2349 = vunpack.c.l.b16 %v1890
      %v2350 = vunpack.c.h.b16 %v1890
      %v2351 = vunpack.c.l.b16 %v1891
      %v2352 = vunpack.c.h.b16 %v1891
      %v2353 = vunpack.c.l.b16 %v1892
      %v2354 = vunpack.c.h.b16 %v1892
      %v2355 = vunpack.c.l.b16 %v1893
      %v2356 = vunpack.c.h.b16 %v1893
      %v2357 = vunpack.c.l.b16 %v1894
      %v2358 = vunpack.c.h.b16 %v1894
      %v2359 = vunpack.c.l.b16 %v1895
      %v2360 = vunpack.c.h.b16 %v1895
      %v2361 = vunpack.c.l.b16 %v1896
      %v2362 = vunpack.c.h.b16 %v1896
      %v2363 = vunpack.c.l.b16 %v1897
      %v2364 = vunpack.c.h.b16 %v1897
      %v2365 = vunpack.c.l.b16 %v1898
      %v2366 = vunpack.c.h.b16 %v1898
      %v2367 = vunpack.c.l.b16 %v1899
      %v2368 = vunpack.c.h.b16 %v1899
      %v2369 = vunpack.c.l.b16 %v1900
      %v2370 = vunpack.c.h.b16 %v1900
      %v2371 = vunpack.c.l.b16 %v1901
      %v2372 = vunpack.c.h.b16 %v1901
      %v2373 = vunpack.c.l.b16 %v1902
      %v2374 = vunpack.c.h.b16 %v1902
      %v2375 = vunpack.c.l.b16 %v1903
      %v2376 = vunpack.c.h.b16 %v1903
      %v2377 = vunpack.c.l.b16 %v1904
      %v2378 = vunpack.c.h.b16 %v1904
      %v2379 = vunpack.c.l.b16 %v1905
      %v2380 = vunpack.c.h.b16 %v1905
      %v2381 = vunpack.c.l.b16 %v1906
      %v2382 = vunpack.c.h.b16 %v1906
      %v2383 = vunpack.c.l.b16 %v1907
      %v2384 = vunpack.c.h.b16 %v1907
      %v2385 = vunpack.c.l.b16 %v1908
      %v2386 = vunpack.c.h.b16 %v1908
      %v2387 = vunpack.c.l.b16 %v1909
      %v2388 = vunpack.c.h.b16 %v1909
      %v2389 = vunpack.c.l.b16 %v1910
      %v2390 = vunpack.c.h.b16 %v1910
      %v2391 = vunpack.c.l.b16 %v1911
      %v2392 = vunpack.c.h.b16 %v1911
      %v2393 = vunpack.c.l.b16 %v1912
      %v2394 = vunpack.c.h.b16 %v1912
      %v2395 = vunpack.c.l.b16 %v1913
      %v2396 = vunpack.c.h.b16 %v1913
      %v2397 = vunpack.c.l.b16 %v1914
      %v2398 = vunpack.c.h.b16 %v1914
      %v2399 = vpack.c.b16 %v2113, %v2111
      %v2400 = vpack.c.b16 %v2114, %v2112
      %v2401 = vpack.c.b16 %v2117, %v2115
      %v2402 = vpack.c.b16 %v2118, %v2116
      %v2403 = vpack.c.b16 %v2121, %v2119
      %v2404 = vpack.c.b16 %v2122, %v2120
      %v2405 = vpack.c.b16 %v2125, %v2123
      %v2406 = vpack.c.b16 %v2126, %v2124
      %v2407 = vpack.c.b16 %v2129, %v2127
      %v2408 = vpack.c.b16 %v2130, %v2128
      %v2409 = vpack.c.b16 %v2133, %v2131
      %v2410 = vpack.c.b16 %v2134, %v2132
      %v2411 = vpack.c.b16 %v2137, %v2135
      %v2412 = vpack.c.b16 %v2138, %v2136
      %v2413 = vpack.c.b16 %v2141, %v2139
      %v2414 = vpack.c.b16 %v2142, %v2140
      %v2415 = vpack.c.b16 %v2145, %v2143
      %v2416 = vpack.c.b16 %v2146, %v2144
      %v2417 = vpack.c.b16 %v2149, %v2147
      %v2418 = vpack.c.b16 %v2150, %v2148
      %v2419 = vpack.c.b16 %v2153, %v2151
      %v2420 = vpack.c.b16 %v2154, %v2152
      %v2421 = vpack.c.b16 %v2157, %v2155
      %v2422 = vpack.c.b16 %v2158, %v2156
      %v2423 = vpack.c.b16 %v2161, %v2159
      %v2424 = vpack.c.b16 %v2162, %v2160
      %v2425 = vpack.c.b16 %v2165, %v2163
      %v2426 = vpack.c.b16 %v2166, %v2164
      %v2427 = vpack.c.b16 %v2169, %v2167
      %v2428 = vpack.c.b16 %v2170, %v2168
      %v2429 = vpack.c.b16 %v2173, %v2171
      %v2430 = vpack.c.b16 %v2174, %v2172
      %v2431 = vpack.c.b16 %v2177, %v2175
      %v2432 = vpack.c.b16 %v2178, %v2176
      %v2433 = vpack.c.b16 %v2181, %v2179
      %v2434 = vpack.c.b16 %v2182, %v2180
      %v2435 = vpack.c.b16 %v2185, %v2183
      %v2436 = vpack.c.b16 %v2186, %v2184
      %v2437 = vpack.c.b16 %v2189, %v2187
      %v2438 = vpack.c.b16 %v2190, %v2188
      %v2439 = vpack.c.b16 %v2193, %v2191
      %v2440 = vpack.c.b16 %v2194, %v2192
      %v2441 = vpack.c.b16 %v2197, %v2195
      %v2442 = vpack.c.b16 %v2198, %v2196
      %v2443 = vpack.c.b16 %v2201, %v2199
      %v2444 = vpack.c.b16 %v2202, %v2200
      %v2445 = vpack.c.b16 %v2205, %v2203
      %v2446 = vpack.c.b16 %v2206, %v2204
      %v2447 = vpack.c.b16 %v2209, %v2207
      %v2448 = vpack.c.b16 %v2210, %v2208
      %v2449 = vpack.c.b16 %v2213, %v2211
      %v2450 = vpack.c.b16 %v2214, %v2212
      %v2451 = vpack.c.b16 %v2217, %v2215
      %v2452 = vpack.c.b16 %v2218, %v2216
      %v2453 = vpack.c.b16 %v2221, %v2219
      %v2454 = vpack.c.b16 %v2222, %v2220
      %v2455 = vpack.c.b16 %v2225, %v2223
      %v2456 = vpack.c.b16 %v2226, %v2224
      %v2457 = vpack.c.b16 %v2229, %v2227
      %v2458 = vpack.c.b16 %v2230, %v2228
      %v2459 = vpack.c.b16 %v2233, %v2231
      %v2460 = vpack.c.b16 %v2234, %v2232
      %v2461 = vpack.c.b16 %v2237, %v2235
      %v2462 = vpack.c.b16 %v2238, %v2236
      %v2463 = vpack.c.b16 %v2241, %v2239
      %v2464 = vpack.c.b16 %v2242, %v2240
      %v2465 = vpack.c.b16 %v2245, %v2243
      %v2466 = vpack.c.b16 %v2246, %v2244
      %v2467 = vpack.c.b16 %v2249, %v2247
      %v2468 = vpack.c.b16 %v2250, %v2248
      %v2469 = vpack.c.b16 %v2253, %v2251
      %v2470 = vpack.c.b16 %v2254, %v2252
      %v2471 = vpack.c.b16 %v2257, %v2255
      %v2472 = vpack.c.b16 %v2258, %v2256
      %v2473 = vpack.c.b16 %v2261, %v2259
      %v2474 = vpack.c.b16 %v2262, %v2260
      %v2475 = vpack.c.b16 %v2265, %v2263
      %v2476 = vpack.c.b16 %v2266, %v2264
      %v2477 = vpack.c.b16 %v2269, %v2267
      %v2478 = vpack.c.b16 %v2270, %v2268
      %v2479 = vpack.c.b16 %v2273, %v2271
      %v2480 = vpack.c.b16 %v2274, %v2272
      %v2481 = vpack.c.b16 %v2277, %v2275
      %v2482 = vpack.c.b16 %v2278, %v2276
      %v2483 = vpack.c.b16 %v2281, %v2279
      %v2484 = vpack.c.b16 %v2282, %v2280
      %v2485 = vpack.c.b16 %v2285, %v2283
      %v2486 = vpack.c.b16 %v2286, %v2284
      %v2487 = vpack.c.b16 %v2289, %v2287
      %v2488 = vpack.c.b16 %v2290, %v2288
      %v2489 = vpack.c.b16 %v2293, %v2291
      %v2490 = vpack.c.b16 %v2294, %v2292
      %v2491 = vpack.c.b16 %v2297, %v2295
      %v2492 = vpack.c.b16 %v2298, %v2296
      %v2493 = vpack.c.b16 %v2301, %v2299
      %v2494 = vpack.c.b16 %v2302, %v2300
      %v2495 = vpack.c.b16 %v2305, %v2303
      %v2496 = vpack.c.b16 %v2306, %v2304
      %v2497 = vpack.c.b16 %v2309, %v2307
      %v2498 = vpack.c.b16 %v2310, %v2308
      %v2499 = vpack.c.b16 %v2313, %v2311
      %v2500 = vpack.c.b16 %v2314, %v2312
      %v2501 = vpack.c.b16 %v2317, %v2315
      %v2502 = vpack.c.b16 %v2318, %v2316
      %v2503 = vpack.c.b16 %v2321, %v2319
      %v2504 = vpack.c.b16 %v2322, %v2320
      %v2505 = vpack.c.b16 %v2325, %v2323
      %v2506 = vpack.c.b16 %v2326, %v2324
      %v2507 = vpack.c.b16 %v2329, %v2327
      %v2508 = vpack.c.b16 %v2330, %v2328
      %v2509 = vpack.c.b16 %v2333, %v2331
      %v2510 = vpack.c.b16 %v2334, %v2332
      %v2511 = vpack.c.b16 %v2337, %v2335
      %v2512 = vpack.c.b16 %v2338, %v2336
      %v2513 = vpack.c.b16 %v2341, %v2339
      %v2514 = vpack.c.b16 %v2342, %v2340
      %v2515 = vpack.c.b16 %v2345, %v2343
      %v2516 = vpack.c.b16 %v2346, %v2344
      %v2517 = vpack.c.b16 %v2349, %v2347
      %v2518 = vpack.c.b16 %v2350, %v2348
      %v2519 = vpack.c.b16 %v2353, %v2351
      %v2520 = vpack.c.b16 %v2354, %v2352
      %v2521 = vpack.c.b16 %v2357, %v2355
      %v2522 = vpack.c.b16 %v2358, %v2356
      %v2523 = vpack.c.b16 %v2361, %v2359
      %v2524 = vpack.c.b16 %v2362, %v2360
      %v2525 = vpack.c.b16 %v2365, %v2363
      %v2526 = vpack.c.b16 %v2366, %v2364
      %v2527 = vpack.c.b16 %v2369, %v2367
      %v2528 = vpack.c.b16 %v2370, %v2368
      %v2529 = vpack.c.b16 %v2373, %v2371
      %v2530 = vpack.c.b16 %v2374, %v2372
      %v2531 = vpack.c.b16 %v2377, %v2375
      %v2532 = vpack.c.b16 %v2378, %v2376
      %v2533 = vpack.c.b16 %v2381, %v2379
      %v2534 = vpack.c.b16 %v2382, %v2380
      %v2535 = vpack.c.b16 %v2385, %v2383
      %v2536 = vpack.c.b16 %v2386, %v2384
      %v2537 = vpack.c.b16 %v2389, %v2387
      %v2538 = vpack.c.b16 %v2390, %v2388
      %v2539 = vpack.c.b16 %v2393, %v2391
      %v2540 = vpack.c.b16 %v2394, %v2392
      %v2541 = vpack.c.b16 %v2397, %v2395
      %v2542 = vpack.c.b16 %v2398, %v2396
      %2687 = vmatpush.bf16.msra.mxu0 %v2413
      %2688 = vmatpush.bf16.msra.mxu0 %v2411
      %2689 = vmatpush.bf16.msra.mxu0 %v2409
      %2690 = vmatpush.bf16.msra.mxu0 %v2407
      %2691 = vmatpush.bf16.msra.mxu0 %v2405
      %2692 = vmatpush.bf16.msra.mxu0 %v2403
      %2693 = vmatpush.bf16.msra.mxu0 %v2401
      %2694 = vmatpush.bf16.msra.mxu0 %v2399
      %2695 = vmatmul.bf16.gmra.mxu0 %v1949
      %v2696 = vpop.f32.mrf.mxu0
      %v2697 = vadd.f32 %v1917, %v2696
      %v2698 = vpop.f32.mrf.mxu0
      %v2699 = vadd.f32 %v1917, %v2698
      %2700 = vdwg.mxu0
      %2701 = vmatpush.bf16.msra.mxu0 %v2429
      %2702 = vmatpush.bf16.msra.mxu0 %v2427
      %2703 = vmatpush.bf16.msra.mxu0 %v2425
      %2704 = vmatpush.bf16.msra.mxu0 %v2423
      %2705 = vmatpush.bf16.msra.mxu0 %v2421
      %2706 = vmatpush.bf16.msra.mxu0 %v2419
      %2707 = vmatpush.bf16.msra.mxu0 %v2417
      %2708 = vmatpush.bf16.msra.mxu0 %v2415
      %2709 = vmatmul.bf16.gmra.mxu0 %v1950
      %v2710 = vpop.f32.mrf.mxu0
      %v2711 = vadd.f32 %v2697, %v2710
      %v2712 = vpop.f32.mrf.mxu0
      %v2713 = vadd.f32 %v2699, %v2712
      %2714 = vdwg.mxu0
      %2715 = vmatpush.bf16.msra.mxu0 %v2445
      %2716 = vmatpush.bf16.msra.mxu0 %v2443
      %2717 = vmatpush.bf16.msra.mxu0 %v2441
      %2718 = vmatpush.bf16.msra.mxu0 %v2439
      %2719 = vmatpush.bf16.msra.mxu0 %v2437
      %2720 = vmatpush.bf16.msra.mxu0 %v2435
      %2721 = vmatpush.bf16.msra.mxu0 %v2433
      %2722 = vmatpush.bf16.msra.mxu0 %v2431
      %2723 = vmatmul.bf16.gmra.mxu0 %v1951
      %v2724 = vpop.f32.mrf.mxu0
      %v2725 = vadd.f32 %v2711, %v2724
      %v2726 = vpop.f32.mrf.mxu0
      %v2727 = vadd.f32 %v2713, %v2726
      %2728 = vdwg.mxu0
      %2729 = vmatpush.bf16.msra.mxu0 %v2461
      %2730 = vmatpush.bf16.msra.mxu0 %v2459
      %2731 = vmatpush.bf16.msra.mxu0 %v2457
      %2732 = vmatpush.bf16.msra.mxu0 %v2455
      %2733 = vmatpush.bf16.msra.mxu0 %v2453
      %2734 = vmatpush.bf16.msra.mxu0 %v2451
      %2735 = vmatpush.bf16.msra.mxu0 %v2449
      %2736 = vmatpush.bf16.msra.mxu0 %v2447
      %2737 = vmatmul.bf16.gmra.mxu0 %v1952
      %v2738 = vpop.f32.mrf.mxu0
      %v2739 = vadd.f32 %v2725, %v2738
      %v2740 = vpop.f32.mrf.mxu0
      %v2741 = vadd.f32 %v2727, %v2740
      %2742 = vdwg.mxu0
      %2743 = vmatpush.bf16.msra.mxu0 %v2477
      %2744 = vmatpush.bf16.msra.mxu0 %v2475
      %2745 = vmatpush.bf16.msra.mxu0 %v2473
      %2746 = vmatpush.bf16.msra.mxu0 %v2471
      %2747 = vmatpush.bf16.msra.mxu0 %v2469
      %2748 = vmatpush.bf16.msra.mxu0 %v2467
      %2749 = vmatpush.bf16.msra.mxu0 %v2465
      %2750 = vmatpush.bf16.msra.mxu0 %v2463
      %2751 = vmatmul.bf16.gmra.mxu0 %v1953
      %v2752 = vpop.f32.mrf.mxu0
      %v2753 = vadd.f32 %v2739, %v2752
      %v2754 = vpop.f32.mrf.mxu0
      %v2755 = vadd.f32 %v2741, %v2754
      %2756 = vdwg.mxu0
      %2757 = vmatpush.bf16.msra.mxu0 %v2493
      %2758 = vmatpush.bf16.msra.mxu0 %v2491
      %2759 = vmatpush.bf16.msra.mxu0 %v2489
      %2760 = vmatpush.bf16.msra.mxu0 %v2487
      %2761 = vmatpush.bf16.msra.mxu0 %v2485
      %2762 = vmatpush.bf16.msra.mxu0 %v2483
      %2763 = vmatpush.bf16.msra.mxu0 %v2481
      %2764 = vmatpush.bf16.msra.mxu0 %v2479
      %2765 = vmatmul.bf16.gmra.mxu0 %v1954
      %v2766 = vpop.f32.mrf.mxu0
      %v2767 = vadd.f32 %v2753, %v2766
      %v2768 = vpop.f32.mrf.mxu0
      %v2769 = vadd.f32 %v2755, %v2768
      %2770 = vdwg.mxu0
      %2771 = vmatpush.bf16.msra.mxu0 %v2509
      %2772 = vmatpush.bf16.msra.mxu0 %v2507
      %2773 = vmatpush.bf16.msra.mxu0 %v2505
      %2774 = vmatpush.bf16.msra.mxu0 %v2503
      %2775 = vmatpush.bf16.msra.mxu0 %v2501
      %2776 = vmatpush.bf16.msra.mxu0 %v2499
      %2777 = vmatpush.bf16.msra.mxu0 %v2497
      %2778 = vmatpush.bf16.msra.mxu0 %v2495
      %2779 = vmatmul.bf16.gmra.mxu0 %v1955
      %v2780 = vpop.f32.mrf.mxu0
      %v2781 = vadd.f32 %v2767, %v2780
      %v2782 = vpop.f32.mrf.mxu0
      %v2783 = vadd.f32 %v2769, %v2782
      %2784 = vdwg.mxu0
      %2785 = vmatpush.bf16.msra.mxu0 %v2525
      %2786 = vmatpush.bf16.msra.mxu0 %v2523
      %2787 = vmatpush.bf16.msra.mxu0 %v2521
      %2788 = vmatpush.bf16.msra.mxu0 %v2519
      %2789 = vmatpush.bf16.msra.mxu0 %v2517
      %2790 = vmatpush.bf16.msra.mxu0 %v2515
      %2791 = vmatpush.bf16.msra.mxu0 %v2513
      %2792 = vmatpush.bf16.msra.mxu0 %v2511
      %2793 = vmatmul.bf16.gmra.mxu0 %v1956
      %v2794 = vpop.f32.mrf.mxu0
      %v2795 = vadd.f32 %v2781, %v2794
      %v2796 = vpop.f32.mrf.mxu0
      %v2797 = vadd.f32 %v2783, %v2796
      %2798 = vdwg.mxu0
      %2799 = vmatpush.bf16.msra.mxu0 %v2541
      %2800 = vmatpush.bf16.msra.mxu0 %v2539
      %2801 = vmatpush.bf16.msra.mxu0 %v2537
      %2802 = vmatpush.bf16.msra.mxu0 %v2535
      %2803 = vmatpush.bf16.msra.mxu0 %v2533
      %2804 = vmatpush.bf16.msra.mxu0 %v2531
      %2805 = vmatpush.bf16.msra.mxu0 %v2529
      %2806 = vmatpush.bf16.msra.mxu0 %v2527
      %2807 = vmatmul.bf16.gmra.mxu0 %v1957
      %v2808 = vpop.f32.mrf.mxu0
      %v2809 = vadd.f32 %v2795, %v2808
      %v2810 = vpop.f32.mrf.mxu0
      %v2811 = vadd.f32 %v2797, %v2810
      %2812 = vdwg.mxu0
      %2813 = vmatpush.bf16.msra.mxu0 %v2414
      %2814 = vmatpush.bf16.msra.mxu0 %v2412
      %2815 = vmatpush.bf16.msra.mxu0 %v2410
      %2816 = vmatpush.bf16.msra.mxu0 %v2408
      %2817 = vmatpush.bf16.msra.mxu0 %v2406
      %2818 = vmatpush.bf16.msra.mxu0 %v2404
      %2819 = vmatpush.bf16.msra.mxu0 %v2402
      %2820 = vmatpush.bf16.msra.mxu0 %v2400
      %2821 = vmatmul.bf16.gmra.mxu0 %v1949
      %v2822 = vpop.f32.mrf.mxu0
      %v2823 = vadd.f32 %v1918, %v2822
      %v2824 = vpop.f32.mrf.mxu0
      %v2825 = vadd.f32 %v1918, %v2824
      %2826 = vdwg.mxu0
      %2827 = vmatpush.bf16.msra.mxu0 %v2430
      %2828 = vmatpush.bf16.msra.mxu0 %v2428
      %2829 = vmatpush.bf16.msra.mxu0 %v2426
      %2830 = vmatpush.bf16.msra.mxu0 %v2424
      %2831 = vmatpush.bf16.msra.mxu0 %v2422
      %2832 = vmatpush.bf16.msra.mxu0 %v2420
      %2833 = vmatpush.bf16.msra.mxu0 %v2418
      %2834 = vmatpush.bf16.msra.mxu0 %v2416
      %2835 = vmatmul.bf16.gmra.mxu0 %v1950
      %v2836 = vpop.f32.mrf.mxu0
      %v2837 = vadd.f32 %v2823, %v2836
      %v2838 = vpop.f32.mrf.mxu0
      %v2839 = vadd.f32 %v2825, %v2838
      %2840 = vdwg.mxu0
      %2841 = vmatpush.bf16.msra.mxu0 %v2446
      %2842 = vmatpush.bf16.msra.mxu0 %v2444
      %2843 = vmatpush.bf16.msra.mxu0 %v2442
      %2844 = vmatpush.bf16.msra.mxu0 %v2440
      %2845 = vmatpush.bf16.msra.mxu0 %v2438
      %2846 = vmatpush.bf16.msra.mxu0 %v2436
      %2847 = vmatpush.bf16.msra.mxu0 %v2434
      %2848 = vmatpush.bf16.msra.mxu0 %v2432
      %2849 = vmatmul.bf16.gmra.mxu0 %v1951
      %v2850 = vpop.f32.mrf.mxu0
      %v2851 = vadd.f32 %v2837, %v2850
      %v2852 = vpop.f32.mrf.mxu0
      %v2853 = vadd.f32 %v2839, %v2852
      %2854 = vdwg.mxu0
      %2855 = vmatpush.bf16.msra.mxu0 %v2462
      %2856 = vmatpush.bf16.msra.mxu0 %v2460
      %2857 = vmatpush.bf16.msra.mxu0 %v2458
      %2858 = vmatpush.bf16.msra.mxu0 %v2456
      %2859 = vmatpush.bf16.msra.mxu0 %v2454
      %2860 = vmatpush.bf16.msra.mxu0 %v2452
      %2861 = vmatpush.bf16.msra.mxu0 %v2450
      %2862 = vmatpush.bf16.msra.mxu0 %v2448
      %2863 = vmatmul.bf16.gmra.mxu0 %v1952
      %v2864 = vpop.f32.mrf.mxu0
      %v2865 = vadd.f32 %v2851, %v2864
      %v2866 = vpop.f32.mrf.mxu0
      %v2867 = vadd.f32 %v2853, %v2866
      %2868 = vdwg.mxu0
      %2869 = vmatpush.bf16.msra.mxu0 %v2478
      %2870 = vmatpush.bf16.msra.mxu0 %v2476
      %2871 = vmatpush.bf16.msra.mxu0 %v2474
      %2872 = vmatpush.bf16.msra.mxu0 %v2472
      %2873 = vmatpush.bf16.msra.mxu0 %v2470
      %2874 = vmatpush.bf16.msra.mxu0 %v2468
      %2875 = vmatpush.bf16.msra.mxu0 %v2466
      %2876 = vmatpush.bf16.msra.mxu0 %v2464
      %2877 = vmatmul.bf16.gmra.mxu0 %v1953
      %v2878 = vpop.f32.mrf.mxu0
      %v2879 = vadd.f32 %v2865, %v2878
      %v2880 = vpop.f32.mrf.mxu0
      %v2881 = vadd.f32 %v2867, %v2880
      %2882 = vdwg.mxu0
      %2883 = vmatpush.bf16.msra.mxu0 %v2494
      %2884 = vmatpush.bf16.msra.mxu0 %v2492
      %2885 = vmatpush.bf16.msra.mxu0 %v2490
      %2886 = vmatpush.bf16.msra.mxu0 %v2488
      %2887 = vmatpush.bf16.msra.mxu0 %v2486
      %2888 = vmatpush.bf16.msra.mxu0 %v2484
      %2889 = vmatpush.bf16.msra.mxu0 %v2482
      %2890 = vmatpush.bf16.msra.mxu0 %v2480
      %2891 = vmatmul.bf16.gmra.mxu0 %v1954
      %v2892 = vpop.f32.mrf.mxu0
      %v2893 = vadd.f32 %v2879, %v2892
      %v2894 = vpop.f32.mrf.mxu0
      %v2895 = vadd.f32 %v2881, %v2894
      %2896 = vdwg.mxu0
      %2897 = vmatpush.bf16.msra.mxu0 %v2510
      %2898 = vmatpush.bf16.msra.mxu0 %v2508
      %2899 = vmatpush.bf16.msra.mxu0 %v2506
      %2900 = vmatpush.bf16.msra.mxu0 %v2504
      %2901 = vmatpush.bf16.msra.mxu0 %v2502
      %2902 = vmatpush.bf16.msra.mxu0 %v2500
      %2903 = vmatpush.bf16.msra.mxu0 %v2498
      %2904 = vmatpush.bf16.msra.mxu0 %v2496
      %2905 = vmatmul.bf16.gmra.mxu0 %v1955
      %v2906 = vpop.f32.mrf.mxu0
      %v2907 = vadd.f32 %v2893, %v2906
      %v2908 = vpop.f32.mrf.mxu0
      %v2909 = vadd.f32 %v2895, %v2908
      %2910 = vdwg.mxu0
      %2911 = vmatpush.bf16.msra.mxu0 %v2526
      %2912 = vmatpush.bf16.msra.mxu0 %v2524
      %2913 = vmatpush.bf16.msra.mxu0 %v2522
      %2914 = vmatpush.bf16.msra.mxu0 %v2520
      %2915 = vmatpush.bf16.msra.mxu0 %v2518
      %2916 = vmatpush.bf16.msra.mxu0 %v2516
      %2917 = vmatpush.bf16.msra.mxu0 %v2514
      %2918 = vmatpush.bf16.msra.mxu0 %v2512
      %2919 = vmatmul.bf16.gmra.mxu0 %v1956
      %v2920 = vpop.f32.mrf.mxu0
      %v2921 = vadd.f32 %v2907, %v2920
      %v2922 = vpop.f32.mrf.mxu0
      %v2923 = vadd.f32 %v2909, %v2922
      %2924 = vdwg.mxu0
      %2925 = vmatpush.bf16.msra.mxu0 %v2542
      %2926 = vmatpush.bf16.msra.mxu0 %v2540
      %2927 = vmatpush.bf16.msra.mxu0 %v2538
      %2928 = vmatpush.bf16.msra.mxu0 %v2536
      %2929 = vmatpush.bf16.msra.mxu0 %v2534
      %2930 = vmatpush.bf16.msra.mxu0 %v2532
      %2931 = vmatpush.bf16.msra.mxu0 %v2530
      %2932 = vmatpush.bf16.msra.mxu0 %v2528
      %2933 = vmatmul.bf16.gmra.mxu0 %v1957
      %v2934 = vpop.f32.mrf.mxu0
      %v2935 = vadd.f32 %v2921, %v2934
      %v2936 = vpop.f32.mrf.mxu0
      %v2937 = vadd.f32 %v2923, %v2936
      %2938 = vdwg.mxu0
      %v2939 = vmax.f32 %v2809, 0.0
      %v2940 = vmax.f32 %v2935, 0.0
      %v2941 = vmax.f32 %v2811, 0.0
      %v2942 = vmax.f32 %v2937, 0.0
      %v2943 = vpack.c.bf16 %v2941, %v2939
      %v2944 = vpack.c.bf16 %v2942, %v2940
      %v2945 = vld [vmem:[%s4] sm:$0xf]
      %v2946 = vld [vmem:[%s4 + $0x4] sm:$0xf]
      %v2947 = vld [vmem:[%s4 + $0x8] sm:$0xf]
      %v2948 = vld [vmem:[%s4 + $0xc] sm:$0xf]
      %v2949 = vld [vmem:[%s4 + $0x10] sm:$0xf]
      %v2950 = vld [vmem:[%s4 + $0x14] sm:$0xf]
      %v2951 = vld [vmem:[%s4 + $0x18] sm:$0xf]
      %v2952 = vld [vmem:[%s4 + $0x1c] sm:$0xf]
      %v2953 = vld [vmem:[%s4 + $0x20] sm:$0xf]
      %v2954 = vld [vmem:[%s4 + $0x24] sm:$0xf]
      %v2955 = vld [vmem:[%s4 + $0x28] sm:$0xf]
      %v2956 = vld [vmem:[%s4 + $0x2c] sm:$0xf]
      %v2957 = vld [vmem:[%s4 + $0x30] sm:$0xf]
      %v2958 = vld [vmem:[%s4 + $0x34] sm:$0xf]
      %v2959 = vld [vmem:[%s4 + $0x38] sm:$0xf]
      %v2960 = vld [vmem:[%s4 + $0x3c] sm:$0xf]
      %v2961 = vld [vmem:[%s4 + $0x40] sm:$0xf]
      %v2962 = vld [vmem:[%s4 + $0x44] sm:$0xf]
      %v2963 = vld [vmem:[%s4 + $0x48] sm:$0xf]
      %v2964 = vld [vmem:[%s4 + $0x4c] sm:$0xf]
      %v2965 = vld [vmem:[%s4 + $0x50] sm:$0xf]
      %v2966 = vld [vmem:[%s4 + $0x54] sm:$0xf]
      %v2967 = vld [vmem:[%s4 + $0x58] sm:$0xf]
      %v2968 = vld [vmem:[%s4 + $0x5c] sm:$0xf]
      %v2969 = vld [vmem:[%s4 + $0x60] sm:$0xf]
      %v2970 = vld [vmem:[%s4 + $0x64] sm:$0xf]
      %v2971 = vld [vmem:[%s4 + $0x68] sm:$0xf]
      %v2972 = vld [vmem:[%s4 + $0x6c] sm:$0xf]
      %v2973 = vld [vmem:[%s4 + $0x70] sm:$0xf]
      %v2974 = vld [vmem:[%s4 + $0x74] sm:$0xf]
      %v2975 = vld [vmem:[%s4 + $0x78] sm:$0xf]
      %v2976 = vld [vmem:[%s4 + $0x7c] sm:$0xf]
      %v2977 = vld [vmem:[%s5] sm:$0x1]
      %v2979 = vperm.slane %v2977, 0
      %v3013 = vunpack.c.l.b16 %v2945
      %v3014 = vunpack.c.l.b16 %v2946
      %v3015 = vunpack.c.l.b16 %v2947
      %v3016 = vunpack.c.l.b16 %v2948
      %v3017 = vunpack.c.l.b16 %v2949
      %v3018 = vunpack.c.l.b16 %v2950
      %v3019 = vunpack.c.l.b16 %v2951
      %v3020 = vunpack.c.l.b16 %v2952
      %v3021 = vunpack.c.l.b16 %v2953
      %v3022 = vunpack.c.l.b16 %v2954
      %v3023 = vunpack.c.l.b16 %v2955
      %v3024 = vunpack.c.l.b16 %v2956
      %v3025 = vunpack.c.l.b16 %v2957
      %v3026 = vunpack.c.l.b16 %v2958
      %v3027 = vunpack.c.l.b16 %v2959
      %v3028 = vunpack.c.l.b16 %v2960
      %v3029 = vunpack.c.l.b16 %v2961
      %v3030 = vunpack.c.l.b16 %v2962
      %v3031 = vunpack.c.l.b16 %v2963
      %v3032 = vunpack.c.l.b16 %v2964
      %v3033 = vunpack.c.l.b16 %v2965
      %v3034 = vunpack.c.l.b16 %v2966
      %v3035 = vunpack.c.l.b16 %v2967
      %v3036 = vunpack.c.l.b16 %v2968
      %v3037 = vunpack.c.l.b16 %v2969
      %v3038 = vunpack.c.l.b16 %v2970
      %v3039 = vunpack.c.l.b16 %v2971
      %v3040 = vunpack.c.l.b16 %v2972
      %v3041 = vunpack.c.l.b16 %v2973
      %v3042 = vunpack.c.l.b16 %v2974
      %v3043 = vunpack.c.l.b16 %v2975
      %v3044 = vunpack.c.l.b16 %v2976
      %v3045 = vpack.c.b16 %v3014, %v3013
      %v3046 = vpack.c.b16 %v3016, %v3015
      %v3047 = vpack.c.b16 %v3018, %v3017
      %v3048 = vpack.c.b16 %v3020, %v3019
      %v3049 = vpack.c.b16 %v3022, %v3021
      %v3050 = vpack.c.b16 %v3024, %v3023
      %v3051 = vpack.c.b16 %v3026, %v3025
      %v3052 = vpack.c.b16 %v3028, %v3027
      %v3053 = vpack.c.b16 %v3030, %v3029
      %v3054 = vpack.c.b16 %v3032, %v3031
      %v3055 = vpack.c.b16 %v3034, %v3033
      %v3056 = vpack.c.b16 %v3036, %v3035
      %v3057 = vpack.c.b16 %v3038, %v3037
      %v3058 = vpack.c.b16 %v3040, %v3039
      %v3059 = vpack.c.b16 %v3042, %v3041
      %v3060 = vpack.c.b16 %v3044, %v3043
      %3077 = vmatpush.bf16.msra.mxu0 %v3052
      %3078 = vmatpush.bf16.msra.mxu0 %v3051
      %3079 = vmatpush.bf16.msra.mxu0 %v3050
      %3080 = vmatpush.bf16.msra.mxu0 %v3049
      %3081 = vmatpush.bf16.msra.mxu0 %v3048
      %3082 = vmatpush.bf16.msra.mxu0 %v3047
      %3083 = vmatpush.bf16.msra.mxu0 %v3046
      %3084 = vmatpush.bf16.msra.mxu0 %v3045
      %3085 = vmatmul.bf16.gmra.mxu0 %v2943
      %v3086 = vpop.f32.mrf.mxu0
      %v3087 = vadd.f32 %v2979, %v3086
      %v3088 = vpop.f32.mrf.mxu0
      %v3089 = vadd.f32 %v2979, %v3088
      %3090 = vdwg.mxu0
      %3091 = vmatpush.bf16.msra.mxu0 %v3060
      %3092 = vmatpush.bf16.msra.mxu0 %v3059
      %3093 = vmatpush.bf16.msra.mxu0 %v3058
      %3094 = vmatpush.bf16.msra.mxu0 %v3057
      %3095 = vmatpush.bf16.msra.mxu0 %v3056
      %3096 = vmatpush.bf16.msra.mxu0 %v3055
      %3097 = vmatpush.bf16.msra.mxu0 %v3054
      %3098 = vmatpush.bf16.msra.mxu0 %v3053
      %3099 = vmatmul.bf16.gmra.mxu0 %v2944
      %v3100 = vpop.f32.mrf.mxu0
      %v3101 = vadd.f32 %v3087, %v3100
      %v3102 = vpop.f32.mrf.mxu0
      %v3103 = vadd.f32 %v3089, %v3102
      %3104 = vdwg.mxu0
      %v3105 = vpack.c.bf16 %v3101, %v3101
      %v3106 = vpack.c.bf16 %v3103, %v3103
      %3107 = vst [vmem:[%s253] sm:$0xf] %v3105
      %3108 = vst [vmem:[%s253 + $0x4] sm:$0xf] %v3106
      %s3109 = smul.u32 2, %s17
      %p3110 = scmp.lt.s32.totalorder %s3109, 3
      %s3111 = scalar_select %p3110, %s3109, 3
      %s3112 = smul.addr %s3111, 4
      %s3113 = scalar_lea.vmem %s6, %s3112
      // Predicated region
      $region45: #{parser_forward.1} parent=43 // pred_check
        %p3114 = pneg %p166
      $region46: #{parser_forward.1} parent=43 // pred_check_branch
        %3116 = sbr.rel (%p3114) target = $region48
      $region47: #{parser_forward.1} parent=43 // pred_region
        %s3117 = smul.u32 2, %s17
      $region48: #{parser_forward.1} parent=43 // pred_fallthru
        _
    $region44: #{parser_forward.1} parent=5 // pred_fallthru
      _
    %p3118 = scmp.le.s32.totalorder 2, %s12
    // Predicated region
    $region49: #{parser_forward.1} parent=5 // pred_check
      %p3119 = pneg %p3118
    $region50: #{parser_forward.1} parent=5 // pred_check_branch
      %3121 = sbr.rel (%p3119) target = $region52
    $region51: #{parser_forward.1} parent=5 // pred_region
      %s3122 = ssub.s32 %s12, 2
      // Predicated region
      $region53: #{parser_forward.1} parent=51 // pred_check
        %p3123 = pneg %p172
      $region54: #{parser_forward.1} parent=51 // pred_check_branch
        %3125 = sbr.rel (%p3123) target = $region56
      $region55: #{parser_forward.1} parent=51 // pred_region
        %s3126 = smul.u32 2, %s18
        %p3127 = scmp.lt.s32.totalorder %s3126, 3
        %s3128 = scalar_select %p3127, %s3126, 3
        %s3129 = smul.addr %s3128, 4
        %s3130 = scalar_lea.vmem %s6, %s3129
      $region56: #{parser_forward.1} parent=51 // pred_fallthru
        _
    $region52: #{parser_forward.1} parent=5 // pred_fallthru
      _
  $region6: #{parser_forward.1} parent=0 // loop_footer
    %s16 = sadd.s32 1, %s12
  $region7: #{parser_forward.1} parent=0 // loop_footer_branch
    %11 = sbr.rel target = $region3
  $region8: #{parser_forward.1} parent=0 // loop_exit
    _

</llo_original>
